<compile_context>
chip_gen: v7x
topology: tpu7x:2x2x1
jax: 0.10.0
libtpu: 0.0.40
codegen_flags: <defaults>
</compile_context>

<pallas_src>
import functools
import math

import jax
import jax.numpy as jnp
from jax.experimental import pallas as pl
from jax.experimental.pallas import tpu as pltpu


# ----------------------------------------------------------------------------
# Shared helpers (pure jnp -> usable both inside kernels and in the reference)
# ----------------------------------------------------------------------------

def _gelu_tanh(x):
    # TODO(synk): tanh-approx GELU; HF BERT's exact erf-GELU differs at the ~1e-3 level.
    c = math.sqrt(2.0 / math.pi)
    return 0.5 * x * (1.0 + jnp.tanh(c * (x + 0.044715 * x * x * x)))


def _apply_act(y, act):
    if act == "none":
        return y
    if act == "tanh":
        return jnp.tanh(y)
    if act == "silu":
        return y * (1.0 / (1.0 + jnp.exp(-y)))
    if act == "gelu":
        return _gelu_tanh(y)
    raise ValueError(f"unknown activation {act!r}")


def _ln_f32(v, g, b, eps):
    mean = jnp.mean(v, axis=-1, keepdims=True)
    d = v - mean
    var = jnp.mean(d * d, axis=-1, keepdims=True)
    return d * jax.lax.rsqrt(var + eps) * g + b


def _pick_row_tile(m, preferred=256):
    """Largest sublane-aligned row tile that divides m; full extent as last resort."""
    for t in (preferred, 128, 64, 32, 16, 8):
        if m >= t and m % t == 0:
            return t
    return m


def _pick_inner_tile(n, preferred=512):
    """Lane-aligned tile of the FFN intermediate dim; full extent if small."""
    for t in (preferred, 256, 128):
        if n >= t and n % t == 0:
            return t
    return n


def _cparams(semantics, block_bytes):
    # vmem limit sized from the real per-step block bytes (x3 for double buffering +
    # slack), capped at 48 MiB so it also fits v7x's 64 MiB physical VMEM per core.
    limit = int(min(48 * 1024 * 1024, max(32 * 1024 * 1024, 3 * block_bytes)))
    return pltpu.CompilerParams(dimension_semantics=semantics,
                                vmem_limit_bytes=limit)


# ----------------------------------------------------------------------------
# Kernels
# ----------------------------------------------------------------------------

def _linear_kernel(x_ref, w_ref, b_ref, o_ref):
    # x: [tm, K]  w: [K, N] (pre-transposed, grid-invariant -> fetched once)  b: [1, N]
    y = jnp.dot(x_ref[...], w_ref[...], preferred_element_type=jnp.float32)
    o_ref[...] = (y + b_ref[...].astype(jnp.float32)).astype(o_ref.dtype)


def _mlp_kernel(x_ref, w1_ref, b1_ref, w2_ref, b2_ref, o_ref, *, act):
    # Fused Linear -> act -> Linear (time_embed, output_down_proj).
    h = jnp.dot(x_ref[...], w1_ref[...], preferred_element_type=jnp.float32)
    h = _apply_act(h + b1_ref[...].astype(jnp.float32), act)
    y = jnp.dot(h.astype(w2_ref.dtype), w2_ref[...], preferred_element_type=jnp.float32)
    o_ref[...] = (y + b2_ref[...].astype(jnp.float32)).astype(o_ref.dtype)


def _embed_upproj_ln_kernel(x_ref, w1_ref, b1_ref, w2_ref, b2_ref,
                            pos_ref, t_ref, g_ref, b_ref, o_ref, *, eps):
    # Fused input_up_proj (Linear->Tanh->Linear) + pos_emb + broadcast emb_t + LayerNorm.
    # x: [1,S,in]  pos: [S,H]  t: [1,1,H]
    x = x_ref[0]
    h = jnp.dot(x, w1_ref[...], preferred_element_type=jnp.float32)
    h = jnp.tanh(h + b1_ref[...].astype(jnp.float32))
    y = jnp.dot(h.astype(w2_ref.dtype), w2_ref[...], preferred_element_type=jnp.float32)
    y = (y + b2_ref[...].astype(jnp.float32)
         + pos_ref[...].astype(jnp.float32)
         + t_ref[0].astype(jnp.float32))
    o_ref[0] = _ln_f32(y, g_ref[...].astype(jnp.float32),
                       b_ref[...].astype(jnp.float32), eps).astype(o_ref.dtype)


def _embed_ln_kernel(x_ref, pos_ref, t_ref, g_ref, b_ref, o_ref, *, eps):
    # (input_dims == hidden_size path) LayerNorm(x + pos + t).
    v = (x_ref[0].astype(jnp.float32)
         + pos_ref[...].astype(jnp.float32)
         + t_ref[0].astype(jnp.float32))
    o_ref[0] = _ln_f32(v, g_ref[...].astype(jnp.float32),
                       b_ref[...].astype(jnp.float32), eps).astype(o_ref.dtype)


def _attention_block_kernel(qkv_ref, res_ref, wo_ref, bo_ref, g_ref, b_ref, o_ref,
                            *, num_heads, head_dim, scale, eps):
    # One batch element per grid step.
    # qkv: [1, S, 3H] (heads = contiguous last-dim slices -> no transposes anywhere)
    # Fused: per-head softmax attention -> concat -> output proj -> +residual -> LN1.
    H = num_heads * head_dim
    qkv = qkv_ref[0]                                     # [S, 3H]
    parts = []
    for h in range(num_heads):
        q = qkv[:, h * head_dim:(h + 1) * head_dim]
        k = qkv[:, H + h * head_dim: H + (h + 1) * head_dim]
        v = qkv[:, 2 * H + h * head_dim: 2 * H + (h + 1) * head_dim]
        # contract last dims of q and k directly (A @ B^T) -> no in-kernel transpose
        s = jax.lax.dot_general(q, k, (((1,), (1,)), ((), ())),
                                preferred_element_type=jnp.float32) * scale
        s = s - jnp.max(s, axis=-1, keepdims=True)
        e = jnp.exp(s)
        p = e * pl.reciprocal(jnp.sum(e, axis=-1, keepdims=True), approx=True)
        parts.append(jnp.dot(p.astype(v.dtype), v,
                             preferred_element_type=jnp.float32))
    ctx = jnp.concatenate(parts, axis=-1)                # [S, H] f32
    y = jnp.dot(ctx.astype(wo_ref.dtype), wo_ref[...],
                preferred_element_type=jnp.float32)
    y = y + bo_ref[...].astype(jnp.float32) + res_ref[0].astype(jnp.float32)
    o_ref[0] = _ln_f32(y, g_ref[...].astype(jnp.float32),
                       b_ref[...].astype(jnp.float32), eps).astype(o_ref.dtype)


def _ffn_block_kernel(h_ref, wi_ref, bi_ref, wout_ref, bout_ref, g_ref, b_ref,
                      o_ref, acc_ref, *, eps):
    # Fused BERT FFN with intermediate-dim tiling (grid axis 1, "arbitrary"):
    #   acc += gelu(h @ wi_k + bi_k) @ wout_k ; epilogue: + bout + residual(h) -> LN2.
    k = pl.program_id(1)

    @pl.when(k == 0)
    def _():
        acc_ref[...] = jnp.zeros_like(acc_ref)

    hid = jnp.dot(h_ref[...], wi_ref[...], preferred_element_type=jnp.float32)
    hid = _apply_act(hid + bi_ref[...].astype(jnp.float32), "gelu")
    acc_ref[...] += jnp.dot(hid.astype(wout_ref.dtype), wout_ref[...],
                            preferred_element_type=jnp.float32)

    @pl.when(k == pl.num_programs(1) - 1)
    def _():
        y = (acc_ref[...] + bout_ref[...].astype(jnp.float32)
             + h_ref[...].astype(jnp.float32))            # residual = FFN input
        o_ref[...] = _ln_f32(y, g_ref[...].astype(jnp.float32),
                             b_ref[...].astype(jnp.float32), eps).astype(o_ref.dtype)


# ----------------------------------------------------------------------------
# Wrappers (pallas_call plumbing)
# ----------------------------------------------------------------------------

def linear(x, w_t, b):
    """x: [M, K]; w_t: [K, N] (pre-transposed); b: [1, N] (f32) -> [M, N]."""
    M, K = x.shape
    N = w_t.shape[1]
    tm = _pick_row_tile(M)
    it = x.dtype.itemsize
    bb = it * (tm * K + K * N + tm * N) + 4 * (N + tm * N)
    return pl.pallas_call(
        _linear_kernel,
        out_shape=jax.ShapeDtypeStruct((M, N), x.dtype),
        grid_spec=pltpu.PrefetchScalarGridSpec(
            num_scalar_prefetch=0,
            grid=(M // tm,),
            in_specs=[
                pl.BlockSpec((tm, K), lambda i: (i, 0)),
                pl.BlockSpec((K, N), lambda i: (0, 0)),   # grid-invariant -> one DMA
                pl.BlockSpec((1, N), lambda i: (0, 0)),
            ],
            out_specs=pl.BlockSpec((tm, N), lambda i: (i, 0)),
        ),
        compiler_params=_cparams(("parallel",), bb),
    )(x, w_t, b)


def mlp(x, w1_t, b1, w2_t, b2, act):
    """Fused Linear->act->Linear. x:[M,K]; w1_t:[K,N1]; w2_t:[N1,N2]; biases [1,*] f32."""
    M, K = x.shape
    N1 = w1_t.shape[1]
    N2 = w2_t.shape[1]
    tm = _pick_row_tile(M)
    it = x.dtype.itemsize
    bb = it * (tm * K + K * N1 + N1 * N2 + tm * N2) + 4 * (N1 + N2 + tm * N1 + tm * N2)
    return pl.pallas_call(
        functools.partial(_mlp_kernel, act=act),
        out_shape=jax.ShapeDtypeStruct((M, N2), x.dtype),
        grid_spec=pltpu.PrefetchScalarGridSpec(
            num_scalar_prefetch=0,
            grid=(M // tm,),
            in_specs=[
                pl.BlockSpec((tm, K), lambda i: (i, 0)),
                pl.BlockSpec((K, N1), lambda i: (0, 0)),
                pl.BlockSpec((1, N1), lambda i: (0, 0)),
                pl.BlockSpec((N1, N2), lambda i: (0, 0)),
                pl.BlockSpec((1, N2), lambda i: (0, 0)),
            ],
            out_specs=pl.BlockSpec((tm, N2), lambda i: (i, 0)),
        ),
        compiler_params=_cparams(("parallel",), bb),
    )(x, w1_t, b1, w2_t, b2)


def embed_upproj_layernorm(x, w1_t, b1, w2_t, b2, pos, emb_t3, gamma, beta, eps):
    """Fused input_up_proj + pos_emb + emb_t broadcast + LayerNorm. x: [B,S,in]."""
    B, S, Kin = x.shape
    H = w2_t.shape[1]
    it = x.dtype.itemsize
    bb = it * (S * Kin + Kin * H + H * H + S * H + S * H) + 4 * (5 * H + 2 * S * H)
    return pl.pallas_call(
        functools.partial(_embed_upproj_ln_kernel, eps=eps),
        out_shape=jax.ShapeDtypeStruct((B, S, H), x.dtype),
        grid_spec=pltpu.PrefetchScalarGridSpec(
            num_scalar_prefetch=0,
            grid=(B,),
            in_specs=[
                pl.BlockSpec((1, S, Kin), lambda b: (b, 0, 0)),
                pl.BlockSpec((Kin, H), lambda b: (0, 0)),
                pl.BlockSpec((1, H), lambda b: (0, 0)),
                pl.BlockSpec((H, H), lambda b: (0, 0)),
                pl.BlockSpec((1, H), lambda b: (0, 0)),
                pl.BlockSpec((S, H), lambda b: (0, 0)),
                pl.BlockSpec((1, 1, H), lambda b: (b, 0, 0)),
                pl.BlockSpec((1, H), lambda b: (0, 0)),
                pl.BlockSpec((1, H), lambda b: (0, 0)),
            ],
            out_specs=pl.BlockSpec((1, S, H), lambda b: (b, 0, 0)),
        ),
        compiler_params=_cparams(("parallel",), bb),
    )(x, w1_t, b1, w2_t, b2, pos, emb_t3, gamma, beta)


def embed_layernorm(emb_x, pos, emb_t3, gamma, beta, eps):
    """LayerNorm(emb_x + pos + emb_t) for the input_dims == hidden path."""
    B, S, H = emb_x.shape
    bb = emb_x.dtype.itemsize * (2 * S * H + H) + 4 * (2 * H + S * H)
    return pl.pallas_call(
        functools.partial(_embed_ln_kernel, eps=eps),
        out_shape=jax.ShapeDtypeStruct((B, S, H), emb_x.dtype),
        grid_spec=pltpu.PrefetchScalarGridSpec(
            num_scalar_prefetch=0,
            grid=(B,),
            in_specs=[
                pl.BlockSpec((1, S, H), lambda b: (b, 0, 0)),
                pl.BlockSpec((S, H), lambda b: (0, 0)),
                pl.BlockSpec((1, 1, H), lambda b: (b, 0, 0)),
                pl.BlockSpec((1, H), lambda b: (0, 0)),
                pl.BlockSpec((1, H), lambda b: (0, 0)),
            ],
            out_specs=pl.BlockSpec((1, S, H), lambda b: (b, 0, 0)),
        ),
        compiler_params=_cparams(("parallel",), bb),
    )(emb_x, pos, emb_t3, gamma, beta)


def attention_block(qkv3, res3, wo_t, bo, gamma, beta, *, num_heads, eps):
    """Fused MHA + output proj + residual + LN1 per batch element.
    qkv3: [B,S,3H] (heads indexed in-kernel), res3: [B,S,H]."""
    B, S, threeH = qkv3.shape
    H = threeH // 3
    dh = H // num_heads
    it = qkv3.dtype.itemsize
    bb = it * (S * threeH + S * H + H * H + S * H) + 4 * (3 * H + S * S + 2 * S * H)
    return pl.pallas_call(
        functools.partial(_attention_block_kernel, num_heads=num_heads,
                          head_dim=dh, scale=1.0 / math.sqrt(dh), eps=eps),
        out_shape=jax.ShapeDtypeStruct((B, S, H), qkv3.dtype),
        grid_spec=pltpu.PrefetchScalarGridSpec(
            num_scalar_prefetch=0,
            grid=(B,),
            in_specs=[
                pl.BlockSpec((1, S, threeH), lambda b: (b, 0, 0)),
                pl.BlockSpec((1, S, H), lambda b: (b, 0, 0)),
                pl.BlockSpec((H, H), lambda b: (0, 0)),
                pl.BlockSpec((1, H), lambda b: (0, 0)),
                pl.BlockSpec((1, H), lambda b: (0, 0)),
                pl.BlockSpec((1, H), lambda b: (0, 0)),
            ],
            out_specs=pl.BlockSpec((1, S, H), lambda b: (b, 0, 0)),
        ),
        compiler_params=_cparams(("parallel",), bb),
    )(qkv3, res3, wo_t, bo, gamma, beta)


def ffn_block(h, wi_t, bi, wout_t, bout, gamma, beta, eps):
    """Fused FFN (intermediate tiled) + residual + LN2. h: [M,H]."""
    M, H = h.shape
    I = wi_t.shape[1]
    tm = _pick_row_tile(M)
    tk = _pick_inner_tile(I)
    it = h.dtype.itemsize
    bb = it * (tm * H + H * tk + tk * H + tm * H) + 4 * (tk + 3 * H + tm * H + tm * tk)
    return pl.pallas_call(
        functools.partial(_ffn_block_kernel, eps=eps),
        out_shape=jax.ShapeDtypeStruct((M, H), h.dtype),
        grid_spec=pltpu.PrefetchScalarGridSpec(
            num_scalar_prefetch=0,
            grid=(M // tm, I // tk),
            in_specs=[
                pl.BlockSpec((tm, H), lambda i, k: (i, 0)),
                pl.BlockSpec((H, tk), lambda i, k: (0, k)),
                pl.BlockSpec((1, tk), lambda i, k: (0, k)),
                pl.BlockSpec((tk, H), lambda i, k: (k, 0)),
                pl.BlockSpec((1, H), lambda i, k: (0, 0)),
                pl.BlockSpec((1, H), lambda i, k: (0, 0)),
                pl.BlockSpec((1, H), lambda i, k: (0, 0)),
            ],
            out_specs=pl.BlockSpec((tm, H), lambda i, k: (i, 0)),
            scratch_shapes=[pltpu.VMEM((tm, H), jnp.float32)],
        ),
        compiler_params=_cparams(("parallel", "arbitrary"), bb),
    )(h, wi_t, bi, wout_t, bout, gamma, beta)


# ----------------------------------------------------------------------------
# Model forward (orchestration of the Pallas kernels)
# ----------------------------------------------------------------------------

def timestep_embedding(timesteps, dim, max_period=10000):
    # TODO(synk): tiny [B, dim] sinusoidal embedding kept in plain jnp (not worth a kernel).
    half = dim // 2
    freqs = jnp.exp(-math.log(max_period) * jnp.arange(half, dtype=jnp.float32) / half)
    args = timesteps.astype(jnp.float32)[:, None] * freqs[None, :]
    emb = jnp.concatenate([jnp.cos(args), jnp.sin(args)], axis=-1)
    if dim % 2:
        emb = jnp.concatenate([emb, jnp.zeros_like(emb[:, :1])], axis=-1)
    return emb


def bert_layer(h2d, B, S, p, num_heads, eps):
    M, H = h2d.shape
    qkv = linear(h2d, p["wqkv_t"], p["bqkv"])                       # [M, 3H] fused QKV
    h1 = attention_block(qkv.reshape(B, S, 3 * H), h2d.reshape(B, S, H),
                         p["wo_t"], p["bo"], p["ln1_g"], p["ln1_b"],
                         num_heads=num_heads, eps=eps).reshape(M, H)
    h2 = ffn_block(h1, p["wi_t"], p["bi"], p["wout_t"], p["bout"],
                   p["ln2_g"], p["ln2_b"], eps)
    return h2


def transformer_net_forward(params, x, timesteps, *, num_heads):
    B, S, in_dims = x.shape
    H = params["pos_emb"].shape[1]
    t_dim = params["time_w1_t"].shape[0]
    eps = 1e-12
    cdt = params["pos_emb"].dtype                    # compute dtype (f32 or bf16)

    # time embedding: Linear -> SiLU -> Linear (fused MLP kernel)
    t_feat = timestep_embedding(timesteps, t_dim).astype(cdt)       # [B, t_dim]
    emb_t = mlp(t_feat, params["time_w1_t"], params["time_b1"],
                params["time_w2_t"], params["time_b2"], act="silu") # [B, H]

    xc = x.astype(cdt)
    pos = params["pos_emb"][:S]                                     # [S, H]
    emb_t3 = emb_t.reshape(B, 1, H)

    if "up_w1_t" in params:   # input_dims != hidden_size: fused up_proj + embed + LN
        h3 = embed_upproj_layernorm(xc, params["up_w1_t"], params["up_b1"],
                                    params["up_w2_t"], params["up_b2"],
                                    pos, emb_t3, params["ln_g"], params["ln_b"], eps)
    else:
        h3 = embed_layernorm(xc, pos, emb_t3, params["ln_g"], params["ln_b"], eps)
    # TODO(synk): nn.Dropout(p=0) is the identity here (inference path).

    h2d = h3.reshape(B * S, H)
    for lp in params["layers"]:
        h2d = bert_layer(h2d, B, S, lp, num_heads, eps)

    if "down_w1_t" in params:  # output_dims != hidden_size
        out_dims = params["down_w2_t"].shape[1]
        out = mlp(h2d, params["down_w1_t"], params["down_b1"],
                  params["down_w2_t"], params["down_b2"], act="tanh")
        h_out = out.reshape(B, S, out_dims)
    else:
        h_out = h2d.reshape(B, S, H)
    return h_out.astype(x.dtype)


# ----------------------------------------------------------------------------
# Parameter preparation (run ONCE outside jit): pre-transpose, fuse QKV, cast
# ----------------------------------------------------------------------------

def prepare_params(raw, dtype=jnp.bfloat16):
    f32 = jnp.float32

    def wt(a):
        return jnp.asarray(a).T.astype(dtype)          # nn.Linear [out,in] -> [in,out]

    def vec(a):
        return jnp.asarray(a).reshape(1, -1).astype(f32)

    p = {}
    p["time_w1_t"], p["time_b1"] = wt(raw["time_w1"]), vec(raw["time_b1"])
    p["time_w2_t"], p["time_b2"] = wt(raw["time_w2"]), vec(raw["time_b2"])
    if "up_w1" in raw:
        p["up_w1_t"], p["up_b1"] = wt(raw["up_w1"]), vec(raw["up_b1"])
        p["up_w2_t"], p["up_b2"] = wt(raw["up_w2"]), vec(raw["up_b2"])
    p["pos_emb"] = jnp.asarray(raw["pos_emb"]).astype(dtype)
    p["ln_g"], p["ln_b"] = vec(raw["ln_g"]), vec(raw["ln_b"])

    layers = []
    for lr in raw["layers"]:
        lp = {}
        lp["wqkv_t"] = jnp.concatenate(
            [jnp.asarray(lr["wq"]).T, jnp.asarray(lr["wk"]).T, jnp.asarray(lr["wv"]).T],
            axis=1).astype(dtype)                                        # [H, 3H]
        lp["bqkv"] = jnp.concatenate(
            [lr["bq"], lr["bk"], lr["bv"]]).reshape(1, -1).astype(f32)   # [1, 3H]
        lp["wo_t"], lp["bo"] = wt(lr["wo"]), vec(lr["bo"])
        lp["ln1_g"], lp["ln1_b"] = vec(lr["ln1_g"]), vec(lr["ln1_b"])
        lp["wi_t"], lp["bi"] = wt(lr["wi"]), vec(lr["bi"])
        lp["wout_t"], lp["bout"] = wt(lr["wout"]), vec(lr["bout"])
        lp["ln2_g"], lp["ln2_b"] = vec(lr["ln2_g"]), vec(lr["ln2_b"])
        layers.append(lp)
    p["layers"] = layers

    if "down_w1" in raw:
        p["down_w1_t"], p["down_b1"] = wt(raw["down_w1"]), vec(raw["down_b1"])
        p["down_w2_t"], p["down_b2"] = wt(raw["down_w2"]), vec(raw["down_b2"])
    return p


# ----------------------------------------------------------------------------
# Pure-JAX reference (mirrors the PyTorch forward, f32)
# ----------------------------------------------------------------------------

def forward_reference(raw, x, timesteps, num_heads):
    B, S, in_dims = x.shape
    hidden = raw["pos_emb"].shape[1]
    t_dim = raw["time_w1"].shape[1]
    eps = 1e-12
    lin = lambda a, w, b: a @ w.T + b

    t_feat = timestep_embedding(timesteps, t_dim)
    emb_t = lin(_apply_act(lin(t_feat, raw["time_w1"], raw["time_b1"]), "silu"),
                raw["time_w2"], raw["time_b2"])
    if "up_w1" in raw:
        emb_x = lin(_apply_act(lin(x, raw["up_w1"], raw["up_b1"]), "tanh"),
                    raw["up_w2"], raw["up_b2"])
    else:
        emb_x = x
    v = emb_x + raw["pos_emb"][:S][None] + emb_t[:, None, :]
    h = _ln_f32(v, raw["ln_g"], raw["ln_b"], eps)

    d_head = hidden // num_heads
    for p in raw["layers"]:
        q = lin(h, p["wq"], p["bq"]).reshape(B, S, num_heads, d_head).transpose(0, 2, 1, 3)
        k = lin(h, p["wk"], p["bk"]).reshape(B, S, num_heads, d_head).transpose(0, 2, 1, 3)
        vv = lin(h, p["wv"], p["bv"]).reshape(B, S, num_heads, d_head).transpose(0, 2, 1, 3)
        s = jnp.einsum("bhqd,bhkd->bhqk", q, k) / math.sqrt(d_head)
        s = s - jnp.max(s, axis=-1, keepdims=True)
        e = jnp.exp(s)
        attn = e / jnp.sum(e, axis=-1, keepdims=True)
        ctx = jnp.einsum("bhqk,bhkd->bhqd", attn, vv).transpose(0, 2, 1, 3).reshape(B, S, hidden)
        h1 = _ln_f32(lin(ctx, p["wo"], p["bo"]) + h, p["ln1_g"], p["ln1_b"], eps)
        ffn = lin(_apply_act(lin(h1, p["wi"], p["bi"]), "gelu"), p["wout"], p["bout"])
        h = _ln_f32(ffn + h1, p["ln2_g"], p["ln2_b"], eps)

    if "down_w1" in raw:
        h = lin(_apply_act(lin(h, raw["down_w1"], raw["down_b1"]), "tanh"),
                raw["down_w2"], raw["down_b2"])
    return h.astype(x.dtype)


# ----------------------------------------------------------------------------
# Deterministic parameter construction + demo
# ----------------------------------------------------------------------------

def init_params(key, *, input_dims, hidden, hidden_t_dim, output_dims,
                num_layers, intermediate, max_pos):
    std = 0.05
    keys = iter(jax.random.split(key, 40 + 16 * num_layers))

    def dense(out_d, in_d):
        w = jax.random.normal(next(keys), (out_d, in_d), jnp.float32) * std
        b = jax.random.normal(next(keys), (out_d,), jnp.float32) * 0.02
        return w, b

    def ln(dim):
        g = 1.0 + 0.02 * jax.random.normal(next(keys), (dim,), jnp.float32)
        b = 0.02 * jax.random.normal(next(keys), (dim,), jnp.float32)
        return g, b

    t_hidden = hidden_t_dim * 4
    p = {}
    p["time_w1"], p["time_b1"] = dense(t_hidden, hidden_t_dim)
    p["time_w2"], p["time_b2"] = dense(hidden, t_hidden)
    if input_dims != hidden:
        p["up_w1"], p["up_b1"] = dense(hidden, input_dims)
        p["up_w2"], p["up_b2"] = dense(hidden, hidden)
    p["pos_emb"] = jax.random.normal(next(keys), (max_pos, hidden), jnp.float32) * std
    p["ln_g"], p["ln_b"] = ln(hidden)
    layers = []
    for _ in range(num_layers):
        lp = {}
        lp["wq"], lp["bq"] = dense(hidden, hidden)
        lp["wk"], lp["bk"] = dense(hidden, hidden)
        lp["wv"], lp["bv"] = dense(hidden, hidden)
        lp["wo"], lp["bo"] = dense(hidden, hidden)
        lp["ln1_g"], lp["ln1_b"] = ln(hidden)
        lp["wi"], lp["bi"] = dense(intermediate, hidden)
        lp["wout"], lp["bout"] = dense(hidden, intermediate)
        lp["ln2_g"], lp["ln2_b"] = ln(hidden)
        layers.append(lp)
    p["layers"] = layers
    if output_dims != hidden:
        p["down_w1"], p["down_b1"] = dense(hidden, hidden)
        p["down_w2"], p["down_b2"] = dense(output_dims, hidden)
    return p


if __name__ == "__main__":
    B, S = 2, 8
    INPUT_DIMS, HIDDEN, HIDDEN_T_DIM, OUTPUT_DIMS = 16, 32, 8, 16
    NUM_LAYERS, NUM_HEADS, INTERMEDIATE, MAX_POS = 2, 2, 64, 64

    key = jax.random.PRNGKey(0)
    k_params, k_x = jax.random.split(key)
    raw = init_params(
        k_params, input_dims=INPUT_DIMS, hidden=HIDDEN, hidden_t_dim=HIDDEN_T_DIM,
        output_dims=OUTPUT_DIMS, num_layers=NUM_LAYERS,
        intermediate=INTERMEDIATE, max_pos=MAX_POS)

    x = jax.random.normal(k_x, (B, S, INPUT_DIMS), dtype=jnp.float32)
    timesteps = jnp.array([5, 42], dtype=jnp.int32)

    # Reference in f32 with highest matmul precision (scoped to the reference only).
    with jax.default_matmul_precision("highest"):
        ref = jax.block_until_ready(forward_reference(raw, x, timesteps, NUM_HEADS))

    fwd = jax.jit(functools.partial(transformer_net_forward, num_heads=NUM_HEADS))

    # --- f32 kernel path: numeric validation ---
    params_f32 = prepare_params(raw, jnp.float32)
    out_f32 = jax.block_until_ready(fwd(params_f32, x, timesteps))
    assert out_f32.shape == (B, S, OUTPUT_DIMS), f"bad shape {out_f32.shape}"
    diff_f32 = float(jnp.max(jnp.abs(out_f32 - ref)))
    assert bool(jnp.all(jnp.isfinite(out_f32))), "non-finite output (f32 path)"
    assert jnp.allclose(out_f32, ref, atol=5e-2, rtol=5e-2), \
        f"f32 path mismatch vs reference, max|diff|={diff_f32}"

    # --- bf16 kernel path (performance configuration): sanity validation ---
    params_bf16 = prepare_params(raw, jnp.bfloat16)
    out_bf16 = jax.block_until_ready(fwd(params_bf16, x, timesteps))
    assert out_bf16.shape == (B, S, OUTPUT_DIMS), f"bad shape {out_bf16.shape}"
    assert out_bf16.dtype == x.dtype
    diff_bf16 = float(jnp.max(jnp.abs(out_bf16.astype(jnp.float32) - ref)))
    assert bool(jnp.all(jnp.isfinite(out_bf16))), "non-finite output (bf16 path)"
    assert jnp.allclose(out_bf16.astype(jnp.float32), ref, atol=1.5e-1, rtol=1.5e-1), \
        f"bf16 path mismatch vs reference, max|diff|={diff_bf16}"

    print("KERNEL_OK")
</pallas_src>

<mosaic_0001>
module attributes {stable_mosaic.version = 11 : i64} {
  func.func @_mlp_kernel(%arg0: i32, %arg1: memref<2x8xf32, #tpu.memory_space<vmem>>, %arg2: memref<8x32xf32, #tpu.memory_space<vmem>>, %arg3: memref<1x32xf32, #tpu.memory_space<vmem>>, %arg4: memref<32x32xf32, #tpu.memory_space<vmem>>, %arg5: memref<1x32xf32, #tpu.memory_space<vmem>>, %arg6: memref<2x32xf32, #tpu.memory_space<vmem>>) attributes {dimension_semantics = [#tpu.dimension_semantics<parallel>], iteration_bounds = array<i64: 1>, scalar_prefetch = 0 : i64, scratch_operands = 0 : i64, tpu.core_type = #tpu.core_type<tc>, window_params = [{transform_indices = @transform_0, window_bounds = array<i64: 2, 8>}, {pipeline_mode = #tpu.pipeline_mode<synchronous>, transform_indices = @transform_1, window_bounds = array<i64: 8, 32>}, {pipeline_mode = #tpu.pipeline_mode<synchronous>, transform_indices = @transform_2, window_bounds = array<i64: 1, 32>}, {pipeline_mode = #tpu.pipeline_mode<synchronous>, transform_indices = @transform_3, window_bounds = array<i64: 32, 32>}, {pipeline_mode = #tpu.pipeline_mode<synchronous>, transform_indices = @transform_4, window_bounds = array<i64: 1, 32>}, {transform_indices = @transform_5, window_bounds = array<i64: 2, 32>}]} {
    %c0 = arith.constant 0 : index
    %c0_0 = arith.constant 0 : index
    %0 = vector.load %arg1[%c0, %c0_0] : memref<2x8xf32, #tpu.memory_space<vmem>>, vector<2x8xf32>
    %c0_1 = arith.constant 0 : index
    %c0_2 = arith.constant 0 : index
    %1 = vector.load %arg2[%c0_1, %c0_2] : memref<8x32xf32, #tpu.memory_space<vmem>>, vector<8x32xf32>
    %cst = arith.constant dense<0.000000e+00> : vector<2x32xf32>
    %2 = tpu.matmul %0, %1, %cst {dimension_numbers = #tpu.dot_dimension_numbers<[1], [0], [0], [1], [0, 0, 1, 1], [], []>} : vector<2x8xf32>, vector<8x32xf32>, vector<2x32xf32> -> vector<2x32xf32>
    %c0_3 = arith.constant 0 : index
    %c0_4 = arith.constant 0 : index
    %3 = vector.load %arg3[%c0_3, %c0_4] : memref<1x32xf32, #tpu.memory_space<vmem>>, vector<1x32xf32>
    %4 = vector.broadcast %3 : vector<1x32xf32> to vector<2x32xf32>
    %5 = arith.addf %2, %4 : vector<2x32xf32>
    %cst_5 = arith.constant 0.000000e+00 : f32
    %6 = vector.broadcast %cst_5 : f32 to vector<2x32xf32>
    %7 = arith.subf %6, %5 : vector<2x32xf32>
    %8 = math.exp %7 : vector<2x32xf32>
    %cst_6 = arith.constant 1.000000e+00 : f32
    %9 = vector.broadcast %cst_6 : f32 to vector<2x32xf32>
    %10 = arith.addf %9, %8 : vector<2x32xf32>
    %cst_7 = arith.constant 1.000000e+00 : f32
    %11 = vector.broadcast %cst_7 : f32 to vector<2x32xf32>
    %12 = arith.divf %11, %10 : vector<2x32xf32>
    %13 = arith.mulf %5, %12 : vector<2x32xf32>
    %c0_8 = arith.constant 0 : index
    %c0_9 = arith.constant 0 : index
    %14 = vector.load %arg4[%c0_8, %c0_9] : memref<32x32xf32, #tpu.memory_space<vmem>>, vector<32x32xf32>
    %cst_10 = arith.constant dense<0.000000e+00> : vector<2x32xf32>
    %15 = tpu.matmul %13, %14, %cst_10 {dimension_numbers = #tpu.dot_dimension_numbers<[1], [0], [0], [1], [0, 0, 1, 1], [], []>} : vector<2x32xf32>, vector<32x32xf32>, vector<2x32xf32> -> vector<2x32xf32>
    %c0_11 = arith.constant 0 : index
    %c0_12 = arith.constant 0 : index
    %16 = vector.load %arg5[%c0_11, %c0_12] : memref<1x32xf32, #tpu.memory_space<vmem>>, vector<1x32xf32>
    %17 = vector.broadcast %16 : vector<1x32xf32> to vector<2x32xf32>
    %18 = arith.addf %15, %17 : vector<2x32xf32>
    %c0_13 = arith.constant 0 : index
    %c0_14 = arith.constant 0 : index
    %19 = vector.load %arg6[%c0_13, %c0_14] : memref<2x32xf32, #tpu.memory_space<vmem>>, vector<2x32xf32>
    tpu.vector_store %arg6[%c0_13, %c0_14], %18 {strides = array<i32>} : memref<2x32xf32, #tpu.memory_space<vmem>>, vector<2x32xf32>,
    return
  }
  func.func @transform_0(%arg0: i32) -> (i32, i32) {
    %c0_i32 = arith.constant 0 : i32
    %c0_i32_0 = arith.constant 0 : i32
    return %arg0, %c0_i32 : i32, i32
  }
  func.func @transform_1(%arg0: i32) -> (i32, i32) {
    %c0_i32 = arith.constant 0 : i32
    %c0_i32_0 = arith.constant 0 : i32
    %c0_i32_1 = arith.constant 0 : i32
    return %c0_i32, %c0_i32_0 : i32, i32
  }
  func.func @transform_2(%arg0: i32) -> (i32, i32) {
    %c0_i32 = arith.constant 0 : i32
    %c0_i32_0 = arith.constant 0 : i32
    %c0_i32_1 = arith.constant 0 : i32
    return %c0_i32, %c0_i32_0 : i32, i32
  }
  func.func @transform_3(%arg0: i32) -> (i32, i32) {
    %c0_i32 = arith.constant 0 : i32
    %c0_i32_0 = arith.constant 0 : i32
    %c0_i32_1 = arith.constant 0 : i32
    return %c0_i32, %c0_i32_0 : i32, i32
  }
  func.func @transform_4(%arg0: i32) -> (i32, i32) {
    %c0_i32 = arith.constant 0 : i32
    %c0_i32_0 = arith.constant 0 : i32
    %c0_i32_1 = arith.constant 0 : i32
    return %c0_i32, %c0_i32_0 : i32, i32
  }
  func.func @transform_5(%arg0: i32) -> (i32, i32) {
    %c0_i32 = arith.constant 0 : i32
    %c0_i32_0 = arith.constant 0 : i32
    return %arg0, %c0_i32 : i32, i32
  }
}

module attributes {stable_mosaic.version = 11 : i64} {
  func.func @_embed_upproj_ln_kernel(%arg0: i32, %arg1: memref<1x8x16xf32, #tpu.memory_space<vmem>>, %arg2: memref<16x32xf32, #tpu.memory_space<vmem>>, %arg3: memref<1x32xf32, #tpu.memory_space<vmem>>, %arg4: memref<32x32xf32, #tpu.memory_space<vmem>>, %arg5: memref<1x32xf32, #tpu.memory_space<vmem>>, %arg6: memref<8x32xf32, #tpu.memory_space<vmem>>, %arg7: memref<1x1x32xf32, #tpu.memory_space<vmem>>, %arg8: memref<1x32xf32, #tpu.memory_space<vmem>>, %arg9: memref<1x32xf32, #tpu.memory_space<vmem>>, %arg10: memref<1x8x32xf32, #tpu.memory_space<vmem>>) attributes {dimension_semantics = [#tpu.dimension_semantics<parallel>], iteration_bounds = array<i64: 2>, scalar_prefetch = 0 : i64, scratch_operands = 0 : i64, tpu.core_type = #tpu.core_type<tc>, window_params = [{transform_indices = @transform_0, window_bounds = array<i64: 1, 8, 16>}, {pipeline_mode = #tpu.pipeline_mode<synchronous>, transform_indices = @transform_1, window_bounds = array<i64: 16, 32>}, {pipeline_mode = #tpu.pipeline_mode<synchronous>, transform_indices = @transform_2, window_bounds = array<i64: 1, 32>}, {pipeline_mode = #tpu.pipeline_mode<synchronous>, transform_indices = @transform_3, window_bounds = array<i64: 32, 32>}, {pipeline_mode = #tpu.pipeline_mode<synchronous>, transform_indices = @transform_4, window_bounds = array<i64: 1, 32>}, {pipeline_mode = #tpu.pipeline_mode<synchronous>, transform_indices = @transform_5, window_bounds = array<i64: 8, 32>}, {transform_indices = @transform_6, window_bounds = array<i64: 1, 1, 32>}, {pipeline_mode = #tpu.pipeline_mode<synchronous>, transform_indices = @transform_7, window_bounds = array<i64: 1, 32>}, {pipeline_mode = #tpu.pipeline_mode<synchronous>, transform_indices = @transform_8, window_bounds = array<i64: 1, 32>}, {transform_indices = @transform_9, window_bounds = array<i64: 1, 8, 32>}]} {
    %c0 = arith.constant 0 : index
    %c0_0 = arith.constant 0 : index
    %c0_1 = arith.constant 0 : index
    %0 = vector.load %arg1[%c0, %c0_0, %c0_1] : memref<1x8x16xf32, #tpu.memory_space<vmem>>, vector<1x8x16xf32>
    %1 = vector.shape_cast %0 : vector<1x8x16xf32> to vector<8x16xf32>
    %c0_2 = arith.constant 0 : index
    %c0_3 = arith.constant 0 : index
    %2 = vector.load %arg2[%c0_2, %c0_3] : memref<16x32xf32, #tpu.memory_space<vmem>>, vector<16x32xf32>
    %cst = arith.constant dense<0.000000e+00> : vector<8x32xf32>
    %3 = tpu.matmul %1, %2, %cst {dimension_numbers = #tpu.dot_dimension_numbers<[1], [0], [0], [1], [0, 0, 1, 1], [], []>} : vector<8x16xf32>, vector<16x32xf32>, vector<8x32xf32> -> vector<8x32xf32>
    %c0_4 = arith.constant 0 : index
    %c0_5 = arith.constant 0 : index
    %4 = vector.load %arg3[%c0_4, %c0_5] : memref<1x32xf32, #tpu.memory_space<vmem>>, vector<1x32xf32>
    %5 = vector.broadcast %4 : vector<1x32xf32> to vector<8x32xf32>
    %6 = arith.addf %3, %5 : vector<8x32xf32>
    %7 = math.tanh %6 : vector<8x32xf32>
    %c0_6 = arith.constant 0 : index
    %c0_7 = arith.constant 0 : index
    %8 = vector.load %arg4[%c0_6, %c0_7] : memref<32x32xf32, #tpu.memory_space<vmem>>, vector<32x32xf32>
    %cst_8 = arith.constant dense<0.000000e+00> : vector<8x32xf32>
    %9 = tpu.matmul %7, %8, %cst_8 {dimension_numbers = #tpu.dot_dimension_numbers<[1], [0], [0], [1], [0, 0, 1, 1], [], []>} : vector<8x32xf32>, vector<32x32xf32>, vector<8x32xf32> -> vector<8x32xf32>
    %c0_9 = arith.constant 0 : index
    %c0_10 = arith.constant 0 : index
    %10 = vector.load %arg5[%c0_9, %c0_10] : memref<1x32xf32, #tpu.memory_space<vmem>>, vector<1x32xf32>
    %11 = vector.broadcast %10 : vector<1x32xf32> to vector<8x32xf32>
    %12 = arith.addf %9, %11 : vector<8x32xf32>
    %c0_11 = arith.constant 0 : index
    %c0_12 = arith.constant 0 : index
    %13 = vector.load %arg6[%c0_11, %c0_12] : memref<8x32xf32, #tpu.memory_space<vmem>>, vector<8x32xf32>
    %14 = arith.addf %12, %13 : vector<8x32xf32>
    %c0_13 = arith.constant 0 : index
    %c0_14 = arith.constant 0 : index
    %c0_15 = arith.constant 0 : index
    %15 = vector.load %arg7[%c0_13, %c0_14, %c0_15] : memref<1x1x32xf32, #tpu.memory_space<vmem>>, vector<1x1x32xf32>
    %16 = vector.shape_cast %15 : vector<1x1x32xf32> to vector<1x32xf32>
    %17 = vector.broadcast %16 : vector<1x32xf32> to vector<8x32xf32>
    %18 = arith.addf %14, %17 : vector<8x32xf32>
    %c0_16 = arith.constant 0 : index
    %c0_17 = arith.constant 0 : index
    %19 = vector.load %arg8[%c0_16, %c0_17] : memref<1x32xf32, #tpu.memory_space<vmem>>, vector<1x32xf32>
    %c0_18 = arith.constant 0 : index
    %c0_19 = arith.constant 0 : index
    %20 = vector.load %arg9[%c0_18, %c0_19] : memref<1x32xf32, #tpu.memory_space<vmem>>, vector<1x32xf32>
    %cst_20 = arith.constant dense<0.000000e+00> : vector<8xf32>
    %21 = vector.multi_reduction <add>, %18, %cst_20 [1] : vector<8x32xf32> to vector<8xf32>
    %22 = vector.shape_cast %21 : vector<8xf32> to vector<8x1xf32>
    %cst_21 = arith.constant 3.200000e+01 : f32
    %23 = vector.broadcast %cst_21 : f32 to vector<8x1xf32>
    %24 = arith.divf %22, %23 : vector<8x1xf32>
    %25 = vector.broadcast %24 : vector<8x1xf32> to vector<8x32xf32>
    %26 = arith.subf %18, %25 : vector<8x32xf32>
    %27 = arith.mulf %26, %26 : vector<8x32xf32>
    %cst_22 = arith.constant dense<0.000000e+00> : vector<8xf32>
    %28 = vector.multi_reduction <add>, %27, %cst_22 [1] : vector<8x32xf32> to vector<8xf32>
    %29 = vector.shape_cast %28 : vector<8xf32> to vector<8x1xf32>
    %cst_23 = arith.constant 3.200000e+01 : f32
    %30 = vector.broadcast %cst_23 : f32 to vector<8x1xf32>
    %31 = arith.divf %29, %30 : vector<8x1xf32>
    %cst_24 = arith.constant 9.99999996E-13 : f32
    %32 = vector.broadcast %cst_24 : f32 to vector<8x1xf32>
    %33 = arith.addf %31, %32 : vector<8x1xf32>
    %34 = math.rsqrt %33 : vector<8x1xf32>
    %35 = vector.broadcast %34 : vector<8x1xf32> to vector<8x32xf32>
    %36 = arith.mulf %26, %35 : vector<8x32xf32>
    %37 = vector.broadcast %19 : vector<1x32xf32> to vector<8x32xf32>
    %38 = arith.mulf %36, %37 : vector<8x32xf32>
    %39 = vector.broadcast %20 : vector<1x32xf32> to vector<8x32xf32>
    %40 = arith.addf %38, %39 : vector<8x32xf32>
    %c0_25 = arith.constant 0 : index
    %c0_26 = arith.constant 0 : index
    %c0_27 = arith.constant 0 : index
    %41 = vector.load %arg10[%c0_25, %c0_26, %c0_27] : memref<1x8x32xf32, #tpu.memory_space<vmem>>, vector<1x8x32xf32>
    %42 = vector.shape_cast %41 : vector<1x8x32xf32> to vector<8x32xf32>
    %43 = vector.shape_cast %40 : vector<8x32xf32> to vector<1x8x32xf32>
    tpu.vector_store %arg10[%c0_25, %c0_26, %c0_27], %43 {strides = array<i32>} : memref<1x8x32xf32, #tpu.memory_space<vmem>>, vector<1x8x32xf32>,
    return
  }
  func.func @transform_0(%arg0: i32) -> (i32, i32, i32) {
    %c0_i32 = arith.constant 0 : i32
    %c0_i32_0 = arith.constant 0 : i32
    %c0_i32_1 = arith.constant 0 : i32
    return %arg0, %c0_i32, %c0_i32_0 : i32, i32, i32
  }
  func.func @transform_1(%arg0: i32) -> (i32, i32) {
    %c0_i32 = arith.constant 0 : i32
    %c0_i32_0 = arith.constant 0 : i32
    %c0_i32_1 = arith.constant 0 : i32
    return %c0_i32, %c0_i32_0 : i32, i32
  }
  func.func @transform_2(%arg0: i32) -> (i32, i32) {
    %c0_i32 = arith.constant 0 : i32
    %c0_i32_0 = arith.constant 0 : i32
    %c0_i32_1 = arith.constant 0 : i32
    return %c0_i32, %c0_i32_0 : i32, i32
  }
  func.func @transform_3(%arg0: i32) -> (i32, i32) {
    %c0_i32 = arith.constant 0 : i32
    %c0_i32_0 = arith.constant 0 : i32
    %c0_i32_1 = arith.constant 0 : i32
    return %c0_i32, %c0_i32_0 : i32, i32
  }
  func.func @transform_4(%arg0: i32) -> (i32, i32) {
    %c0_i32 = arith.constant 0 : i32
    %c0_i32_0 = arith.constant 0 : i32
    %c0_i32_1 = arith.constant 0 : i32
    return %c0_i32, %c0_i32_0 : i32, i32
  }
  func.func @transform_5(%arg0: i32) -> (i32, i32) {
    %c0_i32 = arith.constant 0 : i32
    %c0_i32_0 = arith.constant 0 : i32
    %c0_i32_1 = arith.constant 0 : i32
    return %c0_i32, %c0_i32_0 : i32, i32
  }
  func.func @transform_6(%arg0: i32) -> (i32, i32, i32) {
    %c0_i32 = arith.constant 0 : i32
    %c0_i32_0 = arith.constant 0 : i32
    %c0_i32_1 = arith.constant 0 : i32
    return %arg0, %c0_i32, %c0_i32_0 : i32, i32, i32
  }
  func.func @transform_7(%arg0: i32) -> (i32, i32) {
    %c0_i32 = arith.constant 0 : i32
    %c0_i32_0 = arith.constant 0 : i32
    %c0_i32_1 = arith.constant 0 : i32
    return %c0_i32, %c0_i32_0 : i32, i32
  }
  func.func @transform_8(%arg0: i32) -> (i32, i32) {
    %c0_i32 = arith.constant 0 : i32
    %c0_i32_0 = arith.constant 0 : i32
    %c0_i32_1 = arith.constant 0 : i32
    return %c0_i32, %c0_i32_0 : i32, i32
  }
  func.func @transform_9(%arg0: i32) -> (i32, i32, i32) {
    %c0_i32 = arith.constant 0 : i32
    %c0_i32_0 = arith.constant 0 : i32
    %c0_i32_1 = arith.constant 0 : i32
    return %arg0, %c0_i32, %c0_i32_0 : i32, i32, i32
  }
}

module attributes {stable_mosaic.version = 11 : i64} {
  func.func @_linear_kernel(%arg0: i32, %arg1: memref<16x32xf32, #tpu.memory_space<vmem>>, %arg2: memref<32x96xf32, #tpu.memory_space<vmem>>, %arg3: memref<1x96xf32, #tpu.memory_space<vmem>>, %arg4: memref<16x96xf32, #tpu.memory_space<vmem>>) attributes {dimension_semantics = [#tpu.dimension_semantics<parallel>], iteration_bounds = array<i64: 1>, scalar_prefetch = 0 : i64, scratch_operands = 0 : i64, tpu.core_type = #tpu.core_type<tc>, window_params = [{transform_indices = @transform_0, window_bounds = array<i64: 16, 32>}, {pipeline_mode = #tpu.pipeline_mode<synchronous>, transform_indices = @transform_1, window_bounds = array<i64: 32, 96>}, {pipeline_mode = #tpu.pipeline_mode<synchronous>, transform_indices = @transform_2, window_bounds = array<i64: 1, 96>}, {transform_indices = @transform_3, window_bounds = array<i64: 16, 96>}]} {
    %c0 = arith.constant 0 : index
    %c0_0 = arith.constant 0 : index
    %0 = vector.load %arg1[%c0, %c0_0] : memref<16x32xf32, #tpu.memory_space<vmem>>, vector<16x32xf32>
    %c0_1 = arith.constant 0 : index
    %c0_2 = arith.constant 0 : index
    %1 = vector.load %arg2[%c0_1, %c0_2] : memref<32x96xf32, #tpu.memory_space<vmem>>, vector<32x96xf32>
    %cst = arith.constant dense<0.000000e+00> : vector<16x96xf32>
    %2 = tpu.matmul %0, %1, %cst {dimension_numbers = #tpu.dot_dimension_numbers<[1], [0], [0], [1], [0, 0, 1, 1], [], []>} : vector<16x32xf32>, vector<32x96xf32>, vector<16x96xf32> -> vector<16x96xf32>
    %c0_3 = arith.constant 0 : index
    %c0_4 = arith.constant 0 : index
    %3 = vector.load %arg3[%c0_3, %c0_4] : memref<1x96xf32, #tpu.memory_space<vmem>>, vector<1x96xf32>
    %4 = vector.broadcast %3 : vector<1x96xf32> to vector<16x96xf32>
    %5 = arith.addf %2, %4 : vector<16x96xf32>
    %c0_5 = arith.constant 0 : index
    %c0_6 = arith.constant 0 : index
    %6 = vector.load %arg4[%c0_5, %c0_6] : memref<16x96xf32, #tpu.memory_space<vmem>>, vector<16x96xf32>
    tpu.vector_store %arg4[%c0_5, %c0_6], %5 {strides = array<i32>} : memref<16x96xf32, #tpu.memory_space<vmem>>, vector<16x96xf32>,
    return
  }
  func.func @transform_0(%arg0: i32) -> (i32, i32) {
    %c0_i32 = arith.constant 0 : i32
    %c0_i32_0 = arith.constant 0 : i32
    return %arg0, %c0_i32 : i32, i32
  }
  func.func @transform_1(%arg0: i32) -> (i32, i32) {
    %c0_i32 = arith.constant 0 : i32
    %c0_i32_0 = arith.constant 0 : i32
    %c0_i32_1 = arith.constant 0 : i32
    return %c0_i32, %c0_i32_0 : i32, i32
  }
  func.func @transform_2(%arg0: i32) -> (i32, i32) {
    %c0_i32 = arith.constant 0 : i32
    %c0_i32_0 = arith.constant 0 : i32
    %c0_i32_1 = arith.constant 0 : i32
    return %c0_i32, %c0_i32_0 : i32, i32
  }
  func.func @transform_3(%arg0: i32) -> (i32, i32) {
    %c0_i32 = arith.constant 0 : i32
    %c0_i32_0 = arith.constant 0 : i32
    return %arg0, %c0_i32 : i32, i32
  }
}

module attributes {stable_mosaic.version = 11 : i64} {
  func.func @_attention_block_kernel(%arg0: i32, %arg1: memref<1x8x96xf32, #tpu.memory_space<vmem>>, %arg2: memref<1x8x32xf32, #tpu.memory_space<vmem>>, %arg3: memref<32x32xf32, #tpu.memory_space<vmem>>, %arg4: memref<1x32xf32, #tpu.memory_space<vmem>>, %arg5: memref<1x32xf32, #tpu.memory_space<vmem>>, %arg6: memref<1x32xf32, #tpu.memory_space<vmem>>, %arg7: memref<1x8x32xf32, #tpu.memory_space<vmem>>) attributes {dimension_semantics = [#tpu.dimension_semantics<parallel>], iteration_bounds = array<i64: 2>, scalar_prefetch = 0 : i64, scratch_operands = 0 : i64, tpu.core_type = #tpu.core_type<tc>, window_params = [{transform_indices = @transform_0, window_bounds = array<i64: 1, 8, 96>}, {transform_indices = @transform_1, window_bounds = array<i64: 1, 8, 32>}, {pipeline_mode = #tpu.pipeline_mode<synchronous>, transform_indices = @transform_2, window_bounds = array<i64: 32, 32>}, {pipeline_mode = #tpu.pipeline_mode<synchronous>, transform_indices = @transform_3, window_bounds = array<i64: 1, 32>}, {pipeline_mode = #tpu.pipeline_mode<synchronous>, transform_indices = @transform_4, window_bounds = array<i64: 1, 32>}, {pipeline_mode = #tpu.pipeline_mode<synchronous>, transform_indices = @transform_5, window_bounds = array<i64: 1, 32>}, {transform_indices = @transform_6, window_bounds = array<i64: 1, 8, 32>}]} {
    %c0 = arith.constant 0 : index
    %c0_0 = arith.constant 0 : index
    %c0_1 = arith.constant 0 : index
    %0 = vector.load %arg1[%c0, %c0_0, %c0_1] : memref<1x8x96xf32, #tpu.memory_space<vmem>>, vector<1x8x96xf32>
    %1 = vector.shape_cast %0 : vector<1x8x96xf32> to vector<8x96xf32>
    %2 = vector.extract_strided_slice %1 {offsets = [0, 0], sizes = [8, 16], strides = [1, 1]} : vector<8x96xf32> to vector<8x16xf32>
    %3 = vector.extract_strided_slice %1 {offsets = [0, 32], sizes = [8, 16], strides = [1, 1]} : vector<8x96xf32> to vector<8x16xf32>
    %4 = vector.extract_strided_slice %1 {offsets = [0, 64], sizes = [8, 16], strides = [1, 1]} : vector<8x96xf32> to vector<8x16xf32>
    %cst = arith.constant dense<0.000000e+00> : vector<8x8xf32>
    %5 = tpu.matmul %2, %3, %cst {dimension_numbers = #tpu.dot_dimension_numbers<[1], [1], [0], [0], [0, 0, 1, 0], [], []>} : vector<8x16xf32>, vector<8x16xf32>, vector<8x8xf32> -> vector<8x8xf32>
    %cst_2 = arith.constant 2.500000e-01 : f32
    %6 = vector.broadcast %cst_2 : f32 to vector<8x8xf32>
    %7 = arith.mulf %5, %6 : vector<8x8xf32>
    %cst_3 = arith.constant dense<0xFF800000> : vector<8xf32>
    %8 = vector.multi_reduction <maximumf>, %7, %cst_3 [1] : vector<8x8xf32> to vector<8xf32>
    %9 = vector.shape_cast %8 : vector<8xf32> to vector<8x1xf32>
    %10 = vector.broadcast %9 : vector<8x1xf32> to vector<8x8xf32>
    %11 = arith.subf %7, %10 : vector<8x8xf32>
    %12 = math.exp %11 : vector<8x8xf32>
    %cst_4 = arith.constant dense<0.000000e+00> : vector<8xf32>
    %13 = vector.multi_reduction <add>, %12, %cst_4 [1] : vector<8x8xf32> to vector<8xf32>
    %14 = vector.shape_cast %13 : vector<8xf32> to vector<8x1xf32>
    %15 = tpu.reciprocal %14 {approx = true} : vector<8x1xf32> -> vector<8x1xf32>
    %16 = vector.broadcast %15 : vector<8x1xf32> to vector<8x8xf32>
    %17 = arith.mulf %12, %16 : vector<8x8xf32>
    %cst_5 = arith.constant dense<0.000000e+00> : vector<8x16xf32>
    %18 = tpu.matmul %17, %4, %cst_5 {dimension_numbers = #tpu.dot_dimension_numbers<[1], [0], [0], [1], [0, 0, 1, 1], [], []>} : vector<8x8xf32>, vector<8x16xf32>, vector<8x16xf32> -> vector<8x16xf32>
    %19 = vector.extract_strided_slice %1 {offsets = [0, 16], sizes = [8, 16], strides = [1, 1]} : vector<8x96xf32> to vector<8x16xf32>
    %20 = vector.extract_strided_slice %1 {offsets = [0, 48], sizes = [8, 16], strides = [1, 1]} : vector<8x96xf32> to vector<8x16xf32>
    %21 = vector.extract_strided_slice %1 {offsets = [0, 80], sizes = [8, 16], strides = [1, 1]} : vector<8x96xf32> to vector<8x16xf32>
    %cst_6 = arith.constant dense<0.000000e+00> : vector<8x8xf32>
    %22 = tpu.matmul %19, %20, %cst_6 {dimension_numbers = #tpu.dot_dimension_numbers<[1], [1], [0], [0], [0, 0, 1, 0], [], []>} : vector<8x16xf32>, vector<8x16xf32>, vector<8x8xf32> -> vector<8x8xf32>
    %cst_7 = arith.constant 2.500000e-01 : f32
    %23 = vector.broadcast %cst_7 : f32 to vector<8x8xf32>
    %24 = arith.mulf %22, %23 : vector<8x8xf32>
    %cst_8 = arith.constant dense<0xFF800000> : vector<8xf32>
    %25 = vector.multi_reduction <maximumf>, %24, %cst_8 [1] : vector<8x8xf32> to vector<8xf32>
    %26 = vector.shape_cast %25 : vector<8xf32> to vector<8x1xf32>
    %27 = vector.broadcast %26 : vector<8x1xf32> to vector<8x8xf32>
    %28 = arith.subf %24, %27 : vector<8x8xf32>
    %29 = math.exp %28 : vector<8x8xf32>
    %cst_9 = arith.constant dense<0.000000e+00> : vector<8xf32>
    %30 = vector.multi_reduction <add>, %29, %cst_9 [1] : vector<8x8xf32> to vector<8xf32>
    %31 = vector.shape_cast %30 : vector<8xf32> to vector<8x1xf32>
    %32 = tpu.reciprocal %31 {approx = true} : vector<8x1xf32> -> vector<8x1xf32>
    %33 = vector.broadcast %32 : vector<8x1xf32> to vector<8x8xf32>
    %34 = arith.mulf %29, %33 : vector<8x8xf32>
    %cst_10 = arith.constant dense<0.000000e+00> : vector<8x16xf32>
    %35 = tpu.matmul %34, %21, %cst_10 {dimension_numbers = #tpu.dot_dimension_numbers<[1], [0], [0], [1], [0, 0, 1, 1], [], []>} : vector<8x8xf32>, vector<8x16xf32>, vector<8x16xf32> -> vector<8x16xf32>
    %36 = tpu.concatenate %18, %35 in 1 : vector<8x16xf32>, vector<8x16xf32> -> vector<8x32xf32>
    %c0_11 = arith.constant 0 : index
    %c0_12 = arith.constant 0 : index
    %37 = vector.load %arg3[%c0_11, %c0_12] : memref<32x32xf32, #tpu.memory_space<vmem>>, vector<32x32xf32>
    %cst_13 = arith.constant dense<0.000000e+00> : vector<8x32xf32>
    %38 = tpu.matmul %36, %37, %cst_13 {dimension_numbers = #tpu.dot_dimension_numbers<[1], [0], [0], [1], [0, 0, 1, 1], [], []>} : vector<8x32xf32>, vector<32x32xf32>, vector<8x32xf32> -> vector<8x32xf32>
    %c0_14 = arith.constant 0 : index
    %c0_15 = arith.constant 0 : index
    %39 = vector.load %arg4[%c0_14, %c0_15] : memref<1x32xf32, #tpu.memory_space<vmem>>, vector<1x32xf32>
    %40 = vector.broadcast %39 : vector<1x32xf32> to vector<8x32xf32>
    %41 = arith.addf %38, %40 : vector<8x32xf32>
    %c0_16 = arith.constant 0 : index
    %c0_17 = arith.constant 0 : index
    %c0_18 = arith.constant 0 : index
    %42 = vector.load %arg2[%c0_16, %c0_17, %c0_18] : memref<1x8x32xf32, #tpu.memory_space<vmem>>, vector<1x8x32xf32>
    %43 = vector.shape_cast %42 : vector<1x8x32xf32> to vector<8x32xf32>
    %44 = arith.addf %41, %43 : vector<8x32xf32>
    %c0_19 = arith.constant 0 : index
    %c0_20 = arith.constant 0 : index
    %45 = vector.load %arg5[%c0_19, %c0_20] : memref<1x32xf32, #tpu.memory_space<vmem>>, vector<1x32xf32>
    %c0_21 = arith.constant 0 : index
    %c0_22 = arith.constant 0 : index
    %46 = vector.load %arg6[%c0_21, %c0_22] : memref<1x32xf32, #tpu.memory_space<vmem>>, vector<1x32xf32>
    %cst_23 = arith.constant dense<0.000000e+00> : vector<8xf32>
    %47 = vector.multi_reduction <add>, %44, %cst_23 [1] : vector<8x32xf32> to vector<8xf32>
    %48 = vector.shape_cast %47 : vector<8xf32> to vector<8x1xf32>
    %cst_24 = arith.constant 3.200000e+01 : f32
    %49 = vector.broadcast %cst_24 : f32 to vector<8x1xf32>
    %50 = arith.divf %48, %49 : vector<8x1xf32>
    %51 = vector.broadcast %50 : vector<8x1xf32> to vector<8x32xf32>
    %52 = arith.subf %44, %51 : vector<8x32xf32>
    %53 = arith.mulf %52, %52 : vector<8x32xf32>
    %cst_25 = arith.constant dense<0.000000e+00> : vector<8xf32>
    %54 = vector.multi_reduction <add>, %53, %cst_25 [1] : vector<8x32xf32> to vector<8xf32>
    %55 = vector.shape_cast %54 : vector<8xf32> to vector<8x1xf32>
    %cst_26 = arith.constant 3.200000e+01 : f32
    %56 = vector.broadcast %cst_26 : f32 to vector<8x1xf32>
    %57 = arith.divf %55, %56 : vector<8x1xf32>
    %cst_27 = arith.constant 9.99999996E-13 : f32
    %58 = vector.broadcast %cst_27 : f32 to vector<8x1xf32>
    %59 = arith.addf %57, %58 : vector<8x1xf32>
    %60 = math.rsqrt %59 : vector<8x1xf32>
    %61 = vector.broadcast %60 : vector<8x1xf32> to vector<8x32xf32>
    %62 = arith.mulf %52, %61 : vector<8x32xf32>
    %63 = vector.broadcast %45 : vector<1x32xf32> to vector<8x32xf32>
    %64 = arith.mulf %62, %63 : vector<8x32xf32>
    %65 = vector.broadcast %46 : vector<1x32xf32> to vector<8x32xf32>
    %66 = arith.addf %64, %65 : vector<8x32xf32>
    %c0_28 = arith.constant 0 : index
    %c0_29 = arith.constant 0 : index
    %c0_30 = arith.constant 0 : index
    %67 = vector.load %arg7[%c0_28, %c0_29, %c0_30] : memref<1x8x32xf32, #tpu.memory_space<vmem>>, vector<1x8x32xf32>
    %68 = vector.shape_cast %67 : vector<1x8x32xf32> to vector<8x32xf32>
    %69 = vector.shape_cast %66 : vector<8x32xf32> to vector<1x8x32xf32>
    tpu.vector_store %arg7[%c0_28, %c0_29, %c0_30], %69 {strides = array<i32>} : memref<1x8x32xf32, #tpu.memory_space<vmem>>, vector<1x8x32xf32>,
    return
  }
  func.func @transform_0(%arg0: i32) -> (i32, i32, i32) {
    %c0_i32 = arith.constant 0 : i32
    %c0_i32_0 = arith.constant 0 : i32
    %c0_i32_1 = arith.constant 0 : i32
    return %arg0, %c0_i32, %c0_i32_0 : i32, i32, i32
  }
  func.func @transform_1(%arg0: i32) -> (i32, i32, i32) {
    %c0_i32 = arith.constant 0 : i32
    %c0_i32_0 = arith.constant 0 : i32
    %c0_i32_1 = arith.constant 0 : i32
    return %arg0, %c0_i32, %c0_i32_0 : i32, i32, i32
  }
  func.func @transform_2(%arg0: i32) -> (i32, i32) {
    %c0_i32 = arith.constant 0 : i32
    %c0_i32_0 = arith.constant 0 : i32
    %c0_i32_1 = arith.constant 0 : i32
    return %c0_i32, %c0_i32_0 : i32, i32
  }
  func.func @transform_3(%arg0: i32) -> (i32, i32) {
    %c0_i32 = arith.constant 0 : i32
    %c0_i32_0 = arith.constant 0 : i32
    %c0_i32_1 = arith.constant 0 : i32
    return %c0_i32, %c0_i32_0 : i32, i32
  }
  func.func @transform_4(%arg0: i32) -> (i32, i32) {
    %c0_i32 = arith.constant 0 : i32
    %c0_i32_0 = arith.constant 0 : i32
    %c0_i32_1 = arith.constant 0 : i32
    return %c0_i32, %c0_i32_0 : i32, i32
  }
  func.func @transform_5(%arg0: i32) -> (i32, i32) {
    %c0_i32 = arith.constant 0 : i32
    %c0_i32_0 = arith.constant 0 : i32
    %c0_i32_1 = arith.constant 0 : i32
    return %c0_i32, %c0_i32_0 : i32, i32
  }
  func.func @transform_6(%arg0: i32) -> (i32, i32, i32) {
    %c0_i32 = arith.constant 0 : i32
    %c0_i32_0 = arith.constant 0 : i32
    %c0_i32_1 = arith.constant 0 : i32
    return %arg0, %c0_i32, %c0_i32_0 : i32, i32, i32
  }
}

module attributes {stable_mosaic.version = 11 : i64} {
  func.func @_mlp_kernel(%arg0: i32, %arg1: memref<16x32xf32, #tpu.memory_space<vmem>>, %arg2: memref<32x32xf32, #tpu.memory_space<vmem>>, %arg3: memref<1x32xf32, #tpu.memory_space<vmem>>, %arg4: memref<32x16xf32, #tpu.memory_space<vmem>>, %arg5: memref<1x16xf32, #tpu.memory_space<vmem>>, %arg6: memref<16x16xf32, #tpu.memory_space<vmem>>) attributes {dimension_semantics = [#tpu.dimension_semantics<parallel>], iteration_bounds = array<i64: 1>, scalar_prefetch = 0 : i64, scratch_operands = 0 : i64, tpu.core_type = #tpu.core_type<tc>, window_params = [{transform_indices = @transform_0, window_bounds = array<i64: 16, 32>}, {pipeline_mode = #tpu.pipeline_mode<synchronous>, transform_indices = @transform_1, window_bounds = array<i64: 32, 32>}, {pipeline_mode = #tpu.pipeline_mode<synchronous>, transform_indices = @transform_2, window_bounds = array<i64: 1, 32>}, {pipeline_mode = #tpu.pipeline_mode<synchronous>, transform_indices = @transform_3, window_bounds = array<i64: 32, 16>}, {pipeline_mode = #tpu.pipeline_mode<synchronous>, transform_indices = @transform_4, window_bounds = array<i64: 1, 16>}, {transform_indices = @transform_5, window_bounds = array<i64: 16, 16>}]} {
    %c0 = arith.constant 0 : index
    %c0_0 = arith.constant 0 : index
    %0 = vector.load %arg1[%c0, %c0_0] : memref<16x32xf32, #tpu.memory_space<vmem>>, vector<16x32xf32>
    %c0_1 = arith.constant 0 : index
    %c0_2 = arith.constant 0 : index
    %1 = vector.load %arg2[%c0_1, %c0_2] : memref<32x32xf32, #tpu.memory_space<vmem>>, vector<32x32xf32>
    %cst = arith.constant dense<0.000000e+00> : vector<16x32xf32>
    %2 = tpu.matmul %0, %1, %cst {dimension_numbers = #tpu.dot_dimension_numbers<[1], [0], [0], [1], [0, 0, 1, 1], [], []>} : vector<16x32xf32>, vector<32x32xf32>, vector<16x32xf32> -> vector<16x32xf32>
    %c0_3 = arith.constant 0 : index
    %c0_4 = arith.constant 0 : index
    %3 = vector.load %arg3[%c0_3, %c0_4] : memref<1x32xf32, #tpu.memory_space<vmem>>, vector<1x32xf32>
    %4 = vector.broadcast %3 : vector<1x32xf32> to vector<16x32xf32>
    %5 = arith.addf %2, %4 : vector<16x32xf32>
    %6 = math.tanh %5 : vector<16x32xf32>
    %c0_5 = arith.constant 0 : index
    %c0_6 = arith.constant 0 : index
    %7 = vector.load %arg4[%c0_5, %c0_6] : memref<32x16xf32, #tpu.memory_space<vmem>>, vector<32x16xf32>
    %cst_7 = arith.constant dense<0.000000e+00> : vector<16x16xf32>
    %8 = tpu.matmul %6, %7, %cst_7 {dimension_numbers = #tpu.dot_dimension_numbers<[1], [0], [0], [1], [0, 0, 1, 1], [], []>} : vector<16x32xf32>, vector<32x16xf32>, vector<16x16xf32> -> vector<16x16xf32>
    %c0_8 = arith.constant 0 : index
    %c0_9 = arith.constant 0 : index
    %9 = vector.load %arg5[%c0_8, %c0_9] : memref<1x16xf32, #tpu.memory_space<vmem>>, vector<1x16xf32>
    %10 = vector.broadcast %9 : vector<1x16xf32> to vector<16x16xf32>
    %11 = arith.addf %8, %10 : vector<16x16xf32>
    %c0_10 = arith.constant 0 : index
    %c0_11 = arith.constant 0 : index
    %12 = vector.load %arg6[%c0_10, %c0_11] : memref<16x16xf32, #tpu.memory_space<vmem>>, vector<16x16xf32>
    tpu.vector_store %arg6[%c0_10, %c0_11], %11 {strides = array<i32>} : memref<16x16xf32, #tpu.memory_space<vmem>>, vector<16x16xf32>,
    return
  }
  func.func @transform_0(%arg0: i32) -> (i32, i32) {
    %c0_i32 = arith.constant 0 : i32
    %c0_i32_0 = arith.constant 0 : i32
    return %arg0, %c0_i32 : i32, i32
  }
  func.func @transform_1(%arg0: i32) -> (i32, i32) {
    %c0_i32 = arith.constant 0 : i32
    %c0_i32_0 = arith.constant 0 : i32
    %c0_i32_1 = arith.constant 0 : i32
    return %c0_i32, %c0_i32_0 : i32, i32
  }
  func.func @transform_2(%arg0: i32) -> (i32, i32) {
    %c0_i32 = arith.constant 0 : i32
    %c0_i32_0 = arith.constant 0 : i32
    %c0_i32_1 = arith.constant 0 : i32
    return %c0_i32, %c0_i32_0 : i32, i32
  }
  func.func @transform_3(%arg0: i32) -> (i32, i32) {
    %c0_i32 = arith.constant 0 : i32
    %c0_i32_0 = arith.constant 0 : i32
    %c0_i32_1 = arith.constant 0 : i32
    return %c0_i32, %c0_i32_0 : i32, i32
  }
  func.func @transform_4(%arg0: i32) -> (i32, i32) {
    %c0_i32 = arith.constant 0 : i32
    %c0_i32_0 = arith.constant 0 : i32
    %c0_i32_1 = arith.constant 0 : i32
    return %c0_i32, %c0_i32_0 : i32, i32
  }
  func.func @transform_5(%arg0: i32) -> (i32, i32) {
    %c0_i32 = arith.constant 0 : i32
    %c0_i32_0 = arith.constant 0 : i32
    return %arg0, %c0_i32 : i32, i32
  }
}

module attributes {stable_mosaic.version = 11 : i64} {
  func.func @_ffn_block_kernel(%arg0: i32, %arg1: i32, %arg2: memref<16x32xf32, #tpu.memory_space<vmem>>, %arg3: memref<32x64xf32, #tpu.memory_space<vmem>>, %arg4: memref<1x64xf32, #tpu.memory_space<vmem>>, %arg5: memref<64x32xf32, #tpu.memory_space<vmem>>, %arg6: memref<1x32xf32, #tpu.memory_space<vmem>>, %arg7: memref<1x32xf32, #tpu.memory_space<vmem>>, %arg8: memref<1x32xf32, #tpu.memory_space<vmem>>, %arg9: memref<16x32xf32, #tpu.memory_space<vmem>>, %arg10: memref<16x32xf32, #tpu.memory_space<vmem>>) attributes {dimension_semantics = [#tpu.dimension_semantics<parallel>, #tpu.dimension_semantics<arbitrary>], iteration_bounds = array<i64: 1, 1>, scalar_prefetch = 0 : i64, scratch_operands = 1 : i64, tpu.core_type = #tpu.core_type<tc>, window_params = [{transform_indices = @transform_0, window_bounds = array<i64: 16, 32>}, {transform_indices = @transform_1, window_bounds = array<i64: 32, 64>}, {transform_indices = @transform_2, window_bounds = array<i64: 1, 64>}, {transform_indices = @transform_3, window_bounds = array<i64: 64, 32>}, {pipeline_mode = #tpu.pipeline_mode<synchronous>, transform_indices = @transform_4, window_bounds = array<i64: 1, 32>}, {pipeline_mode = #tpu.pipeline_mode<synchronous>, transform_indices = @transform_5, window_bounds = array<i64: 1, 32>}, {pipeline_mode = #tpu.pipeline_mode<synchronous>, transform_indices = @transform_6, window_bounds = array<i64: 1, 32>}, {transform_indices = @transform_7, window_bounds = array<i64: 16, 32>}]} {
    %c0_i32 = arith.constant 0 : i32
    %0 = arith.cmpi eq, %arg1, %c0_i32 : i32
    %1 = arith.extui %0 : i1 to i32
    %c0_i32_0 = arith.constant 0 : i32
    %2 = arith.cmpi ne, %1, %c0_i32_0 : i32
    scf.if %2 {
      %cst_19 = arith.constant 0.000000e+00 : f32
      %30 = vector.broadcast %cst_19 : f32 to vector<16x32xf32>
      %c0_20 = arith.constant 0 : index
      %c0_21 = arith.constant 0 : index
      %31 = vector.load %arg10[%c0_20, %c0_21] : memref<16x32xf32, #tpu.memory_space<vmem>>, vector<16x32xf32>
      tpu.vector_store %arg10[%c0_20, %c0_21], %30 {strides = array<i32>} : memref<16x32xf32, #tpu.memory_space<vmem>>, vector<16x32xf32>,
    } else {
    }
    %c0 = arith.constant 0 : index
    %c0_1 = arith.constant 0 : index
    %3 = vector.load %arg2[%c0, %c0_1] : memref<16x32xf32, #tpu.memory_space<vmem>>, vector<16x32xf32>
    %c0_2 = arith.constant 0 : index
    %c0_3 = arith.constant 0 : index
    %4 = vector.load %arg3[%c0_2, %c0_3] : memref<32x64xf32, #tpu.memory_space<vmem>>, vector<32x64xf32>
    %cst = arith.constant dense<0.000000e+00> : vector<16x64xf32>
    %5 = tpu.matmul %3, %4, %cst {dimension_numbers = #tpu.dot_dimension_numbers<[1], [0], [0], [1], [0, 0, 1, 1], [], []>} : vector<16x32xf32>, vector<32x64xf32>, vector<16x64xf32> -> vector<16x64xf32>
    %c0_4 = arith.constant 0 : index
    %c0_5 = arith.constant 0 : index
    %6 = vector.load %arg4[%c0_4, %c0_5] : memref<1x64xf32, #tpu.memory_space<vmem>>, vector<1x64xf32>
    %7 = vector.broadcast %6 : vector<1x64xf32> to vector<16x64xf32>
    %8 = arith.addf %5, %7 : vector<16x64xf32>
    %cst_6 = arith.constant 5.000000e-01 : f32
    %9 = vector.broadcast %cst_6 : f32 to vector<16x64xf32>
    %10 = arith.mulf %9, %8 : vector<16x64xf32>
    %cst_7 = arith.constant 4.471500e-02 : f32
    %11 = vector.broadcast %cst_7 : f32 to vector<16x64xf32>
    %12 = arith.mulf %11, %8 : vector<16x64xf32>
    %13 = arith.mulf %12, %8 : vector<16x64xf32>
    %14 = arith.mulf %13, %8 : vector<16x64xf32>
    %15 = arith.addf %8, %14 : vector<16x64xf32>
    %cst_8 = arith.constant 0.797884583 : f32
    %16 = vector.broadcast %cst_8 : f32 to vector<16x64xf32>
    %17 = arith.mulf %16, %15 : vector<16x64xf32>
    %18 = math.tanh %17 : vector<16x64xf32>
    %cst_9 = arith.constant 1.000000e+00 : f32
    %19 = vector.broadcast %cst_9 : f32 to vector<16x64xf32>
    %20 = arith.addf %19, %18 : vector<16x64xf32>
    %21 = arith.mulf %10, %20 : vector<16x64xf32>
    %c0_10 = arith.constant 0 : index
    %c0_11 = arith.constant 0 : index
    %22 = vector.load %arg10[%c0_10, %c0_11] : memref<16x32xf32, #tpu.memory_space<vmem>>, vector<16x32xf32>
    %c0_12 = arith.constant 0 : index
    %c0_13 = arith.constant 0 : index
    %23 = vector.load %arg5[%c0_12, %c0_13] : memref<64x32xf32, #tpu.memory_space<vmem>>, vector<64x32xf32>
    %cst_14 = arith.constant dense<0.000000e+00> : vector<16x32xf32>
    %24 = tpu.matmul %21, %23, %cst_14 {dimension_numbers = #tpu.dot_dimension_numbers<[1], [0], [0], [1], [0, 0, 1, 1], [], []>} : vector<16x64xf32>, vector<64x32xf32>, vector<16x32xf32> -> vector<16x32xf32>
    %25 = arith.addf %22, %24 : vector<16x32xf32>
    %c0_15 = arith.constant 0 : index
    %c0_16 = arith.constant 0 : index
    %26 = vector.load %arg10[%c0_15, %c0_16] : memref<16x32xf32, #tpu.memory_space<vmem>>, vector<16x32xf32>
    tpu.vector_store %arg10[%c0_15, %c0_16], %25 {strides = array<i32>} : memref<16x32xf32, #tpu.memory_space<vmem>>, vector<16x32xf32>,
    %c0_i32_17 = arith.constant 0 : i32
    %27 = arith.cmpi eq, %arg1, %c0_i32_17 : i32
    %28 = arith.extui %27 : i1 to i32
    %c0_i32_18 = arith.constant 0 : i32
    %29 = arith.cmpi ne, %28, %c0_i32_18 : i32
    scf.if %29 {
      %c0_19 = arith.constant 0 : index
      %c0_20 = arith.constant 0 : index
      %30 = vector.load %arg10[%c0_19, %c0_20] : memref<16x32xf32, #tpu.memory_space<vmem>>, vector<16x32xf32>
      %c0_21 = arith.constant 0 : index
      %c0_22 = arith.constant 0 : index
      %31 = vector.load %arg6[%c0_21, %c0_22] : memref<1x32xf32, #tpu.memory_space<vmem>>, vector<1x32xf32>
      %32 = vector.broadcast %31 : vector<1x32xf32> to vector<16x32xf32>
      %33 = arith.addf %30, %32 : vector<16x32xf32>
      %c0_23 = arith.constant 0 : index
      %c0_24 = arith.constant 0 : index
      %34 = vector.load %arg2[%c0_23, %c0_24] : memref<16x32xf32, #tpu.memory_space<vmem>>, vector<16x32xf32>
      %35 = arith.addf %33, %34 : vector<16x32xf32>
      %c0_25 = arith.constant 0 : index
      %c0_26 = arith.constant 0 : index
      %36 = vector.load %arg7[%c0_25, %c0_26] : memref<1x32xf32, #tpu.memory_space<vmem>>, vector<1x32xf32>
      %c0_27 = arith.constant 0 : index
      %c0_28 = arith.constant 0 : index
      %37 = vector.load %arg8[%c0_27, %c0_28] : memref<1x32xf32, #tpu.memory_space<vmem>>, vector<1x32xf32>
      %cst_29 = arith.constant dense<0.000000e+00> : vector<16xf32>
      %38 = vector.multi_reduction <add>, %35, %cst_29 [1] : vector<16x32xf32> to vector<16xf32>
      %39 = vector.shape_cast %38 : vector<16xf32> to vector<16x1xf32>
      %cst_30 = arith.constant 3.200000e+01 : f32
      %40 = vector.broadcast %cst_30 : f32 to vector<16x1xf32>
      %41 = arith.divf %39, %40 : vector<16x1xf32>
      %42 = vector.broadcast %41 : vector<16x1xf32> to vector<16x32xf32>
      %43 = arith.subf %35, %42 : vector<16x32xf32>
      %44 = arith.mulf %43, %43 : vector<16x32xf32>
      %cst_31 = arith.constant dense<0.000000e+00> : vector<16xf32>
      %45 = vector.multi_reduction <add>, %44, %cst_31 [1] : vector<16x32xf32> to vector<16xf32>
      %46 = vector.shape_cast %45 : vector<16xf32> to vector<16x1xf32>
      %cst_32 = arith.constant 3.200000e+01 : f32
      %47 = vector.broadcast %cst_32 : f32 to vector<16x1xf32>
      %48 = arith.divf %46, %47 : vector<16x1xf32>
      %cst_33 = arith.constant 9.99999996E-13 : f32
      %49 = vector.broadcast %cst_33 : f32 to vector<16x1xf32>
      %50 = arith.addf %48, %49 : vector<16x1xf32>
      %51 = math.rsqrt %50 : vector<16x1xf32>
      %52 = vector.broadcast %51 : vector<16x1xf32> to vector<16x32xf32>
      %53 = arith.mulf %43, %52 : vector<16x32xf32>
      %54 = vector.broadcast %36 : vector<1x32xf32> to vector<16x32xf32>
      %55 = arith.mulf %53, %54 : vector<16x32xf32>
      %56 = vector.broadcast %37 : vector<1x32xf32> to vector<16x32xf32>
      %57 = arith.addf %55, %56 : vector<16x32xf32>
      %c0_34 = arith.constant 0 : index
      %c0_35 = arith.constant 0 : index
      %58 = vector.load %arg9[%c0_34, %c0_35] : memref<16x32xf32, #tpu.memory_space<vmem>>, vector<16x32xf32>
      tpu.vector_store %arg9[%c0_34, %c0_35], %57 {strides = array<i32>} : memref<16x32xf32, #tpu.memory_space<vmem>>, vector<16x32xf32>,
    } else {
    }
    return
  }
  func.func @transform_0(%arg0: i32, %arg1: i32) -> (i32, i32) {
    %c0_i32 = arith.constant 0 : i32
    %c0_i32_0 = arith.constant 0 : i32
    return %arg0, %c0_i32 : i32, i32
  }
  func.func @transform_1(%arg0: i32, %arg1: i32) -> (i32, i32) {
    %c0_i32 = arith.constant 0 : i32
    %c0_i32_0 = arith.constant 0 : i32
    return %c0_i32, %arg1 : i32, i32
  }
  func.func @transform_2(%arg0: i32, %arg1: i32) -> (i32, i32) {
    %c0_i32 = arith.constant 0 : i32
    %c0_i32_0 = arith.constant 0 : i32
    return %c0_i32, %arg1 : i32, i32
  }
  func.func @transform_3(%arg0: i32, %arg1: i32) -> (i32, i32) {
    %c0_i32 = arith.constant 0 : i32
    %c0_i32_0 = arith.constant 0 : i32
    return %arg1, %c0_i32 : i32, i32
  }
  func.func @transform_4(%arg0: i32, %arg1: i32) -> (i32, i32) {
    %c0_i32 = arith.constant 0 : i32
    %c0_i32_0 = arith.constant 0 : i32
    %c0_i32_1 = arith.constant 0 : i32
    return %c0_i32, %c0_i32_0 : i32, i32
  }
  func.func @transform_5(%arg0: i32, %arg1: i32) -> (i32, i32) {
    %c0_i32 = arith.constant 0 : i32
    %c0_i32_0 = arith.constant 0 : i32
    %c0_i32_1 = arith.constant 0 : i32
    return %c0_i32, %c0_i32_0 : i32, i32
  }
  func.func @transform_6(%arg0: i32, %arg1: i32) -> (i32, i32) {
    %c0_i32 = arith.constant 0 : i32
    %c0_i32_0 = arith.constant 0 : i32
    %c0_i32_1 = arith.constant 0 : i32
    return %c0_i32, %c0_i32_0 : i32, i32
  }
  func.func @transform_7(%arg0: i32, %arg1: i32) -> (i32, i32) {
    %c0_i32 = arith.constant 0 : i32
    %c0_i32_0 = arith.constant 0 : i32
    return %arg0, %c0_i32 : i32, i32
  }
}

</mosaic_0001>

<llo_original>
// kernel: transformer_net_forward.9
$region0: #{transformer_net_forward.9}
  #allocation0 [shape = 'u32[]', space=smem, size = 0x4, offset = 0x4, fixed_abs, tag = 'smem constant byte address 0x4 - core index']
  #allocation1 [shape = 'u32[144,128]{1,0:T(1,128)}', space=vmem, size = 0x12000, scoped, tag = 'internal scratch']
  %s0 = inlined_call_operand.vmem [shape: f32[2,8], index: 0, kind: input, shape index: {}]
  %s1 = inlined_call_operand.vmem [shape: f32[8,32], index: 1, kind: input, shape index: {}]
  %s2 = inlined_call_operand.vmem [shape: f32[1,32], index: 2, kind: input, shape index: {}]
  %s3 = inlined_call_operand.vmem [shape: f32[32,32], index: 3, kind: input, shape index: {}]
  %s4 = inlined_call_operand.vmem [shape: f32[1,32], index: 4, kind: input, shape index: {}]
  %s5 = inlined_call_operand.vmem [shape: f32[2,32], index: 5, kind: output, shape index: {}]
  %s6 = sld [smem:[#allocation0]]
  $region30: #{transformer_net_forward.9} parent=0
    _
  %s8 = ssub.s32 1, %s6
  %s9 = scalar_select 0, %s8, %s6
  // Predicated region
  $region2: #{transformer_net_forward.9} parent=0 // pred_check
    _
  $region3: #{transformer_net_forward.9} parent=0 // pred_check_branch
    %11 = sbr.rel (0) target = $region5
  $region4: #{transformer_net_forward.9} parent=0 // pred_region
    _
  $region5: #{transformer_net_forward.9} parent=0 // pred_fallthru
    _
  // Predicated region
  $region6: #{transformer_net_forward.9} parent=0 // pred_check
    _
  $region7: #{transformer_net_forward.9} parent=0 // pred_check_branch
    %13 = sbr.rel (0) target = $region9
  $region8: #{transformer_net_forward.9} parent=0 // pred_region
    _
  $region9: #{transformer_net_forward.9} parent=0 // pred_fallthru
    _
  // Predicated region
  $region10: #{transformer_net_forward.9} parent=0 // pred_check
    _
  $region11: #{transformer_net_forward.9} parent=0 // pred_check_branch
    %15 = sbr.rel (0) target = $region13
  $region12: #{transformer_net_forward.9} parent=0 // pred_region
    _
  $region13: #{transformer_net_forward.9} parent=0 // pred_fallthru
    _
  // Predicated region
  $region14: #{transformer_net_forward.9} parent=0 // pred_check
    _
  $region15: #{transformer_net_forward.9} parent=0 // pred_check_branch
    %17 = sbr.rel (0) target = $region17
  $region16: #{transformer_net_forward.9} parent=0 // pred_region
    _
  $region17: #{transformer_net_forward.9} parent=0 // pred_fallthru
    _
  // Predicated region
  $region18: #{transformer_net_forward.9} parent=0 // pred_check
    _
  $region19: #{transformer_net_forward.9} parent=0 // pred_check_branch
    %19 = sbr.rel (0) target = $region21
  $region20: #{transformer_net_forward.9} parent=0 // pred_region
    _
  $region21: #{transformer_net_forward.9} parent=0 // pred_fallthru
    _
  %v20 = vld [vmem:[%s0] sm:$0x3]
  %v21 = vld [vmem:[%s1] sm:$0xff]
  %v22 = vld [vmem:[%s2] sm:$0x1]
  %v24 = vlaneseq
  %v25 = vshrl.u32 %v24, 7
  %v26 = vsub.s32 0, %v25
  %v27 = vrot.slane %v22, %v26
  %vm29 = vcmask 64512
  %v31 = vsel %vm29, %v20, 0
  %33 = vmatprep.subr.mxu0 0.0
  %34 = vmatpush1.msra.mxu0 %v21
  %35 = vmatprep.subr.mxu0 0.0
  %36 = vmatpush1.msra.mxu0 0.0
  %37 = vmatprep.subr.mxu0 0.0
  %38 = vmatpush1.msra.mxu0 0.0
  %39 = vmatprep.subr.mxu0 0.0
  %40 = vmatpush1.msra.mxu0 0.0
  %41 = vmatprep.subr.mxu0 0.0
  %42 = vmatpush1.msra.mxu0 0.0
  %43 = vmatprep.subr.mxu0 0.0
  %44 = vmatpush1.msra.mxu0 0.0
  %45 = vmatprep.subr.mxu0 0.0
  %46 = vmatpush1.msra.mxu0 0.0
  %47 = vmatprep.subr.mxu0 0.0
  %48 = vmatpush1.msra.mxu0 0.0
  %49 = vmatprep.subr.mxu0 0.0
  %50 = vmatpush1.msra.mxu0 0.0
  %51 = vmatprep.subr.mxu0 0.0
  %52 = vmatpush1.msra.mxu0 0.0
  %53 = vmatprep.subr.mxu0 0.0
  %54 = vmatpush1.msra.mxu0 0.0
  %55 = vmatprep.subr.mxu0 0.0
  %56 = vmatpush1.msra.mxu0 0.0
  %57 = vmatprep.subr.mxu0 0.0
  %58 = vmatpush1.msra.mxu0 0.0
  %59 = vmatprep.subr.mxu0 0.0
  %60 = vmatpush1.msra.mxu0 0.0
  %61 = vmatprep.subr.mxu0 0.0
  %62 = vmatpush1.msra.mxu0 0.0
  %63 = vmatprep.subr.mxu0 0.0
  %64 = vmatpush1.msra.mxu0 0.0
  %65 = vmatprep.subr.mxu0 0.0
  %66 = vmatpush1.msra.mxu0 0.0
  %67 = vmatprep.subr.mxu0 0.0
  %68 = vmatpush1.msra.mxu0 0.0
  %69 = vmatprep.subr.mxu0 0.0
  %70 = vmatpush1.msra.mxu0 0.0
  %71 = vmatprep.subr.mxu0 0.0
  %72 = vmatpush1.msra.mxu0 0.0
  %73 = vmatprep.subr.mxu0 0.0
  %74 = vmatpush1.msra.mxu0 0.0
  %75 = vmatprep.subr.mxu0 0.0
  %76 = vmatpush1.msra.mxu0 0.0
  %77 = vmatprep.subr.mxu0 0.0
  %78 = vmatpush1.msra.mxu0 0.0
  %79 = vmatprep.subr.mxu0 0.0
  %80 = vmatpush1.msra.mxu0 0.0
  %81 = vmatprep.subr.mxu0 0.0
  %82 = vmatpush1.msra.mxu0 0.0
  %83 = vmatprep.subr.mxu0 0.0
  %84 = vmatpush1.msra.mxu0 0.0
  %85 = vmatprep.subr.mxu0 0.0
  %86 = vmatpush1.msra.mxu0 0.0
  %87 = vmatprep.subr.mxu0 0.0
  %88 = vmatpush1.msra.mxu0 0.0
  %89 = vmatprep.subr.mxu0 0.0
  %90 = vmatpush1.msra.mxu0 0.0
  %91 = vmatprep.subr.mxu0 0.0
  %92 = vmatpush1.msra.mxu0 0.0
  %93 = vmatprep.subr.mxu0 0.0
  %94 = vmatpush1.msra.mxu0 0.0
  %95 = vmatprep.subr.mxu0 0.0
  %96 = vmatpush1.msra.mxu0 0.0
  %97 = vmatprep.mubr.f32.mxu0 0.0
  %98 = vmatmul.mubr.f32.gmra.mrb[0].mxu0 %v31
  %v99 = vpop.f32.mrb[0].mxu0
  %v100 = vadd.f32 %v27, %v99
  %v101 = vpop.f32.mrb[0].mxu0
  %102 = vdwg.mxu0
  %v103 = vsub.f32 0.0, %v100
  %v104 = vmul.f32 %v103, 1.442695
  %v105 = vpow.pop %v104
  %v106 = vadd.f32 %v105, 1.0
  %v107 = vrcp.pop %v106
  %v108 = vmul.f32 1.0, %v107
  %v109 = vmul.f32 %v100, %v108
  %v110 = vld [vmem:[%s3] sm:$0xff]
  %v111 = vld [vmem:[%s3 + $0x8] sm:$0xff]
  %v112 = vld [vmem:[%s3 + $0x10] sm:$0xff]
  %v113 = vld [vmem:[%s3 + $0x18] sm:$0xff]
  %v114 = vld [vmem:[%s4] sm:$0x1]
  %v116 = vlaneseq
  %v117 = vshrl.u32 %v116, 7
  %v118 = vsub.s32 0, %v117
  %v119 = vrot.slane %v114, %v118
  %vm121 = vcmask 261120
  %v123 = vsel %vm121, %v109, 0
  %125 = vmatprep.subr.mxu0 0.0
  %126 = vmatpush1.msra.mxu0 %v110
  %127 = vmatprep.subr.mxu0 0.0
  %128 = vmatpush1.msra.mxu0 %v111
  %129 = vmatprep.subr.mxu0 0.0
  %130 = vmatpush1.msra.mxu0 %v112
  %131 = vmatprep.subr.mxu0 0.0
  %132 = vmatpush1.msra.mxu0 %v113
  %133 = vmatprep.subr.mxu0 0.0
  %134 = vmatpush1.msra.mxu0 0.0
  %135 = vmatprep.subr.mxu0 0.0
  %136 = vmatpush1.msra.mxu0 0.0
  %137 = vmatprep.subr.mxu0 0.0
  %138 = vmatpush1.msra.mxu0 0.0
  %139 = vmatprep.subr.mxu0 0.0
  %140 = vmatpush1.msra.mxu0 0.0
  %141 = vmatprep.subr.mxu0 0.0
  %142 = vmatpush1.msra.mxu0 0.0
  %143 = vmatprep.subr.mxu0 0.0
  %144 = vmatpush1.msra.mxu0 0.0
  %145 = vmatprep.subr.mxu0 0.0
  %146 = vmatpush1.msra.mxu0 0.0
  %147 = vmatprep.subr.mxu0 0.0
  %148 = vmatpush1.msra.mxu0 0.0
  %149 = vmatprep.subr.mxu0 0.0
  %150 = vmatpush1.msra.mxu0 0.0
  %151 = vmatprep.subr.mxu0 0.0
  %152 = vmatpush1.msra.mxu0 0.0
  %153 = vmatprep.subr.mxu0 0.0
  %154 = vmatpush1.msra.mxu0 0.0
  %155 = vmatprep.subr.mxu0 0.0
  %156 = vmatpush1.msra.mxu0 0.0
  %157 = vmatprep.subr.mxu0 0.0
  %158 = vmatpush1.msra.mxu0 0.0
  %159 = vmatprep.subr.mxu0 0.0
  %160 = vmatpush1.msra.mxu0 0.0
  %161 = vmatprep.subr.mxu0 0.0
  %162 = vmatpush1.msra.mxu0 0.0
  %163 = vmatprep.subr.mxu0 0.0
  %164 = vmatpush1.msra.mxu0 0.0
  %165 = vmatprep.subr.mxu0 0.0
  %166 = vmatpush1.msra.mxu0 0.0
  %167 = vmatprep.subr.mxu0 0.0
  %168 = vmatpush1.msra.mxu0 0.0
  %169 = vmatprep.subr.mxu0 0.0
  %170 = vmatpush1.msra.mxu0 0.0
  %171 = vmatprep.subr.mxu0 0.0
  %172 = vmatpush1.msra.mxu0 0.0
  %173 = vmatprep.subr.mxu0 0.0
  %174 = vmatpush1.msra.mxu0 0.0
  %175 = vmatprep.subr.mxu0 0.0
  %176 = vmatpush1.msra.mxu0 0.0
  %177 = vmatprep.subr.mxu0 0.0
  %178 = vmatpush1.msra.mxu0 0.0
  %179 = vmatprep.subr.mxu0 0.0
  %180 = vmatpush1.msra.mxu0 0.0
  %181 = vmatprep.subr.mxu0 0.0
  %182 = vmatpush1.msra.mxu0 0.0
  %183 = vmatprep.subr.mxu0 0.0
  %184 = vmatpush1.msra.mxu0 0.0
  %185 = vmatprep.subr.mxu0 0.0
  %186 = vmatpush1.msra.mxu0 0.0
  %187 = vmatprep.subr.mxu0 0.0
  %188 = vmatpush1.msra.mxu0 0.0
  %189 = vmatprep.mubr.f32.mxu0 0.0
  %190 = vmatmul.mubr.f32.gmra.mrb[0].mxu0 %v123
  %v191 = vpop.f32.mrb[0].mxu0
  %v192 = vadd.f32 %v119, %v191
  %v193 = vpop.f32.mrb[0].mxu0
  %194 = vdwg.mxu0
  %vm195 = vcmask 254976
  %196 = vst.msk [vmem:[%s5] sm:$0x3] %vm195, %v192
  // Predicated region
  $region22: #{transformer_net_forward.9} parent=0 // pred_check
    _
  $region23: #{transformer_net_forward.9} parent=0 // pred_check_branch
    %198 = sbr.rel (0) target = $region25
  $region24: #{transformer_net_forward.9} parent=0 // pred_region
    _
  $region25: #{transformer_net_forward.9} parent=0 // pred_fallthru
    _
  // Predicated region
  $region26: #{transformer_net_forward.9} parent=0 // pred_check
    _
  $region27: #{transformer_net_forward.9} parent=0 // pred_check_branch
    %200 = sbr.rel (0) target = $region29
  $region28: #{transformer_net_forward.9} parent=0 // pred_region
    _
  $region29: #{transformer_net_forward.9} parent=0 // pred_fallthru
    _

// kernel: transformer_net_forward.11
$region0: #{transformer_net_forward.11}
  #allocation0 [shape = 'u32[]', space=smem, size = 0x4, offset = 0x4, fixed_abs, tag = 'smem constant byte address 0x4 - core index']
  #allocation1 [shape = 'u32[144,128]{1,0:T(1,128)}', space=vmem, size = 0x12000, scoped, tag = 'internal scratch']
  %s0 = inlined_call_operand.vmem [shape: f32[16,32], index: 0, kind: input, shape index: {}]
  %s1 = inlined_call_operand.vmem [shape: f32[32,96], index: 1, kind: input, shape index: {}]
  %s2 = inlined_call_operand.vmem [shape: f32[1,96], index: 2, kind: input, shape index: {}]
  %s3 = inlined_call_operand.vmem [shape: f32[16,96], index: 3, kind: output, shape index: {}]
  %s4 = sld [smem:[#allocation0]]
  $region22: #{transformer_net_forward.11} parent=0
    _
  %s6 = ssub.s32 1, %s4
  %s7 = scalar_select 0, %s6, %s4
  // Predicated region
  $region2: #{transformer_net_forward.11} parent=0 // pred_check
    _
  $region3: #{transformer_net_forward.11} parent=0 // pred_check_branch
    %9 = sbr.rel (0) target = $region5
  $region4: #{transformer_net_forward.11} parent=0 // pred_region
    _
  $region5: #{transformer_net_forward.11} parent=0 // pred_fallthru
    _
  // Predicated region
  $region6: #{transformer_net_forward.11} parent=0 // pred_check
    _
  $region7: #{transformer_net_forward.11} parent=0 // pred_check_branch
    %11 = sbr.rel (0) target = $region9
  $region8: #{transformer_net_forward.11} parent=0 // pred_region
    _
  $region9: #{transformer_net_forward.11} parent=0 // pred_fallthru
    _
  // Predicated region
  $region10: #{transformer_net_forward.11} parent=0 // pred_check
    _
  $region11: #{transformer_net_forward.11} parent=0 // pred_check_branch
    %13 = sbr.rel (0) target = $region13
  $region12: #{transformer_net_forward.11} parent=0 // pred_region
    _
  $region13: #{transformer_net_forward.11} parent=0 // pred_fallthru
    _
  %v14 = vld [vmem:[%s0] sm:$0xff]
  %v15 = vld [vmem:[%s0 + $0x8] sm:$0xff]
  %v16 = vld [vmem:[%s1] sm:$0xff]
  %v17 = vld [vmem:[%s1 + $0x8] sm:$0xff]
  %v18 = vld [vmem:[%s1 + $0x10] sm:$0xff]
  %v19 = vld [vmem:[%s1 + $0x18] sm:$0xff]
  %v20 = vld [vmem:[%s2] sm:$0x1]
  %v22 = vlaneseq
  %v23 = vshrl.u32 %v22, 7
  %v24 = vsub.s32 0, %v23
  %v25 = vrot.slane %v20, %v24
  %vm27 = vcmask 261120
  %v29 = vsel %vm27, %v14, 0
  %v32 = vsel %vm27, %v15, 0
  %34 = vmatprep.subr.mxu0 0.0
  %35 = vmatpush1.msra.mxu0 %v16
  %36 = vmatprep.subr.mxu0 0.0
  %37 = vmatpush1.msra.mxu0 %v17
  %38 = vmatprep.subr.mxu0 0.0
  %39 = vmatpush1.msra.mxu0 %v18
  %40 = vmatprep.subr.mxu0 0.0
  %41 = vmatpush1.msra.mxu0 %v19
  %42 = vmatprep.subr.mxu0 0.0
  %43 = vmatpush1.msra.mxu0 0.0
  %44 = vmatprep.subr.mxu0 0.0
  %45 = vmatpush1.msra.mxu0 0.0
  %46 = vmatprep.subr.mxu0 0.0
  %47 = vmatpush1.msra.mxu0 0.0
  %48 = vmatprep.subr.mxu0 0.0
  %49 = vmatpush1.msra.mxu0 0.0
  %50 = vmatprep.subr.mxu0 0.0
  %51 = vmatpush1.msra.mxu0 0.0
  %52 = vmatprep.subr.mxu0 0.0
  %53 = vmatpush1.msra.mxu0 0.0
  %54 = vmatprep.subr.mxu0 0.0
  %55 = vmatpush1.msra.mxu0 0.0
  %56 = vmatprep.subr.mxu0 0.0
  %57 = vmatpush1.msra.mxu0 0.0
  %58 = vmatprep.subr.mxu0 0.0
  %59 = vmatpush1.msra.mxu0 0.0
  %60 = vmatprep.subr.mxu0 0.0
  %61 = vmatpush1.msra.mxu0 0.0
  %62 = vmatprep.subr.mxu0 0.0
  %63 = vmatpush1.msra.mxu0 0.0
  %64 = vmatprep.subr.mxu0 0.0
  %65 = vmatpush1.msra.mxu0 0.0
  %66 = vmatprep.subr.mxu0 0.0
  %67 = vmatpush1.msra.mxu0 0.0
  %68 = vmatprep.subr.mxu0 0.0
  %69 = vmatpush1.msra.mxu0 0.0
  %70 = vmatprep.subr.mxu0 0.0
  %71 = vmatpush1.msra.mxu0 0.0
  %72 = vmatprep.subr.mxu0 0.0
  %73 = vmatpush1.msra.mxu0 0.0
  %74 = vmatprep.subr.mxu0 0.0
  %75 = vmatpush1.msra.mxu0 0.0
  %76 = vmatprep.subr.mxu0 0.0
  %77 = vmatpush1.msra.mxu0 0.0
  %78 = vmatprep.subr.mxu0 0.0
  %79 = vmatpush1.msra.mxu0 0.0
  %80 = vmatprep.subr.mxu0 0.0
  %81 = vmatpush1.msra.mxu0 0.0
  %82 = vmatprep.subr.mxu0 0.0
  %83 = vmatpush1.msra.mxu0 0.0
  %84 = vmatprep.subr.mxu0 0.0
  %85 = vmatpush1.msra.mxu0 0.0
  %86 = vmatprep.subr.mxu0 0.0
  %87 = vmatpush1.msra.mxu0 0.0
  %88 = vmatprep.subr.mxu0 0.0
  %89 = vmatpush1.msra.mxu0 0.0
  %90 = vmatprep.subr.mxu0 0.0
  %91 = vmatpush1.msra.mxu0 0.0
  %92 = vmatprep.subr.mxu0 0.0
  %93 = vmatpush1.msra.mxu0 0.0
  %94 = vmatprep.subr.mxu0 0.0
  %95 = vmatpush1.msra.mxu0 0.0
  %96 = vmatprep.subr.mxu0 0.0
  %97 = vmatpush1.msra.mxu0 0.0
  %98 = vmatprep.mubr.f32.mxu0 0.0
  %99 = vmatmul.mubr.f32.gmra.mrb[0].mxu0 %v29
  %v100 = vpop.f32.mrb[0].mxu0
  %v101 = vadd.f32 %v25, %v100
  %v102 = vpop.f32.mrb[0].mxu0
  %103 = vmatprep.mubr.f32.mxu0 0.0
  %104 = vmatmul.mubr.f32.gmra.mrb[0].mxu0 %v32
  %v105 = vpop.f32.mrb[0].mxu0
  %v106 = vadd.f32 %v25, %v105
  %v107 = vpop.f32.mrb[0].mxu0
  %108 = vdwg.mxu0
  %vm109 = vcmask 785408
  %110 = vst.msk [vmem:[%s3] sm:$0xff] %vm109, %v101
  %111 = vst.msk [vmem:[%s3 + $0x8] sm:$0xff] %vm109, %v106
  // Predicated region
  $region14: #{transformer_net_forward.11} parent=0 // pred_check
    _
  $region15: #{transformer_net_forward.11} parent=0 // pred_check_branch
    %113 = sbr.rel (0) target = $region17
  $region16: #{transformer_net_forward.11} parent=0 // pred_region
    _
  $region17: #{transformer_net_forward.11} parent=0 // pred_fallthru
    _
  // Predicated region
  $region18: #{transformer_net_forward.11} parent=0 // pred_check
    _
  $region19: #{transformer_net_forward.11} parent=0 // pred_check_branch
    %115 = sbr.rel (0) target = $region21
  $region20: #{transformer_net_forward.11} parent=0 // pred_region
    _
  $region21: #{transformer_net_forward.11} parent=0 // pred_fallthru
    _

// kernel: transformer_net_forward.10
$region0: #{transformer_net_forward.10}
  #allocation0 [shape = 'u32[]', space=smem, size = 0x4, offset = 0x4, fixed_abs, tag = 'smem constant byte address 0x4 - core index']
  #allocation1 [shape = 'u32[144,128]{1,0:T(1,128)}', space=vmem, size = 0x12000, scoped, tag = 'internal scratch']
  %s0 = inlined_call_operand.vmem [shape: f32[2,8,16], index: 0, kind: input, shape index: {}]
  %s1 = inlined_call_operand.vmem [shape: f32[16,32], index: 1, kind: input, shape index: {}]
  %s2 = inlined_call_operand.vmem [shape: f32[1,32], index: 2, kind: input, shape index: {}]
  %s3 = inlined_call_operand.vmem [shape: f32[32,32], index: 3, kind: input, shape index: {}]
  %s4 = inlined_call_operand.vmem [shape: f32[1,32], index: 4, kind: input, shape index: {}]
  %s5 = inlined_call_operand.vmem [shape: f32[8,32], index: 5, kind: input, shape index: {}]
  %s6 = inlined_call_operand.vmem [shape: f32[2,1,32], index: 6, kind: input, shape index: {}]
  %s7 = inlined_call_operand.vmem [shape: f32[1,32], index: 7, kind: input, shape index: {}]
  %s8 = inlined_call_operand.vmem [shape: f32[1,32], index: 8, kind: input, shape index: {}]
  %s9 = inlined_call_operand.vmem [shape: f32[2,8,32], index: 9, kind: output, shape index: {}]
  %s10 = sld [smem:[#allocation0]]
  $region69: #{transformer_net_forward.10} parent=0
    _
  %s12 = ssub.s32 1, %s10
  %s13 = scalar_select 0, %s12, %s10
  loop: start=0, step=1, limit=4
  $region2: #{transformer_net_forward.10} parent=0 // loop_pre_header
    _
  $region3: #{transformer_net_forward.10} parent=0 // loop_header
    %s15 = sphi 0, %s19
    %p16 = scmp.ge.s32.totalorder %s15, 4
    %s25 = sphi 0, %s27
    %s28 = sphi 0, %s25
    %s29 = sphi 0, %s28
    %s45 = sphi 0, %s29
    %s49 = sphi 0, %s49
    %s51 = sphi 0, %s49
    %s52 = sphi 0, %s51
    %s66 = sphi 0, %s52
    %s70 = sphi 0, %s70
    %s72 = sphi 0, %s70
    %s73 = sphi 0, %s72
    %s87 = sphi 0, %s73
    %s91 = sphi 0, %s91
    %s93 = sphi 0, %s91
    %s94 = sphi 0, %s93
    %s108 = sphi 0, %s94
    %s112 = sphi 0, %s112
    %s114 = sphi 0, %s112
    %s115 = sphi 0, %s114
    %s129 = sphi 0, %s115
    %s133 = sphi 0, %s133
    %s135 = sphi 0, %s133
    %s136 = sphi 0, %s135
    %s150 = sphi 0, %s136
    %s156 = sphi 0, %s158
    %s159 = sphi 0, %s156
    %s160 = sphi 0, %s159
    %s176 = sphi 0, %s160
    %s180 = sphi 0, %s180
    %s182 = sphi 0, %s180
    %s183 = sphi 0, %s182
    %s197 = sphi 0, %s183
    %s201 = sphi 0, %s201
    %s203 = sphi 0, %s201
    %s204 = sphi 0, %s203
    %s218 = sphi 0, %s204
    %s224 = sphi 0, %s226
    %s227 = sphi 0, %s224
    %s228 = sphi 0, %s227
    %s244 = sphi 0, %s228
  $region4: #{transformer_net_forward.10} parent=0 // loop_header_branch
    %18 = sbr.rel (%p16) target = $region8
  $region5: #{transformer_net_forward.10} parent=0 // loop_body
    %s20 = ssub.s32 %s15, 1
    %s21 = ssub.s32 %s15, 2
    %s22 = sadd.s32 %s15, 1
    %s23 = ssub.s32 %s15, %s22
    %p24 = scmp.eq.s32.totalorder %s23, 0
    %s26 = sadd.s32 %s25, 1
    %s27 = scalar_select %p24, %s25, %s26
    %p30 = pneg %p24
    %p31 = scmp.eq.s32.totalorder %s15, 1
    %p32 = por %p30, %p31
    %p33 = scmp.ne.s32.totalorder %s25, %s28
    %p34 = scmp.eq.s32.totalorder %s15, 0
    %p35 = por %p33, %p34
    %p36 = scmp.ne.s32.totalorder %s25, %s28
    %p37 = scmp.eq.s32.totalorder %s20, 1
    %p38 = por %p36, %p37
    %p39 = scmp.ne.s32.totalorder %s28, %s29
    %p40 = scmp.eq.s32.totalorder %s20, 0
    %p41 = por %p39, %p40
    %p42 = scmp.ne.s32.totalorder %s28, %s29
    %p43 = scmp.eq.s32.totalorder %s21, 1
    %p44 = por %p42, %p43
    %p46 = scmp.ne.s32.totalorder %s29, %s45
    %p47 = scmp.eq.s32.totalorder %s21, 0
    %p48 = por %p46, %p47
    %s50 = sadd.s32 %s49, 1
    %p53 = scmp.eq.s32.totalorder %s15, 1
    %p54 = scmp.ne.s32.totalorder %s49, %s51
    %p55 = scmp.eq.s32.totalorder %s15, 0
    %p56 = por %p54, %p55
    %p57 = scmp.ne.s32.totalorder %s49, %s51
    %p58 = scmp.eq.s32.totalorder %s20, 1
    %p59 = por %p57, %p58
    %p60 = scmp.ne.s32.totalorder %s51, %s52
    %p61 = scmp.eq.s32.totalorder %s20, 0
    %p62 = por %p60, %p61
    %p63 = scmp.ne.s32.totalorder %s51, %s52
    %p64 = scmp.eq.s32.totalorder %s21, 1
    %p65 = por %p63, %p64
    %p67 = scmp.ne.s32.totalorder %s52, %s66
    %p68 = scmp.eq.s32.totalorder %s21, 0
    %p69 = por %p67, %p68
    %s71 = sadd.s32 %s70, 1
    %p74 = scmp.eq.s32.totalorder %s15, 1
    %p75 = scmp.ne.s32.totalorder %s70, %s72
    %p76 = scmp.eq.s32.totalorder %s15, 0
    %p77 = por %p75, %p76
    %p78 = scmp.ne.s32.totalorder %s70, %s72
    %p79 = scmp.eq.s32.totalorder %s20, 1
    %p80 = por %p78, %p79
    %p81 = scmp.ne.s32.totalorder %s72, %s73
    %p82 = scmp.eq.s32.totalorder %s20, 0
    %p83 = por %p81, %p82
    %p84 = scmp.ne.s32.totalorder %s72, %s73
    %p85 = scmp.eq.s32.totalorder %s21, 1
    %p86 = por %p84, %p85
    %p88 = scmp.ne.s32.totalorder %s73, %s87
    %p89 = scmp.eq.s32.totalorder %s21, 0
    %p90 = por %p88, %p89
    %s92 = sadd.s32 %s91, 1
    %p95 = scmp.eq.s32.totalorder %s15, 1
    %p96 = scmp.ne.s32.totalorder %s91, %s93
    %p97 = scmp.eq.s32.totalorder %s15, 0
    %p98 = por %p96, %p97
    %p99 = scmp.ne.s32.totalorder %s91, %s93
    %p100 = scmp.eq.s32.totalorder %s20, 1
    %p101 = por %p99, %p100
    %p102 = scmp.ne.s32.totalorder %s93, %s94
    %p103 = scmp.eq.s32.totalorder %s20, 0
    %p104 = por %p102, %p103
    %p105 = scmp.ne.s32.totalorder %s93, %s94
    %p106 = scmp.eq.s32.totalorder %s21, 1
    %p107 = por %p105, %p106
    %p109 = scmp.ne.s32.totalorder %s94, %s108
    %p110 = scmp.eq.s32.totalorder %s21, 0
    %p111 = por %p109, %p110
    %s113 = sadd.s32 %s112, 1
    %p116 = scmp.eq.s32.totalorder %s15, 1
    %p117 = scmp.ne.s32.totalorder %s112, %s114
    %p118 = scmp.eq.s32.totalorder %s15, 0
    %p119 = por %p117, %p118
    %p120 = scmp.ne.s32.totalorder %s112, %s114
    %p121 = scmp.eq.s32.totalorder %s20, 1
    %p122 = por %p120, %p121
    %p123 = scmp.ne.s32.totalorder %s114, %s115
    %p124 = scmp.eq.s32.totalorder %s20, 0
    %p125 = por %p123, %p124
    %p126 = scmp.ne.s32.totalorder %s114, %s115
    %p127 = scmp.eq.s32.totalorder %s21, 1
    %p128 = por %p126, %p127
    %p130 = scmp.ne.s32.totalorder %s115, %s129
    %p131 = scmp.eq.s32.totalorder %s21, 0
    %p132 = por %p130, %p131
    %s134 = sadd.s32 %s133, 1
    %p137 = scmp.eq.s32.totalorder %s15, 1
    %p138 = scmp.ne.s32.totalorder %s133, %s135
    %p139 = scmp.eq.s32.totalorder %s15, 0
    %p140 = por %p138, %p139
    %p141 = scmp.ne.s32.totalorder %s133, %s135
    %p142 = scmp.eq.s32.totalorder %s20, 1
    %p143 = por %p141, %p142
    %p144 = scmp.ne.s32.totalorder %s135, %s136
    %p145 = scmp.eq.s32.totalorder %s20, 0
    %p146 = por %p144, %p145
    %p147 = scmp.ne.s32.totalorder %s135, %s136
    %p148 = scmp.eq.s32.totalorder %s21, 1
    %p149 = por %p147, %p148
    %p151 = scmp.ne.s32.totalorder %s136, %s150
    %p152 = scmp.eq.s32.totalorder %s21, 0
    %p153 = por %p151, %p152
    %s154 = ssub.s32 %s15, %s22
    %p155 = scmp.eq.s32.totalorder %s154, 0
    %s157 = sadd.s32 %s156, 1
    %s158 = scalar_select %p155, %s156, %s157
    %p161 = pneg %p155
    %p162 = scmp.eq.s32.totalorder %s15, 1
    %p163 = por %p161, %p162
    %p164 = scmp.ne.s32.totalorder %s156, %s159
    %p165 = scmp.eq.s32.totalorder %s15, 0
    %p166 = por %p164, %p165
    %p167 = scmp.ne.s32.totalorder %s156, %s159
    %p168 = scmp.eq.s32.totalorder %s20, 1
    %p169 = por %p167, %p168
    %p170 = scmp.ne.s32.totalorder %s159, %s160
    %p171 = scmp.eq.s32.totalorder %s20, 0
    %p172 = por %p170, %p171
    %p173 = scmp.ne.s32.totalorder %s159, %s160
    %p174 = scmp.eq.s32.totalorder %s21, 1
    %p175 = por %p173, %p174
    %p177 = scmp.ne.s32.totalorder %s160, %s176
    %p178 = scmp.eq.s32.totalorder %s21, 0
    %p179 = por %p177, %p178
    %s181 = sadd.s32 %s180, 1
    %p184 = scmp.eq.s32.totalorder %s15, 1
    %p185 = scmp.ne.s32.totalorder %s180, %s182
    %p186 = scmp.eq.s32.totalorder %s15, 0
    %p187 = por %p185, %p186
    %p188 = scmp.ne.s32.totalorder %s180, %s182
    %p189 = scmp.eq.s32.totalorder %s20, 1
    %p190 = por %p188, %p189
    %p191 = scmp.ne.s32.totalorder %s182, %s183
    %p192 = scmp.eq.s32.totalorder %s20, 0
    %p193 = por %p191, %p192
    %p194 = scmp.ne.s32.totalorder %s182, %s183
    %p195 = scmp.eq.s32.totalorder %s21, 1
    %p196 = por %p194, %p195
    %p198 = scmp.ne.s32.totalorder %s183, %s197
    %p199 = scmp.eq.s32.totalorder %s21, 0
    %p200 = por %p198, %p199
    %s202 = sadd.s32 %s201, 1
    %p205 = scmp.eq.s32.totalorder %s15, 1
    %p206 = scmp.ne.s32.totalorder %s201, %s203
    %p207 = scmp.eq.s32.totalorder %s15, 0
    %p208 = por %p206, %p207
    %p209 = scmp.ne.s32.totalorder %s201, %s203
    %p210 = scmp.eq.s32.totalorder %s20, 1
    %p211 = por %p209, %p210
    %p212 = scmp.ne.s32.totalorder %s203, %s204
    %p213 = scmp.eq.s32.totalorder %s20, 0
    %p214 = por %p212, %p213
    %p215 = scmp.ne.s32.totalorder %s203, %s204
    %p216 = scmp.eq.s32.totalorder %s21, 1
    %p217 = por %p215, %p216
    %p219 = scmp.ne.s32.totalorder %s204, %s218
    %p220 = scmp.eq.s32.totalorder %s21, 0
    %p221 = por %p219, %p220
    %s222 = ssub.s32 %s15, %s22
    %p223 = scmp.eq.s32.totalorder %s222, 0
    %s225 = sadd.s32 %s224, 1
    %s226 = scalar_select %p223, %s224, %s225
    %p229 = pneg %p223
    %p230 = scmp.eq.s32.totalorder %s15, 1
    %p231 = por %p229, %p230
    %p232 = scmp.ne.s32.totalorder %s224, %s227
    %p233 = scmp.eq.s32.totalorder %s15, 0
    %p234 = por %p232, %p233
    %p235 = scmp.ne.s32.totalorder %s224, %s227
    %p236 = scmp.eq.s32.totalorder %s20, 1
    %p237 = por %p235, %p236
    %p238 = scmp.ne.s32.totalorder %s227, %s228
    %p239 = scmp.eq.s32.totalorder %s20, 0
    %p240 = por %p238, %p239
    %p241 = scmp.ne.s32.totalorder %s227, %s228
    %p242 = scmp.eq.s32.totalorder %s21, 1
    %p243 = por %p241, %p242
    %p245 = scmp.ne.s32.totalorder %s228, %s244
    %p246 = scmp.eq.s32.totalorder %s21, 0
    %p247 = por %p245, %p246
    %p248 = scmp.le.s32.totalorder 1, %s15
    %p249 = scmp.lt.s32.totalorder %s15, 3
    %p250 = pnand %p248, %p249
    %p251 = pneg %p250
    // Predicated region
    $region9: #{transformer_net_forward.10} parent=5 // pred_check
      _
    $region10: #{transformer_net_forward.10} parent=5 // pred_check_branch
      %253 = sbr.rel (%p250) target = $region12
    $region11: #{transformer_net_forward.10} parent=5 // pred_region
      %s254 = ssub.s32 %s15, 1
      // Predicated region
      $region13: #{transformer_net_forward.10} parent=11 // pred_check
        %p255 = pneg %p62
      $region14: #{transformer_net_forward.10} parent=11 // pred_check_branch
        %257 = sbr.rel (%p255) target = $region16
      $region15: #{transformer_net_forward.10} parent=11 // pred_region
        _
      $region16: #{transformer_net_forward.10} parent=11 // pred_fallthru
        _
      // Predicated region
      $region17: #{transformer_net_forward.10} parent=11 // pred_check
        %p258 = pneg %p83
      $region18: #{transformer_net_forward.10} parent=11 // pred_check_branch
        %260 = sbr.rel (%p258) target = $region20
      $region19: #{transformer_net_forward.10} parent=11 // pred_region
        _
      $region20: #{transformer_net_forward.10} parent=11 // pred_fallthru
        _
      // Predicated region
      $region21: #{transformer_net_forward.10} parent=11 // pred_check
        %p261 = pneg %p104
      $region22: #{transformer_net_forward.10} parent=11 // pred_check_branch
        %263 = sbr.rel (%p261) target = $region24
      $region23: #{transformer_net_forward.10} parent=11 // pred_region
        _
      $region24: #{transformer_net_forward.10} parent=11 // pred_fallthru
        _
      // Predicated region
      $region25: #{transformer_net_forward.10} parent=11 // pred_check
        %p264 = pneg %p125
      $region26: #{transformer_net_forward.10} parent=11 // pred_check_branch
        %266 = sbr.rel (%p264) target = $region28
      $region27: #{transformer_net_forward.10} parent=11 // pred_region
        _
      $region28: #{transformer_net_forward.10} parent=11 // pred_fallthru
        _
      // Predicated region
      $region29: #{transformer_net_forward.10} parent=11 // pred_check
        %p267 = pneg %p146
      $region30: #{transformer_net_forward.10} parent=11 // pred_check_branch
        %269 = sbr.rel (%p267) target = $region32
      $region31: #{transformer_net_forward.10} parent=11 // pred_region
        _
      $region32: #{transformer_net_forward.10} parent=11 // pred_fallthru
        _
      // Predicated region
      $region33: #{transformer_net_forward.10} parent=11 // pred_check
        %p270 = pneg %p193
      $region34: #{transformer_net_forward.10} parent=11 // pred_check_branch
        %272 = sbr.rel (%p270) target = $region36
      $region35: #{transformer_net_forward.10} parent=11 // pred_region
        _
      $region36: #{transformer_net_forward.10} parent=11 // pred_fallthru
        _
      // Predicated region
      $region37: #{transformer_net_forward.10} parent=11 // pred_check
        %p273 = pneg %p214
      $region38: #{transformer_net_forward.10} parent=11 // pred_check_branch
        %275 = sbr.rel (%p273) target = $region40
      $region39: #{transformer_net_forward.10} parent=11 // pred_region
        _
      $region40: #{transformer_net_forward.10} parent=11 // pred_fallthru
        _
    $region12: #{transformer_net_forward.10} parent=5 // pred_fallthru
      _
    %p276 = scmp.lt.s32.totalorder %s15, 2
    // Predicated region
    $region41: #{transformer_net_forward.10} parent=5 // pred_check
      %p277 = pneg %p276
    $region42: #{transformer_net_forward.10} parent=5 // pred_check_branch
      %279 = sbr.rel (%p277) target = $region44
    $region43: #{transformer_net_forward.10} parent=5 // pred_region
      // Predicated region
      $region45: #{transformer_net_forward.10} parent=43 // pred_check
        %p280 = pneg %p35
      $region46: #{transformer_net_forward.10} parent=43 // pred_check_branch
        %282 = sbr.rel (%p280) target = $region48
      $region47: #{transformer_net_forward.10} parent=43 // pred_region
        %p283 = scmp.lt.s32.totalorder %s15, 1
        %s284 = scalar_select %p283, %s15, 1
        %s285 = smul.addr %s284, 8
        %s286 = scalar_lea.vmem %s0, %s285
      $region48: #{transformer_net_forward.10} parent=43 // pred_fallthru
        _
      // Predicated region
      $region49: #{transformer_net_forward.10} parent=43 // pred_check
        %p287 = pneg %p166
      $region50: #{transformer_net_forward.10} parent=43 // pred_check_branch
        %289 = sbr.rel (%p287) target = $region52
      $region51: #{transformer_net_forward.10} parent=43 // pred_region
        %p290 = scmp.lt.s32.totalorder %s15, 1
        %s291 = scalar_select %p290, %s15, 1
        %s292 = scalar_lea.vmem %s6, %s291
      $region52: #{transformer_net_forward.10} parent=43 // pred_fallthru
        _
    $region44: #{transformer_net_forward.10} parent=5 // pred_fallthru
      _
    %p293 = scmp.le.s32.totalorder 1, %s15
    %p294 = scmp.lt.s32.totalorder %s15, 3
    %p295 = pnand %p293, %p294
    %p296 = pneg %p295
    // Predicated region
    $region53: #{transformer_net_forward.10} parent=5 // pred_check
      _
    $region54: #{transformer_net_forward.10} parent=5 // pred_check_branch
      %298 = sbr.rel (%p295) target = $region56
    $region55: #{transformer_net_forward.10} parent=5 // pred_region
      %s299 = ssub.s32 %s15, 1
      %p300 = scmp.lt.s32.totalorder %s20, 1
      %s301 = scalar_select %p300, %s20, 1
      %s302 = smul.addr %s301, 8
      %s303 = scalar_lea.vmem %s0, %s302
      %p304 = pneg %p41
      %p305 = pneg %p38
      %p306 = pneg %p62
      %p307 = pneg %p59
      %p308 = pneg %p83
      %p309 = pneg %p80
      %p310 = pneg %p104
      %p311 = pneg %p101
      %p312 = pneg %p125
      %p313 = pneg %p122
      %p314 = pneg %p146
      %p315 = pneg %p143
      %p316 = scmp.lt.s32.totalorder %s20, 1
      %s317 = scalar_select %p316, %s20, 1
      %s318 = scalar_lea.vmem %s6, %s317
      %p319 = pneg %p172
      %p320 = pneg %p169
      %p321 = pneg %p193
      %p322 = pneg %p190
      %p323 = pneg %p214
      %p324 = pneg %p211
      %p325 = pneg %p240
      %p326 = pneg %p237
      %p327 = scmp.lt.s32.totalorder %s20, 1
      %s328 = scalar_select %p327, %s20, 1
      %s329 = smul.addr %s328, 8
      %s330 = scalar_lea.vmem %s9, %s329
      %p331 = scmp.lt.s32.totalorder %s20, 1
      %s332 = scalar_select %p331, %s20, 1
      %s333 = smul.addr %s332, 8
      %s334 = scalar_lea.vmem %s0, %s333
      %p335 = scmp.lt.s32.totalorder %s20, 1
      %s336 = scalar_select %p335, %s20, 1
      %s337 = scalar_lea.vmem %s6, %s336
      %p338 = scmp.lt.s32.totalorder %s20, 1
      %s339 = scalar_select %p338, %s20, 1
      %s340 = smul.addr %s339, 8
      %s341 = scalar_lea.vmem %s9, %s340
      %v342 = vld [vmem:[%s334] sm:$0xff]
      %v343 = vld [vmem:[%s1] sm:$0xff]
      %v344 = vld [vmem:[%s1 + $0x8] sm:$0xff]
      %v345 = vld [vmem:[%s2] sm:$0x1]
      %v347 = vlaneseq
      %v348 = vshrl.u32 %v347, 7
      %v349 = vsub.s32 0, %v348
      %v350 = vrot.slane %v345, %v349
      %vm352 = vcmask 130048
      %v354 = vsel %vm352, %v342, 0
      %356 = vmatprep.subr.mxu0 0.0
      %357 = vmatpush1.msra.mxu0 %v343
      %358 = vmatprep.subr.mxu0 0.0
      %359 = vmatpush1.msra.mxu0 %v344
      %360 = vmatprep.subr.mxu0 0.0
      %361 = vmatpush1.msra.mxu0 0.0
      %362 = vmatprep.subr.mxu0 0.0
      %363 = vmatpush1.msra.mxu0 0.0
      %364 = vmatprep.subr.mxu0 0.0
      %365 = vmatpush1.msra.mxu0 0.0
      %366 = vmatprep.subr.mxu0 0.0
      %367 = vmatpush1.msra.mxu0 0.0
      %368 = vmatprep.subr.mxu0 0.0
      %369 = vmatpush1.msra.mxu0 0.0
      %370 = vmatprep.subr.mxu0 0.0
      %371 = vmatpush1.msra.mxu0 0.0
      %372 = vmatprep.subr.mxu0 0.0
      %373 = vmatpush1.msra.mxu0 0.0
      %374 = vmatprep.subr.mxu0 0.0
      %375 = vmatpush1.msra.mxu0 0.0
      %376 = vmatprep.subr.mxu0 0.0
      %377 = vmatpush1.msra.mxu0 0.0
      %378 = vmatprep.subr.mxu0 0.0
      %379 = vmatpush1.msra.mxu0 0.0
      %380 = vmatprep.subr.mxu0 0.0
      %381 = vmatpush1.msra.mxu0 0.0
      %382 = vmatprep.subr.mxu0 0.0
      %383 = vmatpush1.msra.mxu0 0.0
      %384 = vmatprep.subr.mxu0 0.0
      %385 = vmatpush1.msra.mxu0 0.0
      %386 = vmatprep.subr.mxu0 0.0
      %387 = vmatpush1.msra.mxu0 0.0
      %388 = vmatprep.subr.mxu0 0.0
      %389 = vmatpush1.msra.mxu0 0.0
      %390 = vmatprep.subr.mxu0 0.0
      %391 = vmatpush1.msra.mxu0 0.0
      %392 = vmatprep.subr.mxu0 0.0
      %393 = vmatpush1.msra.mxu0 0.0
      %394 = vmatprep.subr.mxu0 0.0
      %395 = vmatpush1.msra.mxu0 0.0
      %396 = vmatprep.subr.mxu0 0.0
      %397 = vmatpush1.msra.mxu0 0.0
      %398 = vmatprep.subr.mxu0 0.0
      %399 = vmatpush1.msra.mxu0 0.0
      %400 = vmatprep.subr.mxu0 0.0
      %401 = vmatpush1.msra.mxu0 0.0
      %402 = vmatprep.subr.mxu0 0.0
      %403 = vmatpush1.msra.mxu0 0.0
      %404 = vmatprep.subr.mxu0 0.0
      %405 = vmatpush1.msra.mxu0 0.0
      %406 = vmatprep.subr.mxu0 0.0
      %407 = vmatpush1.msra.mxu0 0.0
      %408 = vmatprep.subr.mxu0 0.0
      %409 = vmatpush1.msra.mxu0 0.0
      %410 = vmatprep.subr.mxu0 0.0
      %411 = vmatpush1.msra.mxu0 0.0
      %412 = vmatprep.subr.mxu0 0.0
      %413 = vmatpush1.msra.mxu0 0.0
      %414 = vmatprep.subr.mxu0 0.0
      %415 = vmatpush1.msra.mxu0 0.0
      %416 = vmatprep.subr.mxu0 0.0
      %417 = vmatpush1.msra.mxu0 0.0
      %418 = vmatprep.subr.mxu0 0.0
      %419 = vmatpush1.msra.mxu0 0.0
      %420 = vmatprep.mubr.f32.mxu0 0.0
      %421 = vmatmul.mubr.f32.gmra.mrb[0].mxu0 %v354
      %v422 = vpop.f32.mrb[0].mxu0
      %v423 = vadd.f32 %v350, %v422
      %v424 = vpop.f32.mrb[0].mxu0
      %425 = vdwg.mxu0
      %v426 = vtanh.pop %v423
      %v427 = vld [vmem:[%s3] sm:$0xff]
      %v428 = vld [vmem:[%s3 + $0x8] sm:$0xff]
      %v429 = vld [vmem:[%s3 + $0x10] sm:$0xff]
      %v430 = vld [vmem:[%s3 + $0x18] sm:$0xff]
      %v431 = vld [vmem:[%s4] sm:$0x1]
      %v433 = vlaneseq
      %v434 = vshrl.u32 %v433, 7
      %v435 = vsub.s32 0, %v434
      %v436 = vrot.slane %v431, %v435
      %vm438 = vcmask 261120
      %v440 = vsel %vm438, %v426, 0
      %442 = vmatprep.subr.mxu0 0.0
      %443 = vmatpush1.msra.mxu0 %v427
      %444 = vmatprep.subr.mxu0 0.0
      %445 = vmatpush1.msra.mxu0 %v428
      %446 = vmatprep.subr.mxu0 0.0
      %447 = vmatpush1.msra.mxu0 %v429
      %448 = vmatprep.subr.mxu0 0.0
      %449 = vmatpush1.msra.mxu0 %v430
      %450 = vmatprep.subr.mxu0 0.0
      %451 = vmatpush1.msra.mxu0 0.0
      %452 = vmatprep.subr.mxu0 0.0
      %453 = vmatpush1.msra.mxu0 0.0
      %454 = vmatprep.subr.mxu0 0.0
      %455 = vmatpush1.msra.mxu0 0.0
      %456 = vmatprep.subr.mxu0 0.0
      %457 = vmatpush1.msra.mxu0 0.0
      %458 = vmatprep.subr.mxu0 0.0
      %459 = vmatpush1.msra.mxu0 0.0
      %460 = vmatprep.subr.mxu0 0.0
      %461 = vmatpush1.msra.mxu0 0.0
      %462 = vmatprep.subr.mxu0 0.0
      %463 = vmatpush1.msra.mxu0 0.0
      %464 = vmatprep.subr.mxu0 0.0
      %465 = vmatpush1.msra.mxu0 0.0
      %466 = vmatprep.subr.mxu0 0.0
      %467 = vmatpush1.msra.mxu0 0.0
      %468 = vmatprep.subr.mxu0 0.0
      %469 = vmatpush1.msra.mxu0 0.0
      %470 = vmatprep.subr.mxu0 0.0
      %471 = vmatpush1.msra.mxu0 0.0
      %472 = vmatprep.subr.mxu0 0.0
      %473 = vmatpush1.msra.mxu0 0.0
      %474 = vmatprep.subr.mxu0 0.0
      %475 = vmatpush1.msra.mxu0 0.0
      %476 = vmatprep.subr.mxu0 0.0
      %477 = vmatpush1.msra.mxu0 0.0
      %478 = vmatprep.subr.mxu0 0.0
      %479 = vmatpush1.msra.mxu0 0.0
      %480 = vmatprep.subr.mxu0 0.0
      %481 = vmatpush1.msra.mxu0 0.0
      %482 = vmatprep.subr.mxu0 0.0
      %483 = vmatpush1.msra.mxu0 0.0
      %484 = vmatprep.subr.mxu0 0.0
      %485 = vmatpush1.msra.mxu0 0.0
      %486 = vmatprep.subr.mxu0 0.0
      %487 = vmatpush1.msra.mxu0 0.0
      %488 = vmatprep.subr.mxu0 0.0
      %489 = vmatpush1.msra.mxu0 0.0
      %490 = vmatprep.subr.mxu0 0.0
      %491 = vmatpush1.msra.mxu0 0.0
      %492 = vmatprep.subr.mxu0 0.0
      %493 = vmatpush1.msra.mxu0 0.0
      %494 = vmatprep.subr.mxu0 0.0
      %495 = vmatpush1.msra.mxu0 0.0
      %496 = vmatprep.subr.mxu0 0.0
      %497 = vmatpush1.msra.mxu0 0.0
      %498 = vmatprep.subr.mxu0 0.0
      %499 = vmatpush1.msra.mxu0 0.0
      %500 = vmatprep.subr.mxu0 0.0
      %501 = vmatpush1.msra.mxu0 0.0
      %502 = vmatprep.subr.mxu0 0.0
      %503 = vmatpush1.msra.mxu0 0.0
      %504 = vmatprep.subr.mxu0 0.0
      %505 = vmatpush1.msra.mxu0 0.0
      %506 = vmatprep.mubr.f32.mxu0 0.0
      %507 = vmatmul.mubr.f32.gmra.mrb[0].mxu0 %v440
      %v508 = vpop.f32.mrb[0].mxu0
      %v509 = vadd.f32 %v436, %v508
      %v510 = vpop.f32.mrb[0].mxu0
      %511 = vdwg.mxu0
      %v512 = vld [vmem:[%s5] sm:$0xff]
      %v513 = vadd.f32 %v509, %v512
      %v514 = vld [vmem:[%s337] sm:$0x1]
      %v516 = vlaneseq
      %v517 = vshrl.u32 %v516, 7
      %v518 = vsub.s32 0, %v517
      %v519 = vrot.slane %v514, %v518
      %v521 = vadd.f32 %v513, %v519
      %v522 = vld [vmem:[%s7] sm:$0x1]
      %v523 = vld [vmem:[%s8] sm:$0x1]
      %v524 = vsel %vm438, %v521, 0.0
      %525 = vadd.xlane.f32.xlu0 %v524
      %v526 = vpop.xlane.xlu0 %525
      %v527 = vrcp.pop 32.0
      %v528 = vmul.f32 %v526, %v527
      %v529 = vsub.f32 %v521, %v528
      %v530 = vmul.f32 %v529, %v529
      %v531 = vsel %vm438, %v530, 0.0
      %532 = vadd.xlane.f32.xlu0 %v531
      %v533 = vpop.xlane.xlu0 %532
      %v534 = vmul.f32 %v533, %v527
      %v535 = vadd.f32 %v534, 1e-12
      %v536 = vrsqrt.pop %v535
      %v537 = vmul.f32 %v529, %v536
      %v539 = vlaneseq
      %v540 = vshrl.u32 %v539, 7
      %v541 = vsub.s32 0, %v540
      %v542 = vrot.slane %v522, %v541
      %v544 = vmul.f32 %v537, %v542
      %v546 = vlaneseq
      %v547 = vshrl.u32 %v546, 7
      %v548 = vsub.s32 0, %v547
      %v549 = vrot.slane %v523, %v548
      %v551 = vadd.f32 %v544, %v549
      %552 = vst.msk [vmem:[%s341] sm:$0xff] %vm438, %v551
      %p553 = scmp.lt.s32.totalorder %s20, 1
      %s554 = scalar_select %p553, %s20, 1
      %s555 = smul.addr %s554, 8
      %s556 = scalar_lea.vmem %s9, %s555
      // Predicated region
      $region57: #{transformer_net_forward.10} parent=55 // pred_check
        %p557 = pneg %p237
      $region58: #{transformer_net_forward.10} parent=55 // pred_check_branch
        %559 = sbr.rel (%p557) target = $region60
      $region59: #{transformer_net_forward.10} parent=55 // pred_region
        _
      $region60: #{transformer_net_forward.10} parent=55 // pred_fallthru
        _
    $region56: #{transformer_net_forward.10} parent=5 // pred_fallthru
      _
    %p560 = scmp.le.s32.totalorder 2, %s15
    // Predicated region
    $region61: #{transformer_net_forward.10} parent=5 // pred_check
      %p561 = pneg %p560
    $region62: #{transformer_net_forward.10} parent=5 // pred_check_branch
      %563 = sbr.rel (%p561) target = $region64
    $region63: #{transformer_net_forward.10} parent=5 // pred_region
      %s564 = ssub.s32 %s15, 2
      // Predicated region
      $region65: #{transformer_net_forward.10} parent=63 // pred_check
        %p565 = pneg %p243
      $region66: #{transformer_net_forward.10} parent=63 // pred_check_branch
        %567 = sbr.rel (%p565) target = $region68
      $region67: #{transformer_net_forward.10} parent=63 // pred_region
        %p568 = scmp.lt.s32.totalorder %s21, 1
        %s569 = scalar_select %p568, %s21, 1
        %s570 = smul.addr %s569, 8
        %s571 = scalar_lea.vmem %s9, %s570
      $region68: #{transformer_net_forward.10} parent=63 // pred_fallthru
        _
    $region64: #{transformer_net_forward.10} parent=5 // pred_fallthru
      _
  $region6: #{transformer_net_forward.10} parent=0 // loop_footer
    %s19 = sadd.s32 1, %s15
  $region7: #{transformer_net_forward.10} parent=0 // loop_footer_branch
    %14 = sbr.rel target = $region3
  $region8: #{transformer_net_forward.10} parent=0 // loop_exit
    _

// kernel: transformer_net_forward.12
$region0: #{transformer_net_forward.12}
  #allocation0 [shape = 'u32[]', space=smem, size = 0x4, offset = 0x4, fixed_abs, tag = 'smem constant byte address 0x4 - core index']
  #allocation1 [shape = 'u32[144,128]{1,0:T(1,128)}', space=vmem, size = 0x12000, scoped, tag = 'internal scratch']
  %s0 = inlined_call_operand.vmem [shape: f32[2,8,96], index: 0, kind: input, shape index: {}]
  %s1 = inlined_call_operand.vmem [shape: f32[2,8,32], index: 1, kind: input, shape index: {}]
  %s2 = inlined_call_operand.vmem [shape: f32[32,32], index: 2, kind: input, shape index: {}]
  %s3 = inlined_call_operand.vmem [shape: f32[1,32], index: 3, kind: input, shape index: {}]
  %s4 = inlined_call_operand.vmem [shape: f32[1,32], index: 4, kind: input, shape index: {}]
  %s5 = inlined_call_operand.vmem [shape: f32[1,32], index: 5, kind: input, shape index: {}]
  %s6 = inlined_call_operand.vmem [shape: f32[2,8,32], index: 6, kind: output, shape index: {}]
  %s7 = sld [smem:[#allocation0]]
  $region57: #{transformer_net_forward.12} parent=0
    _
  %s9 = ssub.s32 1, %s7
  %s10 = scalar_select 0, %s9, %s7
  loop: start=0, step=1, limit=4
  $region2: #{transformer_net_forward.12} parent=0 // loop_pre_header
    _
  $region3: #{transformer_net_forward.12} parent=0 // loop_header
    %s12 = sphi 0, %s16
    %p13 = scmp.ge.s32.totalorder %s12, 4
    %s22 = sphi 0, %s24
    %s25 = sphi 0, %s22
    %s26 = sphi 0, %s25
    %s42 = sphi 0, %s26
    %s48 = sphi 0, %s50
    %s51 = sphi 0, %s48
    %s52 = sphi 0, %s51
    %s68 = sphi 0, %s52
    %s72 = sphi 0, %s72
    %s74 = sphi 0, %s72
    %s75 = sphi 0, %s74
    %s89 = sphi 0, %s75
    %s93 = sphi 0, %s93
    %s95 = sphi 0, %s93
    %s96 = sphi 0, %s95
    %s110 = sphi 0, %s96
    %s114 = sphi 0, %s114
    %s116 = sphi 0, %s114
    %s117 = sphi 0, %s116
    %s131 = sphi 0, %s117
    %s135 = sphi 0, %s135
    %s137 = sphi 0, %s135
    %s138 = sphi 0, %s137
    %s152 = sphi 0, %s138
    %s158 = sphi 0, %s160
    %s161 = sphi 0, %s158
    %s162 = sphi 0, %s161
    %s178 = sphi 0, %s162
  $region4: #{transformer_net_forward.12} parent=0 // loop_header_branch
    %15 = sbr.rel (%p13) target = $region8
  $region5: #{transformer_net_forward.12} parent=0 // loop_body
    %s17 = ssub.s32 %s12, 1
    %s18 = ssub.s32 %s12, 2
    %s19 = sadd.s32 %s12, 1
    %s20 = ssub.s32 %s12, %s19
    %p21 = scmp.eq.s32.totalorder %s20, 0
    %s23 = sadd.s32 %s22, 1
    %s24 = scalar_select %p21, %s22, %s23
    %p27 = pneg %p21
    %p28 = scmp.eq.s32.totalorder %s12, 1
    %p29 = por %p27, %p28
    %p30 = scmp.ne.s32.totalorder %s22, %s25
    %p31 = scmp.eq.s32.totalorder %s12, 0
    %p32 = por %p30, %p31
    %p33 = scmp.ne.s32.totalorder %s22, %s25
    %p34 = scmp.eq.s32.totalorder %s17, 1
    %p35 = por %p33, %p34
    %p36 = scmp.ne.s32.totalorder %s25, %s26
    %p37 = scmp.eq.s32.totalorder %s17, 0
    %p38 = por %p36, %p37
    %p39 = scmp.ne.s32.totalorder %s25, %s26
    %p40 = scmp.eq.s32.totalorder %s18, 1
    %p41 = por %p39, %p40
    %p43 = scmp.ne.s32.totalorder %s26, %s42
    %p44 = scmp.eq.s32.totalorder %s18, 0
    %p45 = por %p43, %p44
    %s46 = ssub.s32 %s12, %s19
    %p47 = scmp.eq.s32.totalorder %s46, 0
    %s49 = sadd.s32 %s48, 1
    %s50 = scalar_select %p47, %s48, %s49
    %p53 = pneg %p47
    %p54 = scmp.eq.s32.totalorder %s12, 1
    %p55 = por %p53, %p54
    %p56 = scmp.ne.s32.totalorder %s48, %s51
    %p57 = scmp.eq.s32.totalorder %s12, 0
    %p58 = por %p56, %p57
    %p59 = scmp.ne.s32.totalorder %s48, %s51
    %p60 = scmp.eq.s32.totalorder %s17, 1
    %p61 = por %p59, %p60
    %p62 = scmp.ne.s32.totalorder %s51, %s52
    %p63 = scmp.eq.s32.totalorder %s17, 0
    %p64 = por %p62, %p63
    %p65 = scmp.ne.s32.totalorder %s51, %s52
    %p66 = scmp.eq.s32.totalorder %s18, 1
    %p67 = por %p65, %p66
    %p69 = scmp.ne.s32.totalorder %s52, %s68
    %p70 = scmp.eq.s32.totalorder %s18, 0
    %p71 = por %p69, %p70
    %s73 = sadd.s32 %s72, 1
    %p76 = scmp.eq.s32.totalorder %s12, 1
    %p77 = scmp.ne.s32.totalorder %s72, %s74
    %p78 = scmp.eq.s32.totalorder %s12, 0
    %p79 = por %p77, %p78
    %p80 = scmp.ne.s32.totalorder %s72, %s74
    %p81 = scmp.eq.s32.totalorder %s17, 1
    %p82 = por %p80, %p81
    %p83 = scmp.ne.s32.totalorder %s74, %s75
    %p84 = scmp.eq.s32.totalorder %s17, 0
    %p85 = por %p83, %p84
    %p86 = scmp.ne.s32.totalorder %s74, %s75
    %p87 = scmp.eq.s32.totalorder %s18, 1
    %p88 = por %p86, %p87
    %p90 = scmp.ne.s32.totalorder %s75, %s89
    %p91 = scmp.eq.s32.totalorder %s18, 0
    %p92 = por %p90, %p91
    %s94 = sadd.s32 %s93, 1
    %p97 = scmp.eq.s32.totalorder %s12, 1
    %p98 = scmp.ne.s32.totalorder %s93, %s95
    %p99 = scmp.eq.s32.totalorder %s12, 0
    %p100 = por %p98, %p99
    %p101 = scmp.ne.s32.totalorder %s93, %s95
    %p102 = scmp.eq.s32.totalorder %s17, 1
    %p103 = por %p101, %p102
    %p104 = scmp.ne.s32.totalorder %s95, %s96
    %p105 = scmp.eq.s32.totalorder %s17, 0
    %p106 = por %p104, %p105
    %p107 = scmp.ne.s32.totalorder %s95, %s96
    %p108 = scmp.eq.s32.totalorder %s18, 1
    %p109 = por %p107, %p108
    %p111 = scmp.ne.s32.totalorder %s96, %s110
    %p112 = scmp.eq.s32.totalorder %s18, 0
    %p113 = por %p111, %p112
    %s115 = sadd.s32 %s114, 1
    %p118 = scmp.eq.s32.totalorder %s12, 1
    %p119 = scmp.ne.s32.totalorder %s114, %s116
    %p120 = scmp.eq.s32.totalorder %s12, 0
    %p121 = por %p119, %p120
    %p122 = scmp.ne.s32.totalorder %s114, %s116
    %p123 = scmp.eq.s32.totalorder %s17, 1
    %p124 = por %p122, %p123
    %p125 = scmp.ne.s32.totalorder %s116, %s117
    %p126 = scmp.eq.s32.totalorder %s17, 0
    %p127 = por %p125, %p126
    %p128 = scmp.ne.s32.totalorder %s116, %s117
    %p129 = scmp.eq.s32.totalorder %s18, 1
    %p130 = por %p128, %p129
    %p132 = scmp.ne.s32.totalorder %s117, %s131
    %p133 = scmp.eq.s32.totalorder %s18, 0
    %p134 = por %p132, %p133
    %s136 = sadd.s32 %s135, 1
    %p139 = scmp.eq.s32.totalorder %s12, 1
    %p140 = scmp.ne.s32.totalorder %s135, %s137
    %p141 = scmp.eq.s32.totalorder %s12, 0
    %p142 = por %p140, %p141
    %p143 = scmp.ne.s32.totalorder %s135, %s137
    %p144 = scmp.eq.s32.totalorder %s17, 1
    %p145 = por %p143, %p144
    %p146 = scmp.ne.s32.totalorder %s137, %s138
    %p147 = scmp.eq.s32.totalorder %s17, 0
    %p148 = por %p146, %p147
    %p149 = scmp.ne.s32.totalorder %s137, %s138
    %p150 = scmp.eq.s32.totalorder %s18, 1
    %p151 = por %p149, %p150
    %p153 = scmp.ne.s32.totalorder %s138, %s152
    %p154 = scmp.eq.s32.totalorder %s18, 0
    %p155 = por %p153, %p154
    %s156 = ssub.s32 %s12, %s19
    %p157 = scmp.eq.s32.totalorder %s156, 0
    %s159 = sadd.s32 %s158, 1
    %s160 = scalar_select %p157, %s158, %s159
    %p163 = pneg %p157
    %p164 = scmp.eq.s32.totalorder %s12, 1
    %p165 = por %p163, %p164
    %p166 = scmp.ne.s32.totalorder %s158, %s161
    %p167 = scmp.eq.s32.totalorder %s12, 0
    %p168 = por %p166, %p167
    %p169 = scmp.ne.s32.totalorder %s158, %s161
    %p170 = scmp.eq.s32.totalorder %s17, 1
    %p171 = por %p169, %p170
    %p172 = scmp.ne.s32.totalorder %s161, %s162
    %p173 = scmp.eq.s32.totalorder %s17, 0
    %p174 = por %p172, %p173
    %p175 = scmp.ne.s32.totalorder %s161, %s162
    %p176 = scmp.eq.s32.totalorder %s18, 1
    %p177 = por %p175, %p176
    %p179 = scmp.ne.s32.totalorder %s162, %s178
    %p180 = scmp.eq.s32.totalorder %s18, 0
    %p181 = por %p179, %p180
    %p182 = scmp.le.s32.totalorder 1, %s12
    %p183 = scmp.lt.s32.totalorder %s12, 3
    %p184 = pnand %p182, %p183
    %p185 = pneg %p184
    // Predicated region
    $region9: #{transformer_net_forward.12} parent=5 // pred_check
      _
    $region10: #{transformer_net_forward.12} parent=5 // pred_check_branch
      %187 = sbr.rel (%p184) target = $region12
    $region11: #{transformer_net_forward.12} parent=5 // pred_region
      %s188 = ssub.s32 %s12, 1
      // Predicated region
      $region13: #{transformer_net_forward.12} parent=11 // pred_check
        %p189 = pneg %p85
      $region14: #{transformer_net_forward.12} parent=11 // pred_check_branch
        %191 = sbr.rel (%p189) target = $region16
      $region15: #{transformer_net_forward.12} parent=11 // pred_region
        _
      $region16: #{transformer_net_forward.12} parent=11 // pred_fallthru
        _
      // Predicated region
      $region17: #{transformer_net_forward.12} parent=11 // pred_check
        %p192 = pneg %p106
      $region18: #{transformer_net_forward.12} parent=11 // pred_check_branch
        %194 = sbr.rel (%p192) target = $region20
      $region19: #{transformer_net_forward.12} parent=11 // pred_region
        _
      $region20: #{transformer_net_forward.12} parent=11 // pred_fallthru
        _
      // Predicated region
      $region21: #{transformer_net_forward.12} parent=11 // pred_check
        %p195 = pneg %p127
      $region22: #{transformer_net_forward.12} parent=11 // pred_check_branch
        %197 = sbr.rel (%p195) target = $region24
      $region23: #{transformer_net_forward.12} parent=11 // pred_region
        _
      $region24: #{transformer_net_forward.12} parent=11 // pred_fallthru
        _
      // Predicated region
      $region25: #{transformer_net_forward.12} parent=11 // pred_check
        %p198 = pneg %p148
      $region26: #{transformer_net_forward.12} parent=11 // pred_check_branch
        %200 = sbr.rel (%p198) target = $region28
      $region27: #{transformer_net_forward.12} parent=11 // pred_region
        _
      $region28: #{transformer_net_forward.12} parent=11 // pred_fallthru
        _
    $region12: #{transformer_net_forward.12} parent=5 // pred_fallthru
      _
    %p201 = scmp.lt.s32.totalorder %s12, 2
    // Predicated region
    $region29: #{transformer_net_forward.12} parent=5 // pred_check
      %p202 = pneg %p201
    $region30: #{transformer_net_forward.12} parent=5 // pred_check_branch
      %204 = sbr.rel (%p202) target = $region32
    $region31: #{transformer_net_forward.12} parent=5 // pred_region
      // Predicated region
      $region33: #{transformer_net_forward.12} parent=31 // pred_check
        %p205 = pneg %p32
      $region34: #{transformer_net_forward.12} parent=31 // pred_check_branch
        %207 = sbr.rel (%p205) target = $region36
      $region35: #{transformer_net_forward.12} parent=31 // pred_region
        %p208 = scmp.lt.s32.totalorder %s12, 1
        %s209 = scalar_select %p208, %s12, 1
        %s210 = smul.addr %s209, 8
        %s211 = scalar_lea.vmem %s0, %s210
      $region36: #{transformer_net_forward.12} parent=31 // pred_fallthru
        _
      // Predicated region
      $region37: #{transformer_net_forward.12} parent=31 // pred_check
        %p212 = pneg %p58
      $region38: #{transformer_net_forward.12} parent=31 // pred_check_branch
        %214 = sbr.rel (%p212) target = $region40
      $region39: #{transformer_net_forward.12} parent=31 // pred_region
        %p215 = scmp.lt.s32.totalorder %s12, 1
        %s216 = scalar_select %p215, %s12, 1
        %s217 = smul.addr %s216, 8
        %s218 = scalar_lea.vmem %s1, %s217
      $region40: #{transformer_net_forward.12} parent=31 // pred_fallthru
        _
    $region32: #{transformer_net_forward.12} parent=5 // pred_fallthru
      _
    %p219 = scmp.le.s32.totalorder 1, %s12
    %p220 = scmp.lt.s32.totalorder %s12, 3
    %p221 = pnand %p219, %p220
    %p222 = pneg %p221
    // Predicated region
    $region41: #{transformer_net_forward.12} parent=5 // pred_check
      _
    $region42: #{transformer_net_forward.12} parent=5 // pred_check_branch
      %224 = sbr.rel (%p221) target = $region44
    $region43: #{transformer_net_forward.12} parent=5 // pred_region
      %s225 = ssub.s32 %s12, 1
      %p226 = scmp.lt.s32.totalorder %s17, 1
      %s227 = scalar_select %p226, %s17, 1
      %s228 = smul.addr %s227, 8
      %s229 = scalar_lea.vmem %s0, %s228
      %p230 = pneg %p38
      %p231 = pneg %p35
      %p232 = scmp.lt.s32.totalorder %s17, 1
      %s233 = scalar_select %p232, %s17, 1
      %s234 = smul.addr %s233, 8
      %s235 = scalar_lea.vmem %s1, %s234
      %p236 = pneg %p64
      %p237 = pneg %p61
      %p238 = pneg %p85
      %p239 = pneg %p82
      %p240 = pneg %p106
      %p241 = pneg %p103
      %p242 = pneg %p127
      %p243 = pneg %p124
      %p244 = pneg %p148
      %p245 = pneg %p145
      %p246 = pneg %p174
      %p247 = pneg %p171
      %p248 = scmp.lt.s32.totalorder %s17, 1
      %s249 = scalar_select %p248, %s17, 1
      %s250 = smul.addr %s249, 8
      %s251 = scalar_lea.vmem %s6, %s250
      %p252 = scmp.lt.s32.totalorder %s17, 1
      %s253 = scalar_select %p252, %s17, 1
      %s254 = smul.addr %s253, 8
      %s255 = scalar_lea.vmem %s0, %s254
      %p256 = scmp.lt.s32.totalorder %s17, 1
      %s257 = scalar_select %p256, %s17, 1
      %s258 = smul.addr %s257, 8
      %s259 = scalar_lea.vmem %s1, %s258
      %p260 = scmp.lt.s32.totalorder %s17, 1
      %s261 = scalar_select %p260, %s17, 1
      %s262 = smul.addr %s261, 8
      %s263 = scalar_lea.vmem %s6, %s262
      %v264 = vld [vmem:[%s255] sm:$0xff]
      %266 = vrot.lane.b32.xlu0 %v264, 96
      %v267 = vpop.permute.xlu0 %266
      %vm268 = vcmask 130048
      %v269 = vsel %vm268, %v264, 0
      %v271 = vsel %vm268, %v267, 0
      %273 = vmatprep.subr.mxu0 0.0
      %274 = vmatpush1.xpose.msra.mxu0 %v271
      %275 = vmatprep.subr.mxu0 0.0
      %276 = vmatpush1.xpose.msra.mxu0 0.0
      %277 = vmatprep.subr.mxu0 0.0
      %278 = vmatpush1.xpose.msra.mxu0 0.0
      %279 = vmatprep.subr.mxu0 0.0
      %280 = vmatpush1.xpose.msra.mxu0 0.0
      %281 = vmatprep.subr.mxu0 0.0
      %282 = vmatpush1.xpose.msra.mxu0 0.0
      %283 = vmatprep.subr.mxu0 0.0
      %284 = vmatpush1.xpose.msra.mxu0 0.0
      %285 = vmatprep.subr.mxu0 0.0
      %286 = vmatpush1.xpose.msra.mxu0 0.0
      %287 = vmatprep.subr.mxu0 0.0
      %288 = vmatpush1.xpose.msra.mxu0 0.0
      %289 = vmatprep.subr.mxu0 0.0
      %290 = vmatpush1.xpose.msra.mxu0 0.0
      %291 = vmatprep.subr.mxu0 0.0
      %292 = vmatpush1.xpose.msra.mxu0 0.0
      %293 = vmatprep.subr.mxu0 0.0
      %294 = vmatpush1.xpose.msra.mxu0 0.0
      %295 = vmatprep.subr.mxu0 0.0
      %296 = vmatpush1.xpose.msra.mxu0 0.0
      %297 = vmatprep.subr.mxu0 0.0
      %298 = vmatpush1.xpose.msra.mxu0 0.0
      %299 = vmatprep.subr.mxu0 0.0
      %300 = vmatpush1.xpose.msra.mxu0 0.0
      %301 = vmatprep.subr.mxu0 0.0
      %302 = vmatpush1.xpose.msra.mxu0 0.0
      %303 = vmatprep.subr.mxu0 0.0
      %304 = vmatpush1.xpose.msra.mxu0 0.0
      %305 = vmatprep.subr.mxu0 0.0
      %306 = vmatpush1.xpose.msra.mxu0 0.0
      %307 = vmatprep.subr.mxu0 0.0
      %308 = vmatpush1.xpose.msra.mxu0 0.0
      %309 = vmatprep.subr.mxu0 0.0
      %310 = vmatpush1.xpose.msra.mxu0 0.0
      %311 = vmatprep.subr.mxu0 0.0
      %312 = vmatpush1.xpose.msra.mxu0 0.0
      %313 = vmatprep.subr.mxu0 0.0
      %314 = vmatpush1.xpose.msra.mxu0 0.0
      %315 = vmatprep.subr.mxu0 0.0
      %316 = vmatpush1.xpose.msra.mxu0 0.0
      %317 = vmatprep.subr.mxu0 0.0
      %318 = vmatpush1.xpose.msra.mxu0 0.0
      %319 = vmatprep.subr.mxu0 0.0
      %320 = vmatpush1.xpose.msra.mxu0 0.0
      %321 = vmatprep.subr.mxu0 0.0
      %322 = vmatpush1.xpose.msra.mxu0 0.0
      %323 = vmatprep.subr.mxu0 0.0
      %324 = vmatpush1.xpose.msra.mxu0 0.0
      %325 = vmatprep.subr.mxu0 0.0
      %326 = vmatpush1.xpose.msra.mxu0 0.0
      %327 = vmatprep.subr.mxu0 0.0
      %328 = vmatpush1.xpose.msra.mxu0 0.0
      %329 = vmatprep.subr.mxu0 0.0
      %330 = vmatpush1.xpose.msra.mxu0 0.0
      %331 = vmatprep.subr.mxu0 0.0
      %332 = vmatpush1.xpose.msra.mxu0 0.0
      %333 = vmatprep.subr.mxu0 0.0
      %334 = vmatpush1.xpose.msra.mxu0 0.0
      %335 = vmatprep.subr.mxu0 0.0
      %336 = vmatpush1.xpose.msra.mxu0 0.0
      %337 = vmatprep.mubr.f32.mxu0 0.0
      %338 = vmatmul.mubr.f32.gmra.mrb[0].mxu0 %v269
      %v339 = vpop.f32.mrb[0].mxu0
      %v340 = vadd.f32 0.0, %v339
      %v341 = vpop.f32.mrb[0].mxu0
      %342 = vdwg.mxu0
      %v343 = vmul.f32 %v340, 0.25
      %vm344 = vcmask 64512
      %v345 = vsel %vm344, %v343, -inf
      %346 = vmax.xlane.f32.xlu0 %v345
      %v347 = vpop.xlane.xlu0 %346
      %v348 = vsub.f32 %v343, %v347
      %v349 = vmul.f32 %v348, 1.442695
      %v350 = vpow.pop %v349
      %v351 = vsel %vm344, %v350, 0.0
      %352 = vadd.xlane.f32.xlu0 %v351
      %v353 = vpop.xlane.xlu0 %352
      %v354 = vrcp.pop %v353
      %v355 = vmul.f32 %v350, %v354
      %356 = vrot.lane.b32.xlu0 %v264, 64
      %v357 = vpop.permute.xlu0 %356
      %v360 = vsel %vm344, %v355, 0
      %362 = vmatprep.subr.mxu0 0.0
      %363 = vmatpush1.msra.mxu0 %v357
      %364 = vmatprep.subr.mxu0 0.0
      %365 = vmatpush1.msra.mxu0 0.0
      %366 = vmatprep.subr.mxu0 0.0
      %367 = vmatpush1.msra.mxu0 0.0
      %368 = vmatprep.subr.mxu0 0.0
      %369 = vmatpush1.msra.mxu0 0.0
      %370 = vmatprep.subr.mxu0 0.0
      %371 = vmatpush1.msra.mxu0 0.0
      %372 = vmatprep.subr.mxu0 0.0
      %373 = vmatpush1.msra.mxu0 0.0
      %374 = vmatprep.subr.mxu0 0.0
      %375 = vmatpush1.msra.mxu0 0.0
      %376 = vmatprep.subr.mxu0 0.0
      %377 = vmatpush1.msra.mxu0 0.0
      %378 = vmatprep.subr.mxu0 0.0
      %379 = vmatpush1.msra.mxu0 0.0
      %380 = vmatprep.subr.mxu0 0.0
      %381 = vmatpush1.msra.mxu0 0.0
      %382 = vmatprep.subr.mxu0 0.0
      %383 = vmatpush1.msra.mxu0 0.0
      %384 = vmatprep.subr.mxu0 0.0
      %385 = vmatpush1.msra.mxu0 0.0
      %386 = vmatprep.subr.mxu0 0.0
      %387 = vmatpush1.msra.mxu0 0.0
      %388 = vmatprep.subr.mxu0 0.0
      %389 = vmatpush1.msra.mxu0 0.0
      %390 = vmatprep.subr.mxu0 0.0
      %391 = vmatpush1.msra.mxu0 0.0
      %392 = vmatprep.subr.mxu0 0.0
      %393 = vmatpush1.msra.mxu0 0.0
      %394 = vmatprep.subr.mxu0 0.0
      %395 = vmatpush1.msra.mxu0 0.0
      %396 = vmatprep.subr.mxu0 0.0
      %397 = vmatpush1.msra.mxu0 0.0
      %398 = vmatprep.subr.mxu0 0.0
      %399 = vmatpush1.msra.mxu0 0.0
      %400 = vmatprep.subr.mxu0 0.0
      %401 = vmatpush1.msra.mxu0 0.0
      %402 = vmatprep.subr.mxu0 0.0
      %403 = vmatpush1.msra.mxu0 0.0
      %404 = vmatprep.subr.mxu0 0.0
      %405 = vmatpush1.msra.mxu0 0.0
      %406 = vmatprep.subr.mxu0 0.0
      %407 = vmatpush1.msra.mxu0 0.0
      %408 = vmatprep.subr.mxu0 0.0
      %409 = vmatpush1.msra.mxu0 0.0
      %410 = vmatprep.subr.mxu0 0.0
      %411 = vmatpush1.msra.mxu0 0.0
      %412 = vmatprep.subr.mxu0 0.0
      %413 = vmatpush1.msra.mxu0 0.0
      %414 = vmatprep.subr.mxu0 0.0
      %415 = vmatpush1.msra.mxu0 0.0
      %416 = vmatprep.subr.mxu0 0.0
      %417 = vmatpush1.msra.mxu0 0.0
      %418 = vmatprep.subr.mxu0 0.0
      %419 = vmatpush1.msra.mxu0 0.0
      %420 = vmatprep.subr.mxu0 0.0
      %421 = vmatpush1.msra.mxu0 0.0
      %422 = vmatprep.subr.mxu0 0.0
      %423 = vmatpush1.msra.mxu0 0.0
      %424 = vmatprep.subr.mxu0 0.0
      %425 = vmatpush1.msra.mxu0 0.0
      %426 = vmatprep.mubr.f32.mxu0 0.0
      %427 = vmatmul.mubr.f32.gmra.mrb[0].mxu0 %v360
      %v428 = vpop.f32.mrb[0].mxu0
      %v429 = vadd.f32 0.0, %v428
      %v430 = vpop.f32.mrb[0].mxu0
      %431 = vdwg.mxu0
      %432 = vrot.lane.b32.xlu0 %v264, 112
      %v433 = vpop.permute.xlu0 %432
      %434 = vrot.lane.b32.xlu0 %v264, 80
      %v435 = vpop.permute.xlu0 %434
      %v436 = vsel %vm268, %v433, 0
      %v438 = vsel %vm268, %v435, 0
      %440 = vmatprep.subr.mxu0 0.0
      %441 = vmatpush1.xpose.msra.mxu0 %v438
      %442 = vmatprep.subr.mxu0 0.0
      %443 = vmatpush1.xpose.msra.mxu0 0.0
      %444 = vmatprep.subr.mxu0 0.0
      %445 = vmatpush1.xpose.msra.mxu0 0.0
      %446 = vmatprep.subr.mxu0 0.0
      %447 = vmatpush1.xpose.msra.mxu0 0.0
      %448 = vmatprep.subr.mxu0 0.0
      %449 = vmatpush1.xpose.msra.mxu0 0.0
      %450 = vmatprep.subr.mxu0 0.0
      %451 = vmatpush1.xpose.msra.mxu0 0.0
      %452 = vmatprep.subr.mxu0 0.0
      %453 = vmatpush1.xpose.msra.mxu0 0.0
      %454 = vmatprep.subr.mxu0 0.0
      %455 = vmatpush1.xpose.msra.mxu0 0.0
      %456 = vmatprep.subr.mxu0 0.0
      %457 = vmatpush1.xpose.msra.mxu0 0.0
      %458 = vmatprep.subr.mxu0 0.0
      %459 = vmatpush1.xpose.msra.mxu0 0.0
      %460 = vmatprep.subr.mxu0 0.0
      %461 = vmatpush1.xpose.msra.mxu0 0.0
      %462 = vmatprep.subr.mxu0 0.0
      %463 = vmatpush1.xpose.msra.mxu0 0.0
      %464 = vmatprep.subr.mxu0 0.0
      %465 = vmatpush1.xpose.msra.mxu0 0.0
      %466 = vmatprep.subr.mxu0 0.0
      %467 = vmatpush1.xpose.msra.mxu0 0.0
      %468 = vmatprep.subr.mxu0 0.0
      %469 = vmatpush1.xpose.msra.mxu0 0.0
      %470 = vmatprep.subr.mxu0 0.0
      %471 = vmatpush1.xpose.msra.mxu0 0.0
      %472 = vmatprep.subr.mxu0 0.0
      %473 = vmatpush1.xpose.msra.mxu0 0.0
      %474 = vmatprep.subr.mxu0 0.0
      %475 = vmatpush1.xpose.msra.mxu0 0.0
      %476 = vmatprep.subr.mxu0 0.0
      %477 = vmatpush1.xpose.msra.mxu0 0.0
      %478 = vmatprep.subr.mxu0 0.0
      %479 = vmatpush1.xpose.msra.mxu0 0.0
      %480 = vmatprep.subr.mxu0 0.0
      %481 = vmatpush1.xpose.msra.mxu0 0.0
      %482 = vmatprep.subr.mxu0 0.0
      %483 = vmatpush1.xpose.msra.mxu0 0.0
      %484 = vmatprep.subr.mxu0 0.0
      %485 = vmatpush1.xpose.msra.mxu0 0.0
      %486 = vmatprep.subr.mxu0 0.0
      %487 = vmatpush1.xpose.msra.mxu0 0.0
      %488 = vmatprep.subr.mxu0 0.0
      %489 = vmatpush1.xpose.msra.mxu0 0.0
      %490 = vmatprep.subr.mxu0 0.0
      %491 = vmatpush1.xpose.msra.mxu0 0.0
      %492 = vmatprep.subr.mxu0 0.0
      %493 = vmatpush1.xpose.msra.mxu0 0.0
      %494 = vmatprep.subr.mxu0 0.0
      %495 = vmatpush1.xpose.msra.mxu0 0.0
      %496 = vmatprep.subr.mxu0 0.0
      %497 = vmatpush1.xpose.msra.mxu0 0.0
      %498 = vmatprep.subr.mxu0 0.0
      %499 = vmatpush1.xpose.msra.mxu0 0.0
      %500 = vmatprep.subr.mxu0 0.0
      %501 = vmatpush1.xpose.msra.mxu0 0.0
      %502 = vmatprep.subr.mxu0 0.0
      %503 = vmatpush1.xpose.msra.mxu0 0.0
      %504 = vmatprep.mubr.f32.mxu0 0.0
      %505 = vmatmul.mubr.f32.gmra.mrb[0].mxu0 %v436
      %v506 = vpop.f32.mrb[0].mxu0
      %v507 = vadd.f32 0.0, %v506
      %v508 = vpop.f32.mrb[0].mxu0
      %509 = vdwg.mxu0
      %v510 = vmul.f32 %v507, 0.25
      %v511 = vsel %vm344, %v510, -inf
      %512 = vmax.xlane.f32.xlu0 %v511
      %v513 = vpop.xlane.xlu0 %512
      %v514 = vsub.f32 %v510, %v513
      %v515 = vmul.f32 %v514, 1.442695
      %v516 = vpow.pop %v515
      %v517 = vsel %vm344, %v516, 0.0
      %518 = vadd.xlane.f32.xlu0 %v517
      %v519 = vpop.xlane.xlu0 %518
      %v520 = vrcp.pop %v519
      %v521 = vmul.f32 %v516, %v520
      %522 = vrot.lane.b32.xlu0 %v264, 48
      %v523 = vpop.permute.xlu0 %522
      %v526 = vsel %vm344, %v521, 0
      %528 = vmatprep.subr.mxu0 0.0
      %529 = vmatpush1.msra.mxu0 %v523
      %530 = vmatprep.subr.mxu0 0.0
      %531 = vmatpush1.msra.mxu0 0.0
      %532 = vmatprep.subr.mxu0 0.0
      %533 = vmatpush1.msra.mxu0 0.0
      %534 = vmatprep.subr.mxu0 0.0
      %535 = vmatpush1.msra.mxu0 0.0
      %536 = vmatprep.subr.mxu0 0.0
      %537 = vmatpush1.msra.mxu0 0.0
      %538 = vmatprep.subr.mxu0 0.0
      %539 = vmatpush1.msra.mxu0 0.0
      %540 = vmatprep.subr.mxu0 0.0
      %541 = vmatpush1.msra.mxu0 0.0
      %542 = vmatprep.subr.mxu0 0.0
      %543 = vmatpush1.msra.mxu0 0.0
      %544 = vmatprep.subr.mxu0 0.0
      %545 = vmatpush1.msra.mxu0 0.0
      %546 = vmatprep.subr.mxu0 0.0
      %547 = vmatpush1.msra.mxu0 0.0
      %548 = vmatprep.subr.mxu0 0.0
      %549 = vmatpush1.msra.mxu0 0.0
      %550 = vmatprep.subr.mxu0 0.0
      %551 = vmatpush1.msra.mxu0 0.0
      %552 = vmatprep.subr.mxu0 0.0
      %553 = vmatpush1.msra.mxu0 0.0
      %554 = vmatprep.subr.mxu0 0.0
      %555 = vmatpush1.msra.mxu0 0.0
      %556 = vmatprep.subr.mxu0 0.0
      %557 = vmatpush1.msra.mxu0 0.0
      %558 = vmatprep.subr.mxu0 0.0
      %559 = vmatpush1.msra.mxu0 0.0
      %560 = vmatprep.subr.mxu0 0.0
      %561 = vmatpush1.msra.mxu0 0.0
      %562 = vmatprep.subr.mxu0 0.0
      %563 = vmatpush1.msra.mxu0 0.0
      %564 = vmatprep.subr.mxu0 0.0
      %565 = vmatpush1.msra.mxu0 0.0
      %566 = vmatprep.subr.mxu0 0.0
      %567 = vmatpush1.msra.mxu0 0.0
      %568 = vmatprep.subr.mxu0 0.0
      %569 = vmatpush1.msra.mxu0 0.0
      %570 = vmatprep.subr.mxu0 0.0
      %571 = vmatpush1.msra.mxu0 0.0
      %572 = vmatprep.subr.mxu0 0.0
      %573 = vmatpush1.msra.mxu0 0.0
      %574 = vmatprep.subr.mxu0 0.0
      %575 = vmatpush1.msra.mxu0 0.0
      %576 = vmatprep.subr.mxu0 0.0
      %577 = vmatpush1.msra.mxu0 0.0
      %578 = vmatprep.subr.mxu0 0.0
      %579 = vmatpush1.msra.mxu0 0.0
      %580 = vmatprep.subr.mxu0 0.0
      %581 = vmatpush1.msra.mxu0 0.0
      %582 = vmatprep.subr.mxu0 0.0
      %583 = vmatpush1.msra.mxu0 0.0
      %584 = vmatprep.subr.mxu0 0.0
      %585 = vmatpush1.msra.mxu0 0.0
      %586 = vmatprep.subr.mxu0 0.0
      %587 = vmatpush1.msra.mxu0 0.0
      %588 = vmatprep.subr.mxu0 0.0
      %589 = vmatpush1.msra.mxu0 0.0
      %590 = vmatprep.subr.mxu0 0.0
      %591 = vmatpush1.msra.mxu0 0.0
      %592 = vmatprep.mubr.f32.mxu0 0.0
      %593 = vmatmul.mubr.f32.gmra.mrb[0].mxu0 %v526
      %v594 = vpop.f32.mrb[0].mxu0
      %v595 = vadd.f32 0.0, %v594
      %v596 = vpop.f32.mrb[0].mxu0
      %597 = vdwg.mxu0
      %599 = vrot.lane.b32.xlu0 %v595, 16
      %v600 = vpop.permute.xlu0 %599
      %v602 = vsel %vm268, %v429, %v600
      %v603 = vld [vmem:[%s2] sm:$0xff]
      %v604 = vld [vmem:[%s2 + $0x8] sm:$0xff]
      %v605 = vld [vmem:[%s2 + $0x10] sm:$0xff]
      %v606 = vld [vmem:[%s2 + $0x18] sm:$0xff]
      %v607 = vld [vmem:[%s3] sm:$0x1]
      %v609 = vlaneseq
      %v610 = vshrl.u32 %v609, 7
      %v611 = vsub.s32 0, %v610
      %v612 = vrot.slane %v607, %v611
      %vm614 = vcmask 261120
      %v616 = vsel %vm614, %v602, 0
      %618 = vmatprep.subr.mxu0 0.0
      %619 = vmatpush1.msra.mxu0 %v603
      %620 = vmatprep.subr.mxu0 0.0
      %621 = vmatpush1.msra.mxu0 %v604
      %622 = vmatprep.subr.mxu0 0.0
      %623 = vmatpush1.msra.mxu0 %v605
      %624 = vmatprep.subr.mxu0 0.0
      %625 = vmatpush1.msra.mxu0 %v606
      %626 = vmatprep.subr.mxu0 0.0
      %627 = vmatpush1.msra.mxu0 0.0
      %628 = vmatprep.subr.mxu0 0.0
      %629 = vmatpush1.msra.mxu0 0.0
      %630 = vmatprep.subr.mxu0 0.0
      %631 = vmatpush1.msra.mxu0 0.0
      %632 = vmatprep.subr.mxu0 0.0
      %633 = vmatpush1.msra.mxu0 0.0
      %634 = vmatprep.subr.mxu0 0.0
      %635 = vmatpush1.msra.mxu0 0.0
      %636 = vmatprep.subr.mxu0 0.0
      %637 = vmatpush1.msra.mxu0 0.0
      %638 = vmatprep.subr.mxu0 0.0
      %639 = vmatpush1.msra.mxu0 0.0
      %640 = vmatprep.subr.mxu0 0.0
      %641 = vmatpush1.msra.mxu0 0.0
      %642 = vmatprep.subr.mxu0 0.0
      %643 = vmatpush1.msra.mxu0 0.0
      %644 = vmatprep.subr.mxu0 0.0
      %645 = vmatpush1.msra.mxu0 0.0
      %646 = vmatprep.subr.mxu0 0.0
      %647 = vmatpush1.msra.mxu0 0.0
      %648 = vmatprep.subr.mxu0 0.0
      %649 = vmatpush1.msra.mxu0 0.0
      %650 = vmatprep.subr.mxu0 0.0
      %651 = vmatpush1.msra.mxu0 0.0
      %652 = vmatprep.subr.mxu0 0.0
      %653 = vmatpush1.msra.mxu0 0.0
      %654 = vmatprep.subr.mxu0 0.0
      %655 = vmatpush1.msra.mxu0 0.0
      %656 = vmatprep.subr.mxu0 0.0
      %657 = vmatpush1.msra.mxu0 0.0
      %658 = vmatprep.subr.mxu0 0.0
      %659 = vmatpush1.msra.mxu0 0.0
      %660 = vmatprep.subr.mxu0 0.0
      %661 = vmatpush1.msra.mxu0 0.0
      %662 = vmatprep.subr.mxu0 0.0
      %663 = vmatpush1.msra.mxu0 0.0
      %664 = vmatprep.subr.mxu0 0.0
      %665 = vmatpush1.msra.mxu0 0.0
      %666 = vmatprep.subr.mxu0 0.0
      %667 = vmatpush1.msra.mxu0 0.0
      %668 = vmatprep.subr.mxu0 0.0
      %669 = vmatpush1.msra.mxu0 0.0
      %670 = vmatprep.subr.mxu0 0.0
      %671 = vmatpush1.msra.mxu0 0.0
      %672 = vmatprep.subr.mxu0 0.0
      %673 = vmatpush1.msra.mxu0 0.0
      %674 = vmatprep.subr.mxu0 0.0
      %675 = vmatpush1.msra.mxu0 0.0
      %676 = vmatprep.subr.mxu0 0.0
      %677 = vmatpush1.msra.mxu0 0.0
      %678 = vmatprep.subr.mxu0 0.0
      %679 = vmatpush1.msra.mxu0 0.0
      %680 = vmatprep.subr.mxu0 0.0
      %681 = vmatpush1.msra.mxu0 0.0
      %682 = vmatprep.mubr.f32.mxu0 0.0
      %683 = vmatmul.mubr.f32.gmra.mrb[0].mxu0 %v616
      %v684 = vpop.f32.mrb[0].mxu0
      %v685 = vadd.f32 %v612, %v684
      %v686 = vpop.f32.mrb[0].mxu0
      %687 = vdwg.mxu0
      %v688 = vld [vmem:[%s259] sm:$0xff]
      %v689 = vadd.f32 %v685, %v688
      %v690 = vld [vmem:[%s4] sm:$0x1]
      %v691 = vld [vmem:[%s5] sm:$0x1]
      %v692 = vsel %vm614, %v689, 0.0
      %693 = vadd.xlane.f32.xlu0 %v692
      %v694 = vpop.xlane.xlu0 %693
      %v695 = vrcp.pop 32.0
      %v696 = vmul.f32 %v694, %v695
      %v697 = vsub.f32 %v689, %v696
      %v698 = vmul.f32 %v697, %v697
      %v699 = vsel %vm614, %v698, 0.0
      %700 = vadd.xlane.f32.xlu0 %v699
      %v701 = vpop.xlane.xlu0 %700
      %v702 = vmul.f32 %v701, %v695
      %v703 = vadd.f32 %v702, 1e-12
      %v704 = vrsqrt.pop %v703
      %v705 = vmul.f32 %v697, %v704
      %v707 = vlaneseq
      %v708 = vshrl.u32 %v707, 7
      %v709 = vsub.s32 0, %v708
      %v710 = vrot.slane %v690, %v709
      %v712 = vmul.f32 %v705, %v710
      %v714 = vlaneseq
      %v715 = vshrl.u32 %v714, 7
      %v716 = vsub.s32 0, %v715
      %v717 = vrot.slane %v691, %v716
      %v719 = vadd.f32 %v712, %v717
      %720 = vst.msk [vmem:[%s263] sm:$0xff] %vm614, %v719
      %p721 = scmp.lt.s32.totalorder %s17, 1
      %s722 = scalar_select %p721, %s17, 1
      %s723 = smul.addr %s722, 8
      %s724 = scalar_lea.vmem %s6, %s723
      // Predicated region
      $region45: #{transformer_net_forward.12} parent=43 // pred_check
        %p725 = pneg %p171
      $region46: #{transformer_net_forward.12} parent=43 // pred_check_branch
        %727 = sbr.rel (%p725) target = $region48
      $region47: #{transformer_net_forward.12} parent=43 // pred_region
        _
      $region48: #{transformer_net_forward.12} parent=43 // pred_fallthru
        _
    $region44: #{transformer_net_forward.12} parent=5 // pred_fallthru
      _
    %p728 = scmp.le.s32.totalorder 2, %s12
    // Predicated region
    $region49: #{transformer_net_forward.12} parent=5 // pred_check
      %p729 = pneg %p728
    $region50: #{transformer_net_forward.12} parent=5 // pred_check_branch
      %731 = sbr.rel (%p729) target = $region52
    $region51: #{transformer_net_forward.12} parent=5 // pred_region
      %s732 = ssub.s32 %s12, 2
      // Predicated region
      $region53: #{transformer_net_forward.12} parent=51 // pred_check
        %p733 = pneg %p177
      $region54: #{transformer_net_forward.12} parent=51 // pred_check_branch
        %735 = sbr.rel (%p733) target = $region56
      $region55: #{transformer_net_forward.12} parent=51 // pred_region
        %p736 = scmp.lt.s32.totalorder %s18, 1
        %s737 = scalar_select %p736, %s18, 1
        %s738 = smul.addr %s737, 8
        %s739 = scalar_lea.vmem %s6, %s738
      $region56: #{transformer_net_forward.12} parent=51 // pred_fallthru
        _
    $region52: #{transformer_net_forward.12} parent=5 // pred_fallthru
      _
  $region6: #{transformer_net_forward.12} parent=0 // loop_footer
    %s16 = sadd.s32 1, %s12
  $region7: #{transformer_net_forward.12} parent=0 // loop_footer_branch
    %11 = sbr.rel target = $region3
  $region8: #{transformer_net_forward.12} parent=0 // loop_exit
    _

// kernel: transformer_net_forward.17
$region0: #{transformer_net_forward.17}
  #allocation0 [shape = 'u32[]', space=smem, size = 0x4, offset = 0x4, fixed_abs, tag = 'smem constant byte address 0x4 - core index']
  #allocation1 [shape = 'u32[144,128]{1,0:T(1,128)}', space=vmem, size = 0x12000, scoped, tag = 'internal scratch']
  %s0 = inlined_call_operand.vmem [shape: f32[16,32], index: 0, kind: input, shape index: {}]
  %s1 = inlined_call_operand.vmem [shape: f32[32,32], index: 1, kind: input, shape index: {}]
  %s2 = inlined_call_operand.vmem [shape: f32[1,32], index: 2, kind: input, shape index: {}]
  %s3 = inlined_call_operand.vmem [shape: f32[32,16], index: 3, kind: input, shape index: {}]
  %s4 = inlined_call_operand.vmem [shape: f32[1,16], index: 4, kind: input, shape index: {}]
  %s5 = inlined_call_operand.hbm [shape: f32[16,16], index: 5, kind: output, shape index: {}]
  %s6 = sld [smem:[#allocation0]]
  $region30: #{transformer_net_forward.17} parent=0
    _
  %s8 = ssub.s32 1, %s6
  %s9 = scalar_select 0, %s8, %s6
  $region1: #{transformer_net_forward.17} parent=0
    #allocation2 [shape = 'u8[8192]{0}', space=vmem, size = 0x2000, scoped, tag = 'output window, operand 0, single buffered']
    #allocation3 [shape = 's32[1]{0}', space=sflag, size = 0x4, scoped, tag = 'scoped memory for transformer_net_forward.17']
    %10 = vsyncpa [#allocation3], 0
    // Predicated region
    $region2: #{transformer_net_forward.17} parent=1 // pred_check
      _
    $region3: #{transformer_net_forward.17} parent=1 // pred_check_branch
      %12 = sbr.rel (0) target = $region5
    $region4: #{transformer_net_forward.17} parent=1 // pred_region
      _
    $region5: #{transformer_net_forward.17} parent=1 // pred_fallthru
      _
    // Predicated region
    $region6: #{transformer_net_forward.17} parent=1 // pred_check
      _
    $region7: #{transformer_net_forward.17} parent=1 // pred_check_branch
      %14 = sbr.rel (0) target = $region9
    $region8: #{transformer_net_forward.17} parent=1 // pred_region
      _
    $region9: #{transformer_net_forward.17} parent=1 // pred_fallthru
      _
    // Predicated region
    $region10: #{transformer_net_forward.17} parent=1 // pred_check
      _
    $region11: #{transformer_net_forward.17} parent=1 // pred_check_branch
      %16 = sbr.rel (0) target = $region13
    $region12: #{transformer_net_forward.17} parent=1 // pred_region
      _
    $region13: #{transformer_net_forward.17} parent=1 // pred_fallthru
      _
    // Predicated region
    $region14: #{transformer_net_forward.17} parent=1 // pred_check
      _
    $region15: #{transformer_net_forward.17} parent=1 // pred_check_branch
      %18 = sbr.rel (0) target = $region17
    $region16: #{transformer_net_forward.17} parent=1 // pred_region
      _
    $region17: #{transformer_net_forward.17} parent=1 // pred_fallthru
      _
    // Predicated region
    $region18: #{transformer_net_forward.17} parent=1 // pred_check
      _
    $region19: #{transformer_net_forward.17} parent=1 // pred_check_branch
      %20 = sbr.rel (0) target = $region21
    $region20: #{transformer_net_forward.17} parent=1 // pred_region
      _
    $region21: #{transformer_net_forward.17} parent=1 // pred_fallthru
      _
    %v21 = vld [vmem:[%s0] sm:$0xff]
    %v22 = vld [vmem:[%s0 + $0x8] sm:$0xff]
    %v23 = vld [vmem:[%s1] sm:$0xff]
    %v24 = vld [vmem:[%s1 + $0x8] sm:$0xff]
    %v25 = vld [vmem:[%s1 + $0x10] sm:$0xff]
    %v26 = vld [vmem:[%s1 + $0x18] sm:$0xff]
    %v27 = vld [vmem:[%s2] sm:$0x1]
    %v29 = vlaneseq
    %v30 = vshrl.u32 %v29, 7
    %v31 = vsub.s32 0, %v30
    %v32 = vrot.slane %v27, %v31
    %vm34 = vcmask 261120
    %v36 = vsel %vm34, %v21, 0
    %v39 = vsel %vm34, %v22, 0
    %41 = vmatprep.subr.mxu0 0.0
    %42 = vmatpush1.msra.mxu0 %v23
    %43 = vmatprep.subr.mxu0 0.0
    %44 = vmatpush1.msra.mxu0 %v24
    %45 = vmatprep.subr.mxu0 0.0
    %46 = vmatpush1.msra.mxu0 %v25
    %47 = vmatprep.subr.mxu0 0.0
    %48 = vmatpush1.msra.mxu0 %v26
    %49 = vmatprep.subr.mxu0 0.0
    %50 = vmatpush1.msra.mxu0 0.0
    %51 = vmatprep.subr.mxu0 0.0
    %52 = vmatpush1.msra.mxu0 0.0
    %53 = vmatprep.subr.mxu0 0.0
    %54 = vmatpush1.msra.mxu0 0.0
    %55 = vmatprep.subr.mxu0 0.0
    %56 = vmatpush1.msra.mxu0 0.0
    %57 = vmatprep.subr.mxu0 0.0
    %58 = vmatpush1.msra.mxu0 0.0
    %59 = vmatprep.subr.mxu0 0.0
    %60 = vmatpush1.msra.mxu0 0.0
    %61 = vmatprep.subr.mxu0 0.0
    %62 = vmatpush1.msra.mxu0 0.0
    %63 = vmatprep.subr.mxu0 0.0
    %64 = vmatpush1.msra.mxu0 0.0
    %65 = vmatprep.subr.mxu0 0.0
    %66 = vmatpush1.msra.mxu0 0.0
    %67 = vmatprep.subr.mxu0 0.0
    %68 = vmatpush1.msra.mxu0 0.0
    %69 = vmatprep.subr.mxu0 0.0
    %70 = vmatpush1.msra.mxu0 0.0
    %71 = vmatprep.subr.mxu0 0.0
    %72 = vmatpush1.msra.mxu0 0.0
    %73 = vmatprep.subr.mxu0 0.0
    %74 = vmatpush1.msra.mxu0 0.0
    %75 = vmatprep.subr.mxu0 0.0
    %76 = vmatpush1.msra.mxu0 0.0
    %77 = vmatprep.subr.mxu0 0.0
    %78 = vmatpush1.msra.mxu0 0.0
    %79 = vmatprep.subr.mxu0 0.0
    %80 = vmatpush1.msra.mxu0 0.0
    %81 = vmatprep.subr.mxu0 0.0
    %82 = vmatpush1.msra.mxu0 0.0
    %83 = vmatprep.subr.mxu0 0.0
    %84 = vmatpush1.msra.mxu0 0.0
    %85 = vmatprep.subr.mxu0 0.0
    %86 = vmatpush1.msra.mxu0 0.0
    %87 = vmatprep.subr.mxu0 0.0
    %88 = vmatpush1.msra.mxu0 0.0
    %89 = vmatprep.subr.mxu0 0.0
    %90 = vmatpush1.msra.mxu0 0.0
    %91 = vmatprep.subr.mxu0 0.0
    %92 = vmatpush1.msra.mxu0 0.0
    %93 = vmatprep.subr.mxu0 0.0
    %94 = vmatpush1.msra.mxu0 0.0
    %95 = vmatprep.subr.mxu0 0.0
    %96 = vmatpush1.msra.mxu0 0.0
    %97 = vmatprep.subr.mxu0 0.0
    %98 = vmatpush1.msra.mxu0 0.0
    %99 = vmatprep.subr.mxu0 0.0
    %100 = vmatpush1.msra.mxu0 0.0
    %101 = vmatprep.subr.mxu0 0.0
    %102 = vmatpush1.msra.mxu0 0.0
    %103 = vmatprep.subr.mxu0 0.0
    %104 = vmatpush1.msra.mxu0 0.0
    %105 = vmatprep.mubr.f32.mxu0 0.0
    %106 = vmatmul.mubr.f32.gmra.mrb[0].mxu0 %v36
    %v107 = vpop.f32.mrb[0].mxu0
    %v108 = vadd.f32 %v32, %v107
    %v109 = vpop.f32.mrb[0].mxu0
    %110 = vmatprep.mubr.f32.mxu0 0.0
    %111 = vmatmul.mubr.f32.gmra.mrb[0].mxu0 %v39
    %v112 = vpop.f32.mrb[0].mxu0
    %v113 = vadd.f32 %v32, %v112
    %v114 = vpop.f32.mrb[0].mxu0
    %115 = vdwg.mxu0
    %v116 = vtanh.pop %v108
    %v117 = vtanh.pop %v113
    %v118 = vld [vmem:[%s3] sm:$0xff]
    %v119 = vld [vmem:[%s3 + $0x8] sm:$0xff]
    %v120 = vld [vmem:[%s3 + $0x10] sm:$0xff]
    %v121 = vld [vmem:[%s3 + $0x18] sm:$0xff]
    %v122 = vld [vmem:[%s4] sm:$0x1]
    %v124 = vlaneseq
    %v125 = vshrl.u32 %v124, 7
    %v126 = vsub.s32 0, %v125
    %v127 = vrot.slane %v122, %v126
    %v130 = vsel %vm34, %v116, 0
    %v133 = vsel %vm34, %v117, 0
    %135 = vmatprep.subr.mxu0 0.0
    %136 = vmatpush1.msra.mxu0 %v118
    %137 = vmatprep.subr.mxu0 0.0
    %138 = vmatpush1.msra.mxu0 %v119
    %139 = vmatprep.subr.mxu0 0.0
    %140 = vmatpush1.msra.mxu0 %v120
    %141 = vmatprep.subr.mxu0 0.0
    %142 = vmatpush1.msra.mxu0 %v121
    %143 = vmatprep.subr.mxu0 0.0
    %144 = vmatpush1.msra.mxu0 0.0
    %145 = vmatprep.subr.mxu0 0.0
    %146 = vmatpush1.msra.mxu0 0.0
    %147 = vmatprep.subr.mxu0 0.0
    %148 = vmatpush1.msra.mxu0 0.0
    %149 = vmatprep.subr.mxu0 0.0
    %150 = vmatpush1.msra.mxu0 0.0
    %151 = vmatprep.subr.mxu0 0.0
    %152 = vmatpush1.msra.mxu0 0.0
    %153 = vmatprep.subr.mxu0 0.0
    %154 = vmatpush1.msra.mxu0 0.0
    %155 = vmatprep.subr.mxu0 0.0
    %156 = vmatpush1.msra.mxu0 0.0
    %157 = vmatprep.subr.mxu0 0.0
    %158 = vmatpush1.msra.mxu0 0.0
    %159 = vmatprep.subr.mxu0 0.0
    %160 = vmatpush1.msra.mxu0 0.0
    %161 = vmatprep.subr.mxu0 0.0
    %162 = vmatpush1.msra.mxu0 0.0
    %163 = vmatprep.subr.mxu0 0.0
    %164 = vmatpush1.msra.mxu0 0.0
    %165 = vmatprep.subr.mxu0 0.0
    %166 = vmatpush1.msra.mxu0 0.0
    %167 = vmatprep.subr.mxu0 0.0
    %168 = vmatpush1.msra.mxu0 0.0
    %169 = vmatprep.subr.mxu0 0.0
    %170 = vmatpush1.msra.mxu0 0.0
    %171 = vmatprep.subr.mxu0 0.0
    %172 = vmatpush1.msra.mxu0 0.0
    %173 = vmatprep.subr.mxu0 0.0
    %174 = vmatpush1.msra.mxu0 0.0
    %175 = vmatprep.subr.mxu0 0.0
    %176 = vmatpush1.msra.mxu0 0.0
    %177 = vmatprep.subr.mxu0 0.0
    %178 = vmatpush1.msra.mxu0 0.0
    %179 = vmatprep.subr.mxu0 0.0
    %180 = vmatpush1.msra.mxu0 0.0
    %181 = vmatprep.subr.mxu0 0.0
    %182 = vmatpush1.msra.mxu0 0.0
    %183 = vmatprep.subr.mxu0 0.0
    %184 = vmatpush1.msra.mxu0 0.0
    %185 = vmatprep.subr.mxu0 0.0
    %186 = vmatpush1.msra.mxu0 0.0
    %187 = vmatprep.subr.mxu0 0.0
    %188 = vmatpush1.msra.mxu0 0.0
    %189 = vmatprep.subr.mxu0 0.0
    %190 = vmatpush1.msra.mxu0 0.0
    %191 = vmatprep.subr.mxu0 0.0
    %192 = vmatpush1.msra.mxu0 0.0
    %193 = vmatprep.subr.mxu0 0.0
    %194 = vmatpush1.msra.mxu0 0.0
    %195 = vmatprep.subr.mxu0 0.0
    %196 = vmatpush1.msra.mxu0 0.0
    %197 = vmatprep.subr.mxu0 0.0
    %198 = vmatpush1.msra.mxu0 0.0
    %199 = vmatprep.mubr.f32.mxu0 0.0
    %200 = vmatmul.mubr.f32.gmra.mrb[0].mxu0 %v130
    %v201 = vpop.f32.mrb[0].mxu0
    %v202 = vadd.f32 %v127, %v201
    %v203 = vpop.f32.mrb[0].mxu0
    %204 = vmatprep.mubr.f32.mxu0 0.0
    %205 = vmatmul.mubr.f32.gmra.mrb[0].mxu0 %v133
    %v206 = vpop.f32.mrb[0].mxu0
    %v207 = vadd.f32 %v127, %v206
    %v208 = vpop.f32.mrb[0].mxu0
    %209 = vdwg.mxu0
    %vm210 = vcmask 130048
    %211 = vst.msk [vmem:[#allocation2] sm:$0xff] %vm210, %v202
    %212 = vst.msk [vmem:[#allocation2 + $0x8] sm:$0xff] %vm210, %v207
    // Predicated region
    $region22: #{transformer_net_forward.17} parent=1 // pred_check
      _
    $region23: #{transformer_net_forward.17} parent=1 // pred_check_branch
      %214 = sbr.rel (0) target = $region25
    $region24: #{transformer_net_forward.17} parent=1 // pred_region
      %s216 = ssub.s32 256, 256
      %217 = vsyncadd [#allocation3], %s216
      %s218 = sshll.u32 [#allocation2], 4
      %s219 = int_to_ptr.vmem [resolvable:$true] %s218
      %224 = dma.vmem_to_hbm [thread:$0]  %s219, 256, %s5, [#allocation3], 128, 128, 8
    $region25: #{transformer_net_forward.17} parent=1 // pred_fallthru
      _
    // Predicated region
    $region26: #{transformer_net_forward.17} parent=1 // pred_check
      _
    $region27: #{transformer_net_forward.17} parent=1 // pred_check_branch
      %226 = sbr.rel (0) target = $region29
    $region28: #{transformer_net_forward.17} parent=1 // pred_region
      %227 = dma.done [#allocation3], 256
    $region29: #{transformer_net_forward.17} parent=1 // pred_fallthru
      _
    %228 = vsyncpa [#allocation3], 1

// kernel: transformer_net_forward.13
$region0: #{transformer_net_forward.13}
  #allocation0 [shape = 'u32[]', space=smem, size = 0x4, offset = 0x4, fixed_abs, tag = 'smem constant byte address 0x4 - core index']
  #allocation1 [shape = 'u32[144,128]{1,0:T(1,128)}', space=vmem, size = 0x12000, scoped, tag = 'internal scratch']
  #allocation2 [shape = 'f32[16,32]{1,0:T(8,128)}', space=vmem, size = 0x2000, scoped, tag = 'scratch operand']
  %s0 = inlined_call_operand.vmem [shape: f32[16,32], index: 0, kind: input, shape index: {}]
  %s1 = inlined_call_operand.vmem [shape: f32[32,64], index: 1, kind: input, shape index: {}]
  %s2 = inlined_call_operand.vmem [shape: f32[1,64], index: 2, kind: input, shape index: {}]
  %s3 = inlined_call_operand.vmem [shape: f32[64,32], index: 3, kind: input, shape index: {}]
  %s4 = inlined_call_operand.vmem [shape: f32[1,32], index: 4, kind: input, shape index: {}]
  %s5 = inlined_call_operand.vmem [shape: f32[1,32], index: 5, kind: input, shape index: {}]
  %s6 = inlined_call_operand.vmem [shape: f32[1,32], index: 6, kind: input, shape index: {}]
  %s7 = inlined_call_operand.vmem [shape: f32[16,32], index: 7, kind: output, shape index: {}]
  %s8 = sld [smem:[#allocation0]]
  $region46: #{transformer_net_forward.13} parent=0
    _
  %s10 = ssub.s32 1, %s8
  %s11 = scalar_select 0, %s10, %s8
  // Predicated region
  $region2: #{transformer_net_forward.13} parent=0 // pred_check
    _
  $region3: #{transformer_net_forward.13} parent=0 // pred_check_branch
    %13 = sbr.rel (0) target = $region5
  $region4: #{transformer_net_forward.13} parent=0 // pred_region
    _
  $region5: #{transformer_net_forward.13} parent=0 // pred_fallthru
    _
  // Predicated region
  $region6: #{transformer_net_forward.13} parent=0 // pred_check
    _
  $region7: #{transformer_net_forward.13} parent=0 // pred_check_branch
    %15 = sbr.rel (0) target = $region9
  $region8: #{transformer_net_forward.13} parent=0 // pred_region
    _
  $region9: #{transformer_net_forward.13} parent=0 // pred_fallthru
    _
  // Predicated region
  $region10: #{transformer_net_forward.13} parent=0 // pred_check
    _
  $region11: #{transformer_net_forward.13} parent=0 // pred_check_branch
    %17 = sbr.rel (0) target = $region13
  $region12: #{transformer_net_forward.13} parent=0 // pred_region
    _
  $region13: #{transformer_net_forward.13} parent=0 // pred_fallthru
    _
  // Predicated region
  $region14: #{transformer_net_forward.13} parent=0 // pred_check
    _
  $region15: #{transformer_net_forward.13} parent=0 // pred_check_branch
    %19 = sbr.rel (0) target = $region17
  $region16: #{transformer_net_forward.13} parent=0 // pred_region
    _
  $region17: #{transformer_net_forward.13} parent=0 // pred_fallthru
    _
  // Predicated region
  $region18: #{transformer_net_forward.13} parent=0 // pred_check
    _
  $region19: #{transformer_net_forward.13} parent=0 // pred_check_branch
    %21 = sbr.rel (0) target = $region21
  $region20: #{transformer_net_forward.13} parent=0 // pred_region
    _
  $region21: #{transformer_net_forward.13} parent=0 // pred_fallthru
    _
  // Predicated region
  $region22: #{transformer_net_forward.13} parent=0 // pred_check
    _
  $region23: #{transformer_net_forward.13} parent=0 // pred_check_branch
    %23 = sbr.rel (0) target = $region25
  $region24: #{transformer_net_forward.13} parent=0 // pred_region
    _
  $region25: #{transformer_net_forward.13} parent=0 // pred_fallthru
    _
  // Predicated region
  $region26: #{transformer_net_forward.13} parent=0 // pred_check
    _
  $region27: #{transformer_net_forward.13} parent=0 // pred_check_branch
    %25 = sbr.rel (0) target = $region29
  $region28: #{transformer_net_forward.13} parent=0 // pred_region
    _
  $region29: #{transformer_net_forward.13} parent=0 // pred_fallthru
    _
  %p26 = scmp.eq.s32.totalorder 0, 0
  // Predicated region
  $region30: #{transformer_net_forward.13} parent=0 // pred_check
    %p27 = pneg %p26
  $region31: #{transformer_net_forward.13} parent=0 // pred_check_branch
    %29 = sbr.rel (%p27) target = $region33
  $region32: #{transformer_net_forward.13} parent=0 // pred_region
    %vm30 = vcmask 261120
    %31 = vst.msk [vmem:[#allocation2] sm:$0xff] %vm30, 0.0
    %32 = vst.msk [vmem:[#allocation2 + $0x8] sm:$0xff] %vm30, 0.0
  $region33: #{transformer_net_forward.13} parent=0 // pred_fallthru
    _
  %v33 = vld [vmem:[%s0] sm:$0xff]
  %v34 = vld [vmem:[%s0 + $0x8] sm:$0xff]
  %v35 = vld [vmem:[%s1] sm:$0xff]
  %v36 = vld [vmem:[%s1 + $0x8] sm:$0xff]
  %v37 = vld [vmem:[%s1 + $0x10] sm:$0xff]
  %v38 = vld [vmem:[%s1 + $0x18] sm:$0xff]
  %v39 = vld [vmem:[%s2] sm:$0x1]
  %v41 = vlaneseq
  %v42 = vshrl.u32 %v41, 7
  %v43 = vsub.s32 0, %v42
  %v44 = vrot.slane %v39, %v43
  %vm46 = vcmask 261120
  %v48 = vsel %vm46, %v33, 0
  %v51 = vsel %vm46, %v34, 0
  %53 = vmatprep.subr.mxu0 0.0
  %54 = vmatpush1.msra.mxu0 %v35
  %55 = vmatprep.subr.mxu0 0.0
  %56 = vmatpush1.msra.mxu0 %v36
  %57 = vmatprep.subr.mxu0 0.0
  %58 = vmatpush1.msra.mxu0 %v37
  %59 = vmatprep.subr.mxu0 0.0
  %60 = vmatpush1.msra.mxu0 %v38
  %61 = vmatprep.subr.mxu0 0.0
  %62 = vmatpush1.msra.mxu0 0.0
  %63 = vmatprep.subr.mxu0 0.0
  %64 = vmatpush1.msra.mxu0 0.0
  %65 = vmatprep.subr.mxu0 0.0
  %66 = vmatpush1.msra.mxu0 0.0
  %67 = vmatprep.subr.mxu0 0.0
  %68 = vmatpush1.msra.mxu0 0.0
  %69 = vmatprep.subr.mxu0 0.0
  %70 = vmatpush1.msra.mxu0 0.0
  %71 = vmatprep.subr.mxu0 0.0
  %72 = vmatpush1.msra.mxu0 0.0
  %73 = vmatprep.subr.mxu0 0.0
  %74 = vmatpush1.msra.mxu0 0.0
  %75 = vmatprep.subr.mxu0 0.0
  %76 = vmatpush1.msra.mxu0 0.0
  %77 = vmatprep.subr.mxu0 0.0
  %78 = vmatpush1.msra.mxu0 0.0
  %79 = vmatprep.subr.mxu0 0.0
  %80 = vmatpush1.msra.mxu0 0.0
  %81 = vmatprep.subr.mxu0 0.0
  %82 = vmatpush1.msra.mxu0 0.0
  %83 = vmatprep.subr.mxu0 0.0
  %84 = vmatpush1.msra.mxu0 0.0
  %85 = vmatprep.subr.mxu0 0.0
  %86 = vmatpush1.msra.mxu0 0.0
  %87 = vmatprep.subr.mxu0 0.0
  %88 = vmatpush1.msra.mxu0 0.0
  %89 = vmatprep.subr.mxu0 0.0
  %90 = vmatpush1.msra.mxu0 0.0
  %91 = vmatprep.subr.mxu0 0.0
  %92 = vmatpush1.msra.mxu0 0.0
  %93 = vmatprep.subr.mxu0 0.0
  %94 = vmatpush1.msra.mxu0 0.0
  %95 = vmatprep.subr.mxu0 0.0
  %96 = vmatpush1.msra.mxu0 0.0
  %97 = vmatprep.subr.mxu0 0.0
  %98 = vmatpush1.msra.mxu0 0.0
  %99 = vmatprep.subr.mxu0 0.0
  %100 = vmatpush1.msra.mxu0 0.0
  %101 = vmatprep.subr.mxu0 0.0
  %102 = vmatpush1.msra.mxu0 0.0
  %103 = vmatprep.subr.mxu0 0.0
  %104 = vmatpush1.msra.mxu0 0.0
  %105 = vmatprep.subr.mxu0 0.0
  %106 = vmatpush1.msra.mxu0 0.0
  %107 = vmatprep.subr.mxu0 0.0
  %108 = vmatpush1.msra.mxu0 0.0
  %109 = vmatprep.subr.mxu0 0.0
  %110 = vmatpush1.msra.mxu0 0.0
  %111 = vmatprep.subr.mxu0 0.0
  %112 = vmatpush1.msra.mxu0 0.0
  %113 = vmatprep.subr.mxu0 0.0
  %114 = vmatpush1.msra.mxu0 0.0
  %115 = vmatprep.subr.mxu0 0.0
  %116 = vmatpush1.msra.mxu0 0.0
  %117 = vmatprep.mubr.f32.mxu0 0.0
  %118 = vmatmul.mubr.f32.gmra.mrb[0].mxu0 %v48
  %v119 = vpop.f32.mrb[0].mxu0
  %v120 = vadd.f32 %v44, %v119
  %v121 = vpop.f32.mrb[0].mxu0
  %122 = vmatprep.mubr.f32.mxu0 0.0
  %123 = vmatmul.mubr.f32.gmra.mrb[0].mxu0 %v51
  %v124 = vpop.f32.mrb[0].mxu0
  %v125 = vadd.f32 %v44, %v124
  %v126 = vpop.f32.mrb[0].mxu0
  %127 = vdwg.mxu0
  %v128 = vmul.f32 %v120, 0.5
  %v129 = vmul.f32 %v125, 0.5
  %v130 = vmul.f32 %v120, 0.044715
  %v131 = vmul.f32 %v125, 0.044715
  %v132 = vmul.f32 %v130, %v120
  %v133 = vmul.f32 %v131, %v125
  %v134 = vmul.f32 %v132, %v120
  %v135 = vmul.f32 %v133, %v125
  %v136 = vadd.f32 %v120, %v134
  %v137 = vadd.f32 %v125, %v135
  %v138 = vmul.f32 %v136, 0.7978846
  %v139 = vmul.f32 %v137, 0.7978846
  %v140 = vtanh.pop %v138
  %v141 = vtanh.pop %v139
  %v142 = vadd.f32 %v140, 1.0
  %v143 = vadd.f32 %v141, 1.0
  %v144 = vmul.f32 %v128, %v142
  %v145 = vmul.f32 %v129, %v143
  %v146 = vld [vmem:[#allocation2] sm:$0xff]
  %v147 = vld [vmem:[#allocation2 + $0x8] sm:$0xff]
  %v148 = vld [vmem:[%s3] sm:$0xff]
  %v149 = vld [vmem:[%s3 + $0x8] sm:$0xff]
  %v150 = vld [vmem:[%s3 + $0x10] sm:$0xff]
  %v151 = vld [vmem:[%s3 + $0x18] sm:$0xff]
  %v152 = vld [vmem:[%s3 + $0x20] sm:$0xff]
  %v153 = vld [vmem:[%s3 + $0x28] sm:$0xff]
  %v154 = vld [vmem:[%s3 + $0x30] sm:$0xff]
  %v155 = vld [vmem:[%s3 + $0x38] sm:$0xff]
  %vm156 = vcmask 523264
  %v158 = vsel %vm156, %v144, 0
  %v161 = vsel %vm156, %v145, 0
  %163 = vmatprep.subr.mxu0 0.0
  %164 = vmatpush1.msra.mxu0 %v148
  %165 = vmatprep.subr.mxu0 0.0
  %166 = vmatpush1.msra.mxu0 %v149
  %167 = vmatprep.subr.mxu0 0.0
  %168 = vmatpush1.msra.mxu0 %v150
  %169 = vmatprep.subr.mxu0 0.0
  %170 = vmatpush1.msra.mxu0 %v151
  %171 = vmatprep.subr.mxu0 0.0
  %172 = vmatpush1.msra.mxu0 %v152
  %173 = vmatprep.subr.mxu0 0.0
  %174 = vmatpush1.msra.mxu0 %v153
  %175 = vmatprep.subr.mxu0 0.0
  %176 = vmatpush1.msra.mxu0 %v154
  %177 = vmatprep.subr.mxu0 0.0
  %178 = vmatpush1.msra.mxu0 %v155
  %179 = vmatprep.subr.mxu0 0.0
  %180 = vmatpush1.msra.mxu0 0.0
  %181 = vmatprep.subr.mxu0 0.0
  %182 = vmatpush1.msra.mxu0 0.0
  %183 = vmatprep.subr.mxu0 0.0
  %184 = vmatpush1.msra.mxu0 0.0
  %185 = vmatprep.subr.mxu0 0.0
  %186 = vmatpush1.msra.mxu0 0.0
  %187 = vmatprep.subr.mxu0 0.0
  %188 = vmatpush1.msra.mxu0 0.0
  %189 = vmatprep.subr.mxu0 0.0
  %190 = vmatpush1.msra.mxu0 0.0
  %191 = vmatprep.subr.mxu0 0.0
  %192 = vmatpush1.msra.mxu0 0.0
  %193 = vmatprep.subr.mxu0 0.0
  %194 = vmatpush1.msra.mxu0 0.0
  %195 = vmatprep.subr.mxu0 0.0
  %196 = vmatpush1.msra.mxu0 0.0
  %197 = vmatprep.subr.mxu0 0.0
  %198 = vmatpush1.msra.mxu0 0.0
  %199 = vmatprep.subr.mxu0 0.0
  %200 = vmatpush1.msra.mxu0 0.0
  %201 = vmatprep.subr.mxu0 0.0
  %202 = vmatpush1.msra.mxu0 0.0
  %203 = vmatprep.subr.mxu0 0.0
  %204 = vmatpush1.msra.mxu0 0.0
  %205 = vmatprep.subr.mxu0 0.0
  %206 = vmatpush1.msra.mxu0 0.0
  %207 = vmatprep.subr.mxu0 0.0
  %208 = vmatpush1.msra.mxu0 0.0
  %209 = vmatprep.subr.mxu0 0.0
  %210 = vmatpush1.msra.mxu0 0.0
  %211 = vmatprep.subr.mxu0 0.0
  %212 = vmatpush1.msra.mxu0 0.0
  %213 = vmatprep.subr.mxu0 0.0
  %214 = vmatpush1.msra.mxu0 0.0
  %215 = vmatprep.subr.mxu0 0.0
  %216 = vmatpush1.msra.mxu0 0.0
  %217 = vmatprep.subr.mxu0 0.0
  %218 = vmatpush1.msra.mxu0 0.0
  %219 = vmatprep.subr.mxu0 0.0
  %220 = vmatpush1.msra.mxu0 0.0
  %221 = vmatprep.subr.mxu0 0.0
  %222 = vmatpush1.msra.mxu0 0.0
  %223 = vmatprep.subr.mxu0 0.0
  %224 = vmatpush1.msra.mxu0 0.0
  %225 = vmatprep.subr.mxu0 0.0
  %226 = vmatpush1.msra.mxu0 0.0
  %227 = vmatprep.mubr.f32.mxu0 0.0
  %228 = vmatmul.mubr.f32.gmra.mrb[0].mxu0 %v158
  %v229 = vpop.f32.mrb[0].mxu0
  %v230 = vadd.f32 0.0, %v229
  %v231 = vpop.f32.mrb[0].mxu0
  %232 = vmatprep.mubr.f32.mxu0 0.0
  %233 = vmatmul.mubr.f32.gmra.mrb[0].mxu0 %v161
  %v234 = vpop.f32.mrb[0].mxu0
  %v235 = vadd.f32 0.0, %v234
  %v236 = vpop.f32.mrb[0].mxu0
  %237 = vdwg.mxu0
  %v238 = vadd.f32 %v146, %v230
  %v239 = vadd.f32 %v147, %v235
  %240 = vst.msk [vmem:[#allocation2] sm:$0xff] %vm46, %v238
  %241 = vst.msk [vmem:[#allocation2 + $0x8] sm:$0xff] %vm46, %v239
  // Predicated region
  $region34: #{transformer_net_forward.13} parent=0 // pred_check
    %p242 = pneg %p26
  $region35: #{transformer_net_forward.13} parent=0 // pred_check_branch
    %244 = sbr.rel (%p242) target = $region37
  $region36: #{transformer_net_forward.13} parent=0 // pred_region
    %v245 = vld [vmem:[#allocation2] sm:$0xff]
    %v246 = vld [vmem:[#allocation2 + $0x8] sm:$0xff]
    %v247 = vld [vmem:[%s4] sm:$0x1]
    %v249 = vlaneseq
    %v250 = vshrl.u32 %v249, 7
    %v251 = vsub.s32 0, %v250
    %v252 = vrot.slane %v247, %v251
    %v254 = vadd.f32 %v245, %v252
    %v255 = vadd.f32 %v246, %v252
    %v256 = vld [vmem:[%s0] sm:$0xff]
    %v257 = vld [vmem:[%s0 + $0x8] sm:$0xff]
    %v258 = vadd.f32 %v254, %v256
    %v259 = vadd.f32 %v255, %v257
    %v260 = vld [vmem:[%s5] sm:$0x1]
    %v261 = vld [vmem:[%s6] sm:$0x1]
    %v262 = vsel %vm46, %v258, 0.0
    %263 = vadd.xlane.f32.xlu0 %v262
    %v264 = vpop.xlane.xlu0 %263
    %v265 = vsel %vm46, %v259, 0.0
    %266 = vadd.xlane.f32.xlu0 %v265
    %v267 = vpop.xlane.xlu0 %266
    %v268 = vrcp.pop 32.0
    %v269 = vmul.f32 %v264, %v268
    %v270 = vmul.f32 %v267, %v268
    %v271 = vsub.f32 %v258, %v269
    %v272 = vsub.f32 %v259, %v270
    %v273 = vmul.f32 %v271, %v271
    %v274 = vmul.f32 %v272, %v272
    %v275 = vsel %vm46, %v273, 0.0
    %276 = vadd.xlane.f32.xlu0 %v275
    %v277 = vpop.xlane.xlu0 %276
    %v278 = vsel %vm46, %v274, 0.0
    %279 = vadd.xlane.f32.xlu0 %v278
    %v280 = vpop.xlane.xlu0 %279
    %v281 = vmul.f32 %v277, %v268
    %v282 = vmul.f32 %v280, %v268
    %v283 = vadd.f32 %v281, 1e-12
    %v284 = vadd.f32 %v282, 1e-12
    %v285 = vrsqrt.pop %v283
    %v286 = vrsqrt.pop %v284
    %v287 = vmul.f32 %v271, %v285
    %v288 = vmul.f32 %v272, %v286
    %v290 = vlaneseq
    %v291 = vshrl.u32 %v290, 7
    %v292 = vsub.s32 0, %v291
    %v293 = vrot.slane %v260, %v292
    %v295 = vmul.f32 %v287, %v293
    %v296 = vmul.f32 %v288, %v293
    %v298 = vlaneseq
    %v299 = vshrl.u32 %v298, 7
    %v300 = vsub.s32 0, %v299
    %v301 = vrot.slane %v261, %v300
    %v303 = vadd.f32 %v295, %v301
    %v304 = vadd.f32 %v296, %v301
    %305 = vst.msk [vmem:[%s7] sm:$0xff] %vm46, %v303
    %306 = vst.msk [vmem:[%s7 + $0x8] sm:$0xff] %vm46, %v304
  $region37: #{transformer_net_forward.13} parent=0 // pred_fallthru
    _
  // Predicated region
  $region38: #{transformer_net_forward.13} parent=0 // pred_check
    _
  $region39: #{transformer_net_forward.13} parent=0 // pred_check_branch
    %308 = sbr.rel (0) target = $region41
  $region40: #{transformer_net_forward.13} parent=0 // pred_region
    _
  $region41: #{transformer_net_forward.13} parent=0 // pred_fallthru
    _
  // Predicated region
  $region42: #{transformer_net_forward.13} parent=0 // pred_check
    _
  $region43: #{transformer_net_forward.13} parent=0 // pred_check_branch
    %310 = sbr.rel (0) target = $region45
  $region44: #{transformer_net_forward.13} parent=0 // pred_region
    _
  $region45: #{transformer_net_forward.13} parent=0 // pred_fallthru
    _

</llo_original>
